<compile_context>
chip_gen: v7x
topology: tpu7x:2x2x1
jax: 0.10.0
libtpu: 0.0.40
codegen_flags: <defaults>
</compile_context>

<pallas_src>
import functools
import math

import jax
import jax.numpy as jnp
from jax.experimental import pallas as pl
from jax.experimental.pallas import tpu as pltpu

EPS = 1e-5          # torch.nn.LayerNorm default eps
NEG_INF = -1e9      # masked_fill value


# ------------------------------ fused kernel --------------------------------

def decoder_block_kernel(
    # inputs
    tgt_ref, enc_ref, sbias_ref,
    ln_g_ref, ln_b_ref,
    sa_wqkv_ref, sa_bqkv_ref, sa_wo_ref, sa_bo_ref,
    ca_wq_ref, ca_bq_ref, ca_wkv_ref, ca_bkv_ref, ca_wo_ref, ca_bo_ref,
    ff_w1_ref, ff_b1_ref, ff_w2_ref, ff_b2_ref,
    # outputs
    out_ref,
    # scratch
    qkv_sc, kv_sc,
    *, n_heads, rt):
    St, D = tgt_ref.shape              # full target sequence (per batch), model dim
    Ss = enc_ref.shape[0]              # encoder sequence
    H = n_heads
    dh = D // H
    scale = 1.0 / math.sqrt(dh)

    r = pl.program_id(1)               # query row-block index within this batch
    row0 = pl.multiple_of(r * rt, rt)

    ln_g = ln_g_ref[...]               # (3, D) stacked gammas
    ln_b = ln_b_ref[...]               # (3, D) stacked betas

    def layer_norm(x, idx):
        g = ln_g[idx:idx + 1, :]
        b = ln_b[idx:idx + 1, :]
        mu = jnp.mean(x, axis=-1, keepdims=True)
        xc = x - mu
        var = jnp.mean(xc * xc, axis=-1, keepdims=True)
        return xc * jax.lax.rsqrt(var + EPS) * g + b

    def mha(q_bf, k_bf, v_bf, bias, wo_bf, bo):
        # q_bf: (rows, D) bf16; k_bf/v_bf: (Sk, D) bf16; bias: additive f32 (rows|1, Sk)
        # Heads are lane slices.  The head-output concat is folded into a per-head
        # accumulation against the matching rows of wo (all MXU work, f32 accumulate).
        rows = q_bf.shape[0]
        acc = jnp.zeros((rows, D), jnp.float32)
        for h in range(H):             # static unroll; for prod dh>=64 a batched
            sl = slice(h * dh, (h + 1) * dh)      # dot_general stream is equivalent
            s = jax.lax.dot_general(
                q_bf[:, sl], k_bf[:, sl], (((1,), (1,)), ((), ())),
                preferred_element_type=jnp.float32) * scale + bias
            m = jnp.max(s, axis=-1, keepdims=True)          # f32 softmax stats
            p = jnp.exp(s - m)
            l = jnp.sum(p, axis=-1, keepdims=True)
            o = jax.lax.dot_general(
                p.astype(jnp.bfloat16), v_bf[:, sl], (((1,), (0,)), ((), ())),
                preferred_element_type=jnp.float32)
            o = o * pl.reciprocal(l, approx=True)           # EUP slot, ~free
            acc = acc + jax.lax.dot_general(
                o.astype(jnp.bfloat16), wo_bf[sl, :], (((1,), (0,)), ((), ())),
                preferred_element_type=jnp.float32)
        return acc + bo

    # --- per-batch precompute (row-block invariant), persisted in VMEM scratch ---
    @pl.when(r == 0)
    def _():
        n1_full = layer_norm(tgt_ref[...], 0)                           # (St, D) f32
        qkv = jnp.dot(n1_full.astype(jnp.bfloat16), sa_wqkv_ref[...],
                      preferred_element_type=jnp.float32) + sa_bqkv_ref[...]
        qkv_sc[...] = qkv.astype(jnp.bfloat16)                          # (St, 3D)
        kv = jnp.dot(enc_ref[...].astype(jnp.bfloat16), ca_wkv_ref[...],
                     preferred_element_type=jnp.float32) + ca_bkv_ref[...]
        kv_sc[...] = kv.astype(jnp.bfloat16)                            # (Ss, 2D)

    # --- residual 1: out1 = tgt + self_attention(norm1(tgt)) ------------------
    # Causal additive bias built in-kernel (no dense mask DMA).
    # TODO(synk): assumes the module's tgt_mask is the standard causal mask; an
    # arbitrary self-attn mask would need a dense additive-bias input path.
    qpos = row0 + jax.lax.broadcasted_iota(jnp.int32, (rt, St), 0)
    kpos = jax.lax.broadcasted_iota(jnp.int32, (rt, St), 1)
    causal_bias = jnp.where(qpos >= kpos,
                            jnp.float32(0.0), jnp.float32(NEG_INF))     # (rt, St)

    tgt_rows = tgt_ref[pl.ds(row0, rt), :]                              # (rt, D) f32
    out1 = tgt_rows + mha(qkv_sc[pl.ds(row0, rt), 0:D],
                          qkv_sc[:, D:2 * D], qkv_sc[:, 2 * D:3 * D],
                          causal_bias, sa_wo_ref[...], sa_bo_ref[...])

    # --- residual 2: out2 = out1 + cross_attention(norm2(out1), encoder_out) --
    n2 = layer_norm(out1, 1)
    q_c = jnp.dot(n2.astype(jnp.bfloat16), ca_wq_ref[...],
                  preferred_element_type=jnp.float32) + ca_bq_ref[...]
    out2 = out1 + mha(q_c.astype(jnp.bfloat16),
                      kv_sc[:, 0:D], kv_sc[:, D:2 * D],
                      sbias_ref[...],                # (1, Ss) key-padding bias
                      ca_wo_ref[...], ca_bo_ref[...])

    # --- residual 3: out3 = out2 + position_ff(norm3(out2)) -------------------
    n3 = layer_norm(out2, 2)
    hdn = jnp.maximum(
        jnp.dot(n3.astype(jnp.bfloat16), ff_w1_ref[...],
                preferred_element_type=jnp.float32) + ff_b1_ref[...], 0.0)
    out3 = out2 + jnp.dot(hdn.astype(jnp.bfloat16), ff_w2_ref[...],
                          preferred_element_type=jnp.float32) + ff_b2_ref[...]

    out_ref[...] = out3


# ------------------------------ wrapper --------------------------------------

def decoder_block(tgt, encoder_out, tgt_mask, src_tgt_mask, fp, *, n_heads, rt=None):
    B, St, D = tgt.shape
    Ss = encoder_out.shape[1]
    del tgt_mask  # rebuilt in-kernel as the causal mask (see TODO in the kernel)

    if rt is None:
        rt = St if St <= 512 else 256
    assert St % rt == 0 and (rt == St or rt % 8 == 0)
    R = St // rt

    # Cross-attn mask -> compact additive key-padding bias (B, 1, Ss); no dense
    # O(B*Sq*Sk) mask is materialized or DMA'd.
    # TODO(synk): assumes src_tgt_mask is a key-padding mask (constant over query
    # rows / heads); arbitrary per-query masks need a dense bias path.
    src_bias = jnp.where(src_tgt_mask[:, 0, 0, :] == 0.0,
                         jnp.float32(NEG_INF), jnp.float32(0.0))[:, None, :]

    def full(shape):
        nd = len(shape)
        return pl.BlockSpec(shape, lambda b, r_, _n=nd: (0,) * _n)

    weight_args = (
        fp["ln_g"], fp["ln_b"],
        fp["sa_wqkv"], fp["sa_bqkv"], fp["sa_wo"], fp["sa_bo"],
        fp["ca_wq"], fp["ca_bq"], fp["ca_wkv"], fp["ca_bkv"], fp["ca_wo"], fp["ca_bo"],
        fp["ff_w1"], fp["ff_b1"], fp["ff_w2"], fp["ff_b2"])

    in_specs = (
        [pl.BlockSpec((None, St, D), lambda b, r_: (b, 0, 0)),   # tgt: full seq per batch
         pl.BlockSpec((None, Ss, D), lambda b, r_: (b, 0, 0)),   # encoder_out per batch
         pl.BlockSpec((None, 1, Ss), lambda b, r_: (b, 0, 0))]   # cross-attn bias
        + [full(a.shape) for a in weight_args])                  # weights: VMEM-resident

    grid_spec = pltpu.PrefetchScalarGridSpec(
        num_scalar_prefetch=0,
        grid=(B, R),
        in_specs=in_specs,
        out_specs=pl.BlockSpec((None, rt, D), lambda b, r_: (b, r_, 0)),
        scratch_shapes=[pltpu.VMEM((St, 3 * D), jnp.bfloat16),   # self-attn Q/K/V
                        pltpu.VMEM((Ss, 2 * D), jnp.bfloat16)])  # cross-attn K/V

    return pl.pallas_call(
        functools.partial(decoder_block_kernel, n_heads=n_heads, rt=rt),
        out_shape=jax.ShapeDtypeStruct((B, St, D), jnp.float32),
        grid_spec=grid_spec,
        compiler_params=pltpu.CompilerParams(
            dimension_semantics=("parallel", "arbitrary"),
            vmem_limit_bytes=48 * 1024 * 1024),
    )(tgt, encoder_out, src_bias, *weight_args)


# ------------------------------ params ---------------------------------------

def init_params(key, D, D_FF):
    ks = jax.random.split(key, 24)
    w = lambda k, shape: 0.02 * jax.random.normal(k, shape, jnp.float32)

    def attn_params(kk):
        return {"wq": w(kk[0], (D, D)), "bq": w(kk[1], (D,)),
                "wk": w(kk[2], (D, D)), "bk": w(kk[3], (D,)),
                "wv": w(kk[4], (D, D)), "bv": w(kk[5], (D,)),
                "wo": w(kk[6], (D, D)), "bo": w(kk[7], (D,))}

    return {
        "self_attn": attn_params(ks[0:8]),
        "cross_attn": attn_params(ks[8:16]),
        "ff_w1": w(ks[16], (D, D_FF)), "ff_b1": w(ks[17], (D_FF,)),
        "ff_w2": w(ks[18], (D_FF, D)), "ff_b2": w(ks[19], (D,)),
        "ln1_g": jnp.ones((D,), jnp.float32), "ln1_b": jnp.zeros((D,), jnp.float32),
        "ln2_g": jnp.ones((D,), jnp.float32), "ln2_b": jnp.zeros((D,), jnp.float32),
        "ln3_g": jnp.ones((D,), jnp.float32), "ln3_b": jnp.zeros((D,), jnp.float32),
    }


def fuse_params(p):
    """One-time (outside jit) packing into fused, bf16-MXU-ready layout."""
    sa, ca = p["self_attn"], p["cross_attn"]
    bf = lambda x: x.astype(jnp.bfloat16)
    row = lambda x: x.reshape(1, -1).astype(jnp.float32)
    return {
        "ln_g": jnp.stack([p["ln1_g"], p["ln2_g"], p["ln3_g"]]),               # (3, D) f32
        "ln_b": jnp.stack([p["ln1_b"], p["ln2_b"], p["ln3_b"]]),               # (3, D) f32
        "sa_wqkv": bf(jnp.concatenate([sa["wq"], sa["wk"], sa["wv"]], axis=1)),  # (D, 3D) bf16
        "sa_bqkv": row(jnp.concatenate([sa["bq"], sa["bk"], sa["bv"]])),         # (1, 3D) f32
        "sa_wo": bf(sa["wo"]), "sa_bo": row(sa["bo"]),
        "ca_wq": bf(ca["wq"]), "ca_bq": row(ca["bq"]),
        "ca_wkv": bf(jnp.concatenate([ca["wk"], ca["wv"]], axis=1)),             # (D, 2D) bf16
        "ca_bkv": row(jnp.concatenate([ca["bk"], ca["bv"]])),                    # (1, 2D) f32
        "ca_wo": bf(ca["wo"]), "ca_bo": row(ca["bo"]),
        "ff_w1": bf(p["ff_w1"]), "ff_b1": row(p["ff_b1"]),
        "ff_w2": bf(p["ff_w2"]), "ff_b2": row(p["ff_b2"]),
    }


# ---------------------------- pure-JAX reference ------------------------------

def ref_forward(tgt, enc, tgt_mask, src_mask, p, H):
    def ln(x, g, b):
        mu = x.mean(-1, keepdims=True)
        var = ((x - mu) ** 2).mean(-1, keepdims=True)
        return (x - mu) / jnp.sqrt(var + EPS) * g + b

    def mha(xq, xkv, mask, pp):
        B, Sq, D = xq.shape
        Sk = xkv.shape[1]
        dh = D // H
        q = xq @ pp["wq"] + pp["bq"]
        k = xkv @ pp["wk"] + pp["bk"]
        v = xkv @ pp["wv"] + pp["bv"]
        sp = lambda t, S: t.reshape(B, S, H, dh).transpose(0, 2, 1, 3)
        qh, kh, vh = sp(q, Sq), sp(k, Sk), sp(v, Sk)
        s = jnp.einsum("bhqd,bhkd->bhqk", qh, kh) / math.sqrt(dh)
        s = jnp.where(mask == 0.0, NEG_INF, s)
        a = jax.nn.softmax(s, axis=-1)
        o = jnp.einsum("bhqk,bhkd->bhqd", a, vh).transpose(0, 2, 1, 3).reshape(B, Sq, D)
        return o @ pp["wo"] + pp["bo"]

    n1 = ln(tgt, p["ln1_g"], p["ln1_b"])
    out = tgt + mha(n1, n1, tgt_mask, p["self_attn"])
    n2 = ln(out, p["ln2_g"], p["ln2_b"])
    out = out + mha(n2, enc, src_mask, p["cross_attn"])
    n3 = ln(out, p["ln3_g"], p["ln3_b"])
    h = jax.nn.relu(n3 @ p["ff_w1"] + p["ff_b1"])
    return out + h @ p["ff_w2"] + p["ff_b2"]


# ----------------------------------- main -------------------------------------

if __name__ == "__main__":
    B, S_TGT, S_SRC, D, H, D_FF = 2, 8, 8, 32, 4, 64

    key = jax.random.PRNGKey(0)
    k_p, k_tgt, k_enc = jax.random.split(key, 3)
    params = init_params(k_p, D, D_FF)
    fparams = fuse_params(params)

    tgt = jax.random.normal(k_tgt, (B, S_TGT, D), jnp.float32)
    encoder_out = jax.random.normal(k_enc, (B, S_SRC, D), jnp.float32)

    # causal self-attention mask (B, 1, S_tgt, S_tgt), 1=keep / 0=mask
    tgt_mask = jnp.broadcast_to(
        jnp.tril(jnp.ones((S_TGT, S_TGT), jnp.float32))[None, None], (B, 1, S_TGT, S_TGT))
    # cross-attention key-padding mask (B, 1, S_tgt, S_src): mask last 2 source tokens of batch 1
    src_tgt_mask = jnp.ones((B, 1, S_TGT, S_SRC), jnp.float32).at[1, :, :, -2:].set(0.0)

    fwd = jax.jit(functools.partial(decoder_block, n_heads=H))
    out = fwd(tgt, encoder_out, tgt_mask, src_tgt_mask, fparams)
    out = jax.block_until_ready(out)

    ref = ref_forward(tgt, encoder_out, tgt_mask, src_tgt_mask, params, H)
    assert out.shape == (B, S_TGT, D)
    # bf16 MXU operands + approx reciprocal => slightly looser tolerance than pure f32
    assert jnp.allclose(out, ref, atol=5e-3, rtol=5e-3), "Pallas output mismatch vs reference"

    print("KERNEL_OK")
</pallas_src>

<mosaic_0001>
module attributes {stable_mosaic.version = 11 : i64} {
  func.func @decoder_block_kernel(%arg0: i32, %arg1: i32, %arg2: memref<1x8x32xf32, #tpu.memory_space<vmem>>, %arg3: memref<1x8x32xf32, #tpu.memory_space<vmem>>, %arg4: memref<1x1x8xf32, #tpu.memory_space<vmem>>, %arg5: memref<3x32xf32, #tpu.memory_space<vmem>>, %arg6: memref<3x32xf32, #tpu.memory_space<vmem>>, %arg7: memref<32x96xbf16, #tpu.memory_space<vmem>>, %arg8: memref<1x96xf32, #tpu.memory_space<vmem>>, %arg9: memref<32x32xbf16, #tpu.memory_space<vmem>>, %arg10: memref<1x32xf32, #tpu.memory_space<vmem>>, %arg11: memref<32x32xbf16, #tpu.memory_space<vmem>>, %arg12: memref<1x32xf32, #tpu.memory_space<vmem>>, %arg13: memref<32x64xbf16, #tpu.memory_space<vmem>>, %arg14: memref<1x64xf32, #tpu.memory_space<vmem>>, %arg15: memref<32x32xbf16, #tpu.memory_space<vmem>>, %arg16: memref<1x32xf32, #tpu.memory_space<vmem>>, %arg17: memref<32x64xbf16, #tpu.memory_space<vmem>>, %arg18: memref<1x64xf32, #tpu.memory_space<vmem>>, %arg19: memref<64x32xbf16, #tpu.memory_space<vmem>>, %arg20: memref<1x32xf32, #tpu.memory_space<vmem>>, %arg21: memref<1x8x32xf32, #tpu.memory_space<vmem>>, %arg22: memref<8x96xbf16, #tpu.memory_space<vmem>>, %arg23: memref<8x64xbf16, #tpu.memory_space<vmem>>) attributes {dimension_semantics = [#tpu.dimension_semantics<parallel>, #tpu.dimension_semantics<arbitrary>], iteration_bounds = array<i64: 2, 1>, scalar_prefetch = 0 : i64, scratch_operands = 2 : i64, tpu.core_type = #tpu.core_type<tc>, window_params = [{transform_indices = @transform_0, window_bounds = array<i64: 1, 8, 32>}, {transform_indices = @transform_1, window_bounds = array<i64: 1, 8, 32>}, {transform_indices = @transform_2, window_bounds = array<i64: 1, 1, 8>}, {pipeline_mode = #tpu.pipeline_mode<synchronous>, transform_indices = @transform_3, window_bounds = array<i64: 3, 32>}, {pipeline_mode = #tpu.pipeline_mode<synchronous>, transform_indices = @transform_4, window_bounds = array<i64: 3, 32>}, {pipeline_mode = #tpu.pipeline_mode<synchronous>, transform_indices = @transform_5, window_bounds = array<i64: 32, 96>}, {pipeline_mode = #tpu.pipeline_mode<synchronous>, transform_indices = @transform_6, window_bounds = array<i64: 1, 96>}, {pipeline_mode = #tpu.pipeline_mode<synchronous>, transform_indices = @transform_7, window_bounds = array<i64: 32, 32>}, {pipeline_mode = #tpu.pipeline_mode<synchronous>, transform_indices = @transform_8, window_bounds = array<i64: 1, 32>}, {pipeline_mode = #tpu.pipeline_mode<synchronous>, transform_indices = @transform_9, window_bounds = array<i64: 32, 32>}, {pipeline_mode = #tpu.pipeline_mode<synchronous>, transform_indices = @transform_10, window_bounds = array<i64: 1, 32>}, {pipeline_mode = #tpu.pipeline_mode<synchronous>, transform_indices = @transform_11, window_bounds = array<i64: 32, 64>}, {pipeline_mode = #tpu.pipeline_mode<synchronous>, transform_indices = @transform_12, window_bounds = array<i64: 1, 64>}, {pipeline_mode = #tpu.pipeline_mode<synchronous>, transform_indices = @transform_13, window_bounds = array<i64: 32, 32>}, {pipeline_mode = #tpu.pipeline_mode<synchronous>, transform_indices = @transform_14, window_bounds = array<i64: 1, 32>}, {pipeline_mode = #tpu.pipeline_mode<synchronous>, transform_indices = @transform_15, window_bounds = array<i64: 32, 64>}, {pipeline_mode = #tpu.pipeline_mode<synchronous>, transform_indices = @transform_16, window_bounds = array<i64: 1, 64>}, {pipeline_mode = #tpu.pipeline_mode<synchronous>, transform_indices = @transform_17, window_bounds = array<i64: 64, 32>}, {pipeline_mode = #tpu.pipeline_mode<synchronous>, transform_indices = @transform_18, window_bounds = array<i64: 1, 32>}, {transform_indices = @transform_19, window_bounds = array<i64: 1, 8, 32>}]} {
    %c8_i32 = arith.constant 8 : i32
    %0 = arith.muli %arg1, %c8_i32 : i32
    %1 = tpu.assume_multiple %0, 8 : i32
    %c0 = arith.constant 0 : index
    %c0_0 = arith.constant 0 : index
    %2 = vector.load %arg5[%c0, %c0_0] : memref<3x32xf32, #tpu.memory_space<vmem>>, vector<3x32xf32>
    %c0_1 = arith.constant 0 : index
    %c0_2 = arith.constant 0 : index
    %3 = vector.load %arg6[%c0_1, %c0_2] : memref<3x32xf32, #tpu.memory_space<vmem>>, vector<3x32xf32>
    %c0_i32 = arith.constant 0 : i32
    %4 = arith.cmpi eq, %arg1, %c0_i32 : i32
    %5 = arith.extui %4 : i1 to i32
    %c0_i32_3 = arith.constant 0 : i32
    %6 = arith.cmpi ne, %5, %c0_i32_3 : i32
    scf.if %6 {
      %c0_104 = arith.constant 0 : index
      %c0_105 = arith.constant 0 : index
      %c0_106 = arith.constant 0 : index
      %295 = vector.load %arg2[%c0_104, %c0_105, %c0_106] : memref<1x8x32xf32, #tpu.memory_space<vmem>>, vector<1x8x32xf32>
      %296 = vector.shape_cast %295 : vector<1x8x32xf32> to vector<8x32xf32>
      %297 = vector.extract_strided_slice %2 {offsets = [0, 0], sizes = [1, 32], strides = [1, 1]} : vector<3x32xf32> to vector<1x32xf32>
      %298 = vector.extract_strided_slice %3 {offsets = [0, 0], sizes = [1, 32], strides = [1, 1]} : vector<3x32xf32> to vector<1x32xf32>
      %cst_107 = arith.constant dense<0.000000e+00> : vector<8xf32>
      %299 = vector.multi_reduction <add>, %296, %cst_107 [1] : vector<8x32xf32> to vector<8xf32>
      %300 = vector.shape_cast %299 : vector<8xf32> to vector<8x1xf32>
      %cst_108 = arith.constant 3.200000e+01 : f32
      %301 = vector.broadcast %cst_108 : f32 to vector<8x1xf32>
      %302 = arith.divf %300, %301 : vector<8x1xf32>
      %303 = vector.broadcast %302 : vector<8x1xf32> to vector<8x32xf32>
      %304 = arith.subf %296, %303 : vector<8x32xf32>
      %305 = arith.mulf %304, %304 : vector<8x32xf32>
      %cst_109 = arith.constant dense<0.000000e+00> : vector<8xf32>
      %306 = vector.multi_reduction <add>, %305, %cst_109 [1] : vector<8x32xf32> to vector<8xf32>
      %307 = vector.shape_cast %306 : vector<8xf32> to vector<8x1xf32>
      %cst_110 = arith.constant 3.200000e+01 : f32
      %308 = vector.broadcast %cst_110 : f32 to vector<8x1xf32>
      %309 = arith.divf %307, %308 : vector<8x1xf32>
      %cst_111 = arith.constant 9.99999974E-6 : f32
      %310 = vector.broadcast %cst_111 : f32 to vector<8x1xf32>
      %311 = arith.addf %309, %310 : vector<8x1xf32>
      %312 = math.rsqrt %311 : vector<8x1xf32>
      %313 = vector.broadcast %312 : vector<8x1xf32> to vector<8x32xf32>
      %314 = arith.mulf %304, %313 : vector<8x32xf32>
      %315 = vector.broadcast %297 : vector<1x32xf32> to vector<8x32xf32>
      %316 = arith.mulf %314, %315 : vector<8x32xf32>
      %317 = vector.broadcast %298 : vector<1x32xf32> to vector<8x32xf32>
      %318 = arith.addf %316, %317 : vector<8x32xf32>
      %319 = arith.truncf %318 : vector<8x32xf32> to vector<8x32xbf16>
      %c0_112 = arith.constant 0 : index
      %c0_113 = arith.constant 0 : index
      %320 = vector.load %arg7[%c0_112, %c0_113] : memref<32x96xbf16, #tpu.memory_space<vmem>>, vector<32x96xbf16>
      %cst_114 = arith.constant dense<0.000000e+00> : vector<8x96xf32>
      %321 = tpu.matmul %319, %320, %cst_114 {dimension_numbers = #tpu.dot_dimension_numbers<[1], [0], [0], [1], [0, 0, 1, 1], [], []>} : vector<8x32xbf16>, vector<32x96xbf16>, vector<8x96xf32> -> vector<8x96xf32>
      %c0_115 = arith.constant 0 : index
      %c0_116 = arith.constant 0 : index
      %322 = vector.load %arg8[%c0_115, %c0_116] : memref<1x96xf32, #tpu.memory_space<vmem>>, vector<1x96xf32>
      %323 = vector.broadcast %322 : vector<1x96xf32> to vector<8x96xf32>
      %324 = arith.addf %321, %323 : vector<8x96xf32>
      %325 = arith.truncf %324 : vector<8x96xf32> to vector<8x96xbf16>
      %c0_117 = arith.constant 0 : index
      %c0_118 = arith.constant 0 : index
      %326 = vector.load %arg22[%c0_117, %c0_118] : memref<8x96xbf16, #tpu.memory_space<vmem>>, vector<8x96xbf16>
      tpu.vector_store %arg22[%c0_117, %c0_118], %325 {strides = array<i32>} : memref<8x96xbf16, #tpu.memory_space<vmem>>, vector<8x96xbf16>,
      %c0_119 = arith.constant 0 : index
      %c0_120 = arith.constant 0 : index
      %c0_121 = arith.constant 0 : index
      %327 = vector.load %arg3[%c0_119, %c0_120, %c0_121] : memref<1x8x32xf32, #tpu.memory_space<vmem>>, vector<1x8x32xf32>
      %328 = vector.shape_cast %327 : vector<1x8x32xf32> to vector<8x32xf32>
      %329 = arith.truncf %328 : vector<8x32xf32> to vector<8x32xbf16>
      %c0_122 = arith.constant 0 : index
      %c0_123 = arith.constant 0 : index
      %330 = vector.load %arg13[%c0_122, %c0_123] : memref<32x64xbf16, #tpu.memory_space<vmem>>, vector<32x64xbf16>
      %cst_124 = arith.constant dense<0.000000e+00> : vector<8x64xf32>
      %331 = tpu.matmul %329, %330, %cst_124 {dimension_numbers = #tpu.dot_dimension_numbers<[1], [0], [0], [1], [0, 0, 1, 1], [], []>} : vector<8x32xbf16>, vector<32x64xbf16>, vector<8x64xf32> -> vector<8x64xf32>
      %c0_125 = arith.constant 0 : index
      %c0_126 = arith.constant 0 : index
      %332 = vector.load %arg14[%c0_125, %c0_126] : memref<1x64xf32, #tpu.memory_space<vmem>>, vector<1x64xf32>
      %333 = vector.broadcast %332 : vector<1x64xf32> to vector<8x64xf32>
      %334 = arith.addf %331, %333 : vector<8x64xf32>
      %335 = arith.truncf %334 : vector<8x64xf32> to vector<8x64xbf16>
      %c0_127 = arith.constant 0 : index
      %c0_128 = arith.constant 0 : index
      %336 = vector.load %arg23[%c0_127, %c0_128] : memref<8x64xbf16, #tpu.memory_space<vmem>>, vector<8x64xbf16>
      tpu.vector_store %arg23[%c0_127, %c0_128], %335 {strides = array<i32>} : memref<8x64xbf16, #tpu.memory_space<vmem>>, vector<8x64xbf16>,
    } else {
    }
    %7 = tpu.iota {dimensions = array<i32: 0>} : vector<8x8xi32>
    %8 = vector.broadcast %1 : i32 to vector<8x8xi32>
    %9 = arith.addi %8, %7 : vector<8x8xi32>
    %10 = tpu.iota {dimensions = array<i32: 1>} : vector<8x8xi32>
    %11 = arith.cmpi sge, %9, %10 : vector<8x8xi32>
    %cst = arith.constant 0.000000e+00 : f32
    %cst_4 = arith.constant -1.000000e+09 : f32
    %12 = vector.broadcast %cst : f32 to vector<8x8xf32>
    %13 = vector.broadcast %cst_4 : f32 to vector<8x8xf32>
    %14 = arith.select %11, %12, %13 : vector<8x8xi1>, vector<8x8xf32>
    %c0_5 = arith.constant 0 : index
    %15 = arith.index_cast %1 : i32 to index
    %c0_6 = arith.constant 0 : index
    %16 = vector.load %arg2[%c0_5, %15, %c0_6] : memref<1x8x32xf32, #tpu.memory_space<vmem>>, vector<1x8x32xf32>
    %17 = vector.shape_cast %16 : vector<1x8x32xf32> to vector<8x32xf32>
    %18 = arith.index_cast %1 : i32 to index
    %c0_7 = arith.constant 0 : index
    %19 = vector.load %arg22[%18, %c0_7] : memref<8x96xbf16, #tpu.memory_space<vmem>>, vector<8x32xbf16>
    %c0_8 = arith.constant 0 : index
    %c32 = arith.constant 32 : index
    %20 = vector.load %arg22[%c0_8, %c32] : memref<8x96xbf16, #tpu.memory_space<vmem>>, vector<8x32xbf16>
    %c0_9 = arith.constant 0 : index
    %c64 = arith.constant 64 : index
    %21 = vector.load %arg22[%c0_9, %c64] : memref<8x96xbf16, #tpu.memory_space<vmem>>, vector<8x32xbf16>
    %c0_10 = arith.constant 0 : index
    %c0_11 = arith.constant 0 : index
    %22 = vector.load %arg9[%c0_10, %c0_11] : memref<32x32xbf16, #tpu.memory_space<vmem>>, vector<32x32xbf16>
    %c0_12 = arith.constant 0 : index
    %c0_13 = arith.constant 0 : index
    %23 = vector.load %arg10[%c0_12, %c0_13] : memref<1x32xf32, #tpu.memory_space<vmem>>, vector<1x32xf32>
    %cst_14 = arith.constant 0.000000e+00 : f32
    %24 = vector.broadcast %cst_14 : f32 to vector<8x32xf32>
    %25 = vector.extract_strided_slice %19 {offsets = [0, 0], sizes = [8, 8], strides = [1, 1]} : vector<8x32xbf16> to vector<8x8xbf16>
    %26 = vector.extract_strided_slice %20 {offsets = [0, 0], sizes = [8, 8], strides = [1, 1]} : vector<8x32xbf16> to vector<8x8xbf16>
    %cst_15 = arith.constant dense<0.000000e+00> : vector<8x8xf32>
    %27 = tpu.matmul %25, %26, %cst_15 {dimension_numbers = #tpu.dot_dimension_numbers<[1], [1], [0], [0], [0, 0, 1, 0], [], []>} : vector<8x8xbf16>, vector<8x8xbf16>, vector<8x8xf32> -> vector<8x8xf32>
    %cst_16 = arith.constant 0.353553385 : f32
    %28 = vector.broadcast %cst_16 : f32 to vector<8x8xf32>
    %29 = arith.mulf %27, %28 : vector<8x8xf32>
    %30 = arith.addf %29, %14 : vector<8x8xf32>
    %cst_17 = arith.constant dense<0xFF800000> : vector<8xf32>
    %31 = vector.multi_reduction <maximumf>, %30, %cst_17 [1] : vector<8x8xf32> to vector<8xf32>
    %32 = vector.shape_cast %31 : vector<8xf32> to vector<8x1xf32>
    %33 = vector.broadcast %32 : vector<8x1xf32> to vector<8x8xf32>
    %34 = arith.subf %30, %33 : vector<8x8xf32>
    %35 = math.exp %34 : vector<8x8xf32>
    %cst_18 = arith.constant dense<0.000000e+00> : vector<8xf32>
    %36 = vector.multi_reduction <add>, %35, %cst_18 [1] : vector<8x8xf32> to vector<8xf32>
    %37 = vector.shape_cast %36 : vector<8xf32> to vector<8x1xf32>
    %38 = arith.truncf %35 : vector<8x8xf32> to vector<8x8xbf16>
    %39 = vector.extract_strided_slice %21 {offsets = [0, 0], sizes = [8, 8], strides = [1, 1]} : vector<8x32xbf16> to vector<8x8xbf16>
    %cst_19 = arith.constant dense<0.000000e+00> : vector<8x8xf32>
    %40 = tpu.matmul %38, %39, %cst_19 {dimension_numbers = #tpu.dot_dimension_numbers<[1], [0], [0], [1], [0, 0, 1, 1], [], []>} : vector<8x8xbf16>, vector<8x8xbf16>, vector<8x8xf32> -> vector<8x8xf32>
    %41 = tpu.reciprocal %37 {approx = true} : vector<8x1xf32> -> vector<8x1xf32>
    %42 = vector.broadcast %41 : vector<8x1xf32> to vector<8x8xf32>
    %43 = arith.mulf %40, %42 : vector<8x8xf32>
    %44 = arith.truncf %43 : vector<8x8xf32> to vector<8x8xbf16>
    %45 = vector.extract_strided_slice %22 {offsets = [0, 0], sizes = [8, 32], strides = [1, 1]} : vector<32x32xbf16> to vector<8x32xbf16>
    %cst_20 = arith.constant dense<0.000000e+00> : vector<8x32xf32>
    %46 = tpu.matmul %44, %45, %cst_20 {dimension_numbers = #tpu.dot_dimension_numbers<[1], [0], [0], [1], [0, 0, 1, 1], [], []>} : vector<8x8xbf16>, vector<8x32xbf16>, vector<8x32xf32> -> vector<8x32xf32>
    %47 = arith.addf %24, %46 : vector<8x32xf32>
    %48 = vector.extract_strided_slice %19 {offsets = [0, 8], sizes = [8, 8], strides = [1, 1]} : vector<8x32xbf16> to vector<8x8xbf16>
    %49 = vector.extract_strided_slice %20 {offsets = [0, 8], sizes = [8, 8], strides = [1, 1]} : vector<8x32xbf16> to vector<8x8xbf16>
    %cst_21 = arith.constant dense<0.000000e+00> : vector<8x8xf32>
    %50 = tpu.matmul %48, %49, %cst_21 {dimension_numbers = #tpu.dot_dimension_numbers<[1], [1], [0], [0], [0, 0, 1, 0], [], []>} : vector<8x8xbf16>, vector<8x8xbf16>, vector<8x8xf32> -> vector<8x8xf32>
    %cst_22 = arith.constant 0.353553385 : f32
    %51 = vector.broadcast %cst_22 : f32 to vector<8x8xf32>
    %52 = arith.mulf %50, %51 : vector<8x8xf32>
    %53 = arith.addf %52, %14 : vector<8x8xf32>
    %cst_23 = arith.constant dense<0xFF800000> : vector<8xf32>
    %54 = vector.multi_reduction <maximumf>, %53, %cst_23 [1] : vector<8x8xf32> to vector<8xf32>
    %55 = vector.shape_cast %54 : vector<8xf32> to vector<8x1xf32>
    %56 = vector.broadcast %55 : vector<8x1xf32> to vector<8x8xf32>
    %57 = arith.subf %53, %56 : vector<8x8xf32>
    %58 = math.exp %57 : vector<8x8xf32>
    %cst_24 = arith.constant dense<0.000000e+00> : vector<8xf32>
    %59 = vector.multi_reduction <add>, %58, %cst_24 [1] : vector<8x8xf32> to vector<8xf32>
    %60 = vector.shape_cast %59 : vector<8xf32> to vector<8x1xf32>
    %61 = arith.truncf %58 : vector<8x8xf32> to vector<8x8xbf16>
    %62 = vector.extract_strided_slice %21 {offsets = [0, 8], sizes = [8, 8], strides = [1, 1]} : vector<8x32xbf16> to vector<8x8xbf16>
    %cst_25 = arith.constant dense<0.000000e+00> : vector<8x8xf32>
    %63 = tpu.matmul %61, %62, %cst_25 {dimension_numbers = #tpu.dot_dimension_numbers<[1], [0], [0], [1], [0, 0, 1, 1], [], []>} : vector<8x8xbf16>, vector<8x8xbf16>, vector<8x8xf32> -> vector<8x8xf32>
    %64 = tpu.reciprocal %60 {approx = true} : vector<8x1xf32> -> vector<8x1xf32>
    %65 = vector.broadcast %64 : vector<8x1xf32> to vector<8x8xf32>
    %66 = arith.mulf %63, %65 : vector<8x8xf32>
    %67 = arith.truncf %66 : vector<8x8xf32> to vector<8x8xbf16>
    %68 = vector.extract_strided_slice %22 {offsets = [8, 0], sizes = [8, 32], strides = [1, 1]} : vector<32x32xbf16> to vector<8x32xbf16>
    %cst_26 = arith.constant dense<0.000000e+00> : vector<8x32xf32>
    %69 = tpu.matmul %67, %68, %cst_26 {dimension_numbers = #tpu.dot_dimension_numbers<[1], [0], [0], [1], [0, 0, 1, 1], [], []>} : vector<8x8xbf16>, vector<8x32xbf16>, vector<8x32xf32> -> vector<8x32xf32>
    %70 = arith.addf %47, %69 : vector<8x32xf32>
    %71 = vector.extract_strided_slice %19 {offsets = [0, 16], sizes = [8, 8], strides = [1, 1]} : vector<8x32xbf16> to vector<8x8xbf16>
    %72 = vector.extract_strided_slice %20 {offsets = [0, 16], sizes = [8, 8], strides = [1, 1]} : vector<8x32xbf16> to vector<8x8xbf16>
    %cst_27 = arith.constant dense<0.000000e+00> : vector<8x8xf32>
    %73 = tpu.matmul %71, %72, %cst_27 {dimension_numbers = #tpu.dot_dimension_numbers<[1], [1], [0], [0], [0, 0, 1, 0], [], []>} : vector<8x8xbf16>, vector<8x8xbf16>, vector<8x8xf32> -> vector<8x8xf32>
    %cst_28 = arith.constant 0.353553385 : f32
    %74 = vector.broadcast %cst_28 : f32 to vector<8x8xf32>
    %75 = arith.mulf %73, %74 : vector<8x8xf32>
    %76 = arith.addf %75, %14 : vector<8x8xf32>
    %cst_29 = arith.constant dense<0xFF800000> : vector<8xf32>
    %77 = vector.multi_reduction <maximumf>, %76, %cst_29 [1] : vector<8x8xf32> to vector<8xf32>
    %78 = vector.shape_cast %77 : vector<8xf32> to vector<8x1xf32>
    %79 = vector.broadcast %78 : vector<8x1xf32> to vector<8x8xf32>
    %80 = arith.subf %76, %79 : vector<8x8xf32>
    %81 = math.exp %80 : vector<8x8xf32>
    %cst_30 = arith.constant dense<0.000000e+00> : vector<8xf32>
    %82 = vector.multi_reduction <add>, %81, %cst_30 [1] : vector<8x8xf32> to vector<8xf32>
    %83 = vector.shape_cast %82 : vector<8xf32> to vector<8x1xf32>
    %84 = arith.truncf %81 : vector<8x8xf32> to vector<8x8xbf16>
    %85 = vector.extract_strided_slice %21 {offsets = [0, 16], sizes = [8, 8], strides = [1, 1]} : vector<8x32xbf16> to vector<8x8xbf16>
    %cst_31 = arith.constant dense<0.000000e+00> : vector<8x8xf32>
    %86 = tpu.matmul %84, %85, %cst_31 {dimension_numbers = #tpu.dot_dimension_numbers<[1], [0], [0], [1], [0, 0, 1, 1], [], []>} : vector<8x8xbf16>, vector<8x8xbf16>, vector<8x8xf32> -> vector<8x8xf32>
    %87 = tpu.reciprocal %83 {approx = true} : vector<8x1xf32> -> vector<8x1xf32>
    %88 = vector.broadcast %87 : vector<8x1xf32> to vector<8x8xf32>
    %89 = arith.mulf %86, %88 : vector<8x8xf32>
    %90 = arith.truncf %89 : vector<8x8xf32> to vector<8x8xbf16>
    %91 = vector.extract_strided_slice %22 {offsets = [16, 0], sizes = [8, 32], strides = [1, 1]} : vector<32x32xbf16> to vector<8x32xbf16>
    %cst_32 = arith.constant dense<0.000000e+00> : vector<8x32xf32>
    %92 = tpu.matmul %90, %91, %cst_32 {dimension_numbers = #tpu.dot_dimension_numbers<[1], [0], [0], [1], [0, 0, 1, 1], [], []>} : vector<8x8xbf16>, vector<8x32xbf16>, vector<8x32xf32> -> vector<8x32xf32>
    %93 = arith.addf %70, %92 : vector<8x32xf32>
    %94 = vector.extract_strided_slice %19 {offsets = [0, 24], sizes = [8, 8], strides = [1, 1]} : vector<8x32xbf16> to vector<8x8xbf16>
    %95 = vector.extract_strided_slice %20 {offsets = [0, 24], sizes = [8, 8], strides = [1, 1]} : vector<8x32xbf16> to vector<8x8xbf16>
    %cst_33 = arith.constant dense<0.000000e+00> : vector<8x8xf32>
    %96 = tpu.matmul %94, %95, %cst_33 {dimension_numbers = #tpu.dot_dimension_numbers<[1], [1], [0], [0], [0, 0, 1, 0], [], []>} : vector<8x8xbf16>, vector<8x8xbf16>, vector<8x8xf32> -> vector<8x8xf32>
    %cst_34 = arith.constant 0.353553385 : f32
    %97 = vector.broadcast %cst_34 : f32 to vector<8x8xf32>
    %98 = arith.mulf %96, %97 : vector<8x8xf32>
    %99 = arith.addf %98, %14 : vector<8x8xf32>
    %cst_35 = arith.constant dense<0xFF800000> : vector<8xf32>
    %100 = vector.multi_reduction <maximumf>, %99, %cst_35 [1] : vector<8x8xf32> to vector<8xf32>
    %101 = vector.shape_cast %100 : vector<8xf32> to vector<8x1xf32>
    %102 = vector.broadcast %101 : vector<8x1xf32> to vector<8x8xf32>
    %103 = arith.subf %99, %102 : vector<8x8xf32>
    %104 = math.exp %103 : vector<8x8xf32>
    %cst_36 = arith.constant dense<0.000000e+00> : vector<8xf32>
    %105 = vector.multi_reduction <add>, %104, %cst_36 [1] : vector<8x8xf32> to vector<8xf32>
    %106 = vector.shape_cast %105 : vector<8xf32> to vector<8x1xf32>
    %107 = arith.truncf %104 : vector<8x8xf32> to vector<8x8xbf16>
    %108 = vector.extract_strided_slice %21 {offsets = [0, 24], sizes = [8, 8], strides = [1, 1]} : vector<8x32xbf16> to vector<8x8xbf16>
    %cst_37 = arith.constant dense<0.000000e+00> : vector<8x8xf32>
    %109 = tpu.matmul %107, %108, %cst_37 {dimension_numbers = #tpu.dot_dimension_numbers<[1], [0], [0], [1], [0, 0, 1, 1], [], []>} : vector<8x8xbf16>, vector<8x8xbf16>, vector<8x8xf32> -> vector<8x8xf32>
    %110 = tpu.reciprocal %106 {approx = true} : vector<8x1xf32> -> vector<8x1xf32>
    %111 = vector.broadcast %110 : vector<8x1xf32> to vector<8x8xf32>
    %112 = arith.mulf %109, %111 : vector<8x8xf32>
    %113 = arith.truncf %112 : vector<8x8xf32> to vector<8x8xbf16>
    %114 = vector.extract_strided_slice %22 {offsets = [24, 0], sizes = [8, 32], strides = [1, 1]} : vector<32x32xbf16> to vector<8x32xbf16>
    %cst_38 = arith.constant dense<0.000000e+00> : vector<8x32xf32>
    %115 = tpu.matmul %113, %114, %cst_38 {dimension_numbers = #tpu.dot_dimension_numbers<[1], [0], [0], [1], [0, 0, 1, 1], [], []>} : vector<8x8xbf16>, vector<8x32xbf16>, vector<8x32xf32> -> vector<8x32xf32>
    %116 = arith.addf %93, %115 : vector<8x32xf32>
    %117 = vector.broadcast %23 : vector<1x32xf32> to vector<8x32xf32>
    %118 = arith.addf %116, %117 : vector<8x32xf32>
    %119 = arith.addf %17, %118 : vector<8x32xf32>
    %120 = vector.extract_strided_slice %2 {offsets = [1, 0], sizes = [1, 32], strides = [1, 1]} : vector<3x32xf32> to vector<1x32xf32>
    %121 = vector.extract_strided_slice %3 {offsets = [1, 0], sizes = [1, 32], strides = [1, 1]} : vector<3x32xf32> to vector<1x32xf32>
    %cst_39 = arith.constant dense<0.000000e+00> : vector<8xf32>
    %122 = vector.multi_reduction <add>, %119, %cst_39 [1] : vector<8x32xf32> to vector<8xf32>
    %123 = vector.shape_cast %122 : vector<8xf32> to vector<8x1xf32>
    %cst_40 = arith.constant 3.200000e+01 : f32
    %124 = vector.broadcast %cst_40 : f32 to vector<8x1xf32>
    %125 = arith.divf %123, %124 : vector<8x1xf32>
    %126 = vector.broadcast %125 : vector<8x1xf32> to vector<8x32xf32>
    %127 = arith.subf %119, %126 : vector<8x32xf32>
    %128 = arith.mulf %127, %127 : vector<8x32xf32>
    %cst_41 = arith.constant dense<0.000000e+00> : vector<8xf32>
    %129 = vector.multi_reduction <add>, %128, %cst_41 [1] : vector<8x32xf32> to vector<8xf32>
    %130 = vector.shape_cast %129 : vector<8xf32> to vector<8x1xf32>
    %cst_42 = arith.constant 3.200000e+01 : f32
    %131 = vector.broadcast %cst_42 : f32 to vector<8x1xf32>
    %132 = arith.divf %130, %131 : vector<8x1xf32>
    %cst_43 = arith.constant 9.99999974E-6 : f32
    %133 = vector.broadcast %cst_43 : f32 to vector<8x1xf32>
    %134 = arith.addf %132, %133 : vector<8x1xf32>
    %135 = math.rsqrt %134 : vector<8x1xf32>
    %136 = vector.broadcast %135 : vector<8x1xf32> to vector<8x32xf32>
    %137 = arith.mulf %127, %136 : vector<8x32xf32>
    %138 = vector.broadcast %120 : vector<1x32xf32> to vector<8x32xf32>
    %139 = arith.mulf %137, %138 : vector<8x32xf32>
    %140 = vector.broadcast %121 : vector<1x32xf32> to vector<8x32xf32>
    %141 = arith.addf %139, %140 : vector<8x32xf32>
    %142 = arith.truncf %141 : vector<8x32xf32> to vector<8x32xbf16>
    %c0_44 = arith.constant 0 : index
    %c0_45 = arith.constant 0 : index
    %143 = vector.load %arg11[%c0_44, %c0_45] : memref<32x32xbf16, #tpu.memory_space<vmem>>, vector<32x32xbf16>
    %cst_46 = arith.constant dense<0.000000e+00> : vector<8x32xf32>
    %144 = tpu.matmul %142, %143, %cst_46 {dimension_numbers = #tpu.dot_dimension_numbers<[1], [0], [0], [1], [0, 0, 1, 1], [], []>} : vector<8x32xbf16>, vector<32x32xbf16>, vector<8x32xf32> -> vector<8x32xf32>
    %c0_47 = arith.constant 0 : index
    %c0_48 = arith.constant 0 : index
    %145 = vector.load %arg12[%c0_47, %c0_48] : memref<1x32xf32, #tpu.memory_space<vmem>>, vector<1x32xf32>
    %146 = vector.broadcast %145 : vector<1x32xf32> to vector<8x32xf32>
    %147 = arith.addf %144, %146 : vector<8x32xf32>
    %148 = arith.truncf %147 : vector<8x32xf32> to vector<8x32xbf16>
    %c0_49 = arith.constant 0 : index
    %c0_50 = arith.constant 0 : index
    %149 = vector.load %arg23[%c0_49, %c0_50] : memref<8x64xbf16, #tpu.memory_space<vmem>>, vector<8x32xbf16>
    %c0_51 = arith.constant 0 : index
    %c32_52 = arith.constant 32 : index
    %150 = vector.load %arg23[%c0_51, %c32_52] : memref<8x64xbf16, #tpu.memory_space<vmem>>, vector<8x32xbf16>
    %c0_53 = arith.constant 0 : index
    %c0_54 = arith.constant 0 : index
    %c0_55 = arith.constant 0 : index
    %151 = vector.load %arg4[%c0_53, %c0_54, %c0_55] : memref<1x1x8xf32, #tpu.memory_space<vmem>>, vector<1x1x8xf32>
    %152 = vector.shape_cast %151 : vector<1x1x8xf32> to vector<1x8xf32>
    %c0_56 = arith.constant 0 : index
    %c0_57 = arith.constant 0 : index
    %153 = vector.load %arg15[%c0_56, %c0_57] : memref<32x32xbf16, #tpu.memory_space<vmem>>, vector<32x32xbf16>
    %c0_58 = arith.constant 0 : index
    %c0_59 = arith.constant 0 : index
    %154 = vector.load %arg16[%c0_58, %c0_59] : memref<1x32xf32, #tpu.memory_space<vmem>>, vector<1x32xf32>
    %cst_60 = arith.constant 0.000000e+00 : f32
    %155 = vector.broadcast %cst_60 : f32 to vector<8x32xf32>
    %156 = vector.extract_strided_slice %148 {offsets = [0, 0], sizes = [8, 8], strides = [1, 1]} : vector<8x32xbf16> to vector<8x8xbf16>
    %157 = vector.extract_strided_slice %149 {offsets = [0, 0], sizes = [8, 8], strides = [1, 1]} : vector<8x32xbf16> to vector<8x8xbf16>
    %cst_61 = arith.constant dense<0.000000e+00> : vector<8x8xf32>
    %158 = tpu.matmul %156, %157, %cst_61 {dimension_numbers = #tpu.dot_dimension_numbers<[1], [1], [0], [0], [0, 0, 1, 0], [], []>} : vector<8x8xbf16>, vector<8x8xbf16>, vector<8x8xf32> -> vector<8x8xf32>
    %cst_62 = arith.constant 0.353553385 : f32
    %159 = vector.broadcast %cst_62 : f32 to vector<8x8xf32>
    %160 = arith.mulf %158, %159 : vector<8x8xf32>
    %161 = vector.broadcast %152 : vector<1x8xf32> to vector<8x8xf32>
    %162 = arith.addf %160, %161 : vector<8x8xf32>
    %cst_63 = arith.constant dense<0xFF800000> : vector<8xf32>
    %163 = vector.multi_reduction <maximumf>, %162, %cst_63 [1] : vector<8x8xf32> to vector<8xf32>
    %164 = vector.shape_cast %163 : vector<8xf32> to vector<8x1xf32>
    %165 = vector.broadcast %164 : vector<8x1xf32> to vector<8x8xf32>
    %166 = arith.subf %162, %165 : vector<8x8xf32>
    %167 = math.exp %166 : vector<8x8xf32>
    %cst_64 = arith.constant dense<0.000000e+00> : vector<8xf32>
    %168 = vector.multi_reduction <add>, %167, %cst_64 [1] : vector<8x8xf32> to vector<8xf32>
    %169 = vector.shape_cast %168 : vector<8xf32> to vector<8x1xf32>
    %170 = arith.truncf %167 : vector<8x8xf32> to vector<8x8xbf16>
    %171 = vector.extract_strided_slice %150 {offsets = [0, 0], sizes = [8, 8], strides = [1, 1]} : vector<8x32xbf16> to vector<8x8xbf16>
    %cst_65 = arith.constant dense<0.000000e+00> : vector<8x8xf32>
    %172 = tpu.matmul %170, %171, %cst_65 {dimension_numbers = #tpu.dot_dimension_numbers<[1], [0], [0], [1], [0, 0, 1, 1], [], []>} : vector<8x8xbf16>, vector<8x8xbf16>, vector<8x8xf32> -> vector<8x8xf32>
    %173 = tpu.reciprocal %169 {approx = true} : vector<8x1xf32> -> vector<8x1xf32>
    %174 = vector.broadcast %173 : vector<8x1xf32> to vector<8x8xf32>
    %175 = arith.mulf %172, %174 : vector<8x8xf32>
    %176 = arith.truncf %175 : vector<8x8xf32> to vector<8x8xbf16>
    %177 = vector.extract_strided_slice %153 {offsets = [0, 0], sizes = [8, 32], strides = [1, 1]} : vector<32x32xbf16> to vector<8x32xbf16>
    %cst_66 = arith.constant dense<0.000000e+00> : vector<8x32xf32>
    %178 = tpu.matmul %176, %177, %cst_66 {dimension_numbers = #tpu.dot_dimension_numbers<[1], [0], [0], [1], [0, 0, 1, 1], [], []>} : vector<8x8xbf16>, vector<8x32xbf16>, vector<8x32xf32> -> vector<8x32xf32>
    %179 = arith.addf %155, %178 : vector<8x32xf32>
    %180 = vector.extract_strided_slice %148 {offsets = [0, 8], sizes = [8, 8], strides = [1, 1]} : vector<8x32xbf16> to vector<8x8xbf16>
    %181 = vector.extract_strided_slice %149 {offsets = [0, 8], sizes = [8, 8], strides = [1, 1]} : vector<8x32xbf16> to vector<8x8xbf16>
    %cst_67 = arith.constant dense<0.000000e+00> : vector<8x8xf32>
    %182 = tpu.matmul %180, %181, %cst_67 {dimension_numbers = #tpu.dot_dimension_numbers<[1], [1], [0], [0], [0, 0, 1, 0], [], []>} : vector<8x8xbf16>, vector<8x8xbf16>, vector<8x8xf32> -> vector<8x8xf32>
    %cst_68 = arith.constant 0.353553385 : f32
    %183 = vector.broadcast %cst_68 : f32 to vector<8x8xf32>
    %184 = arith.mulf %182, %183 : vector<8x8xf32>
    %185 = vector.broadcast %152 : vector<1x8xf32> to vector<8x8xf32>
    %186 = arith.addf %184, %185 : vector<8x8xf32>
    %cst_69 = arith.constant dense<0xFF800000> : vector<8xf32>
    %187 = vector.multi_reduction <maximumf>, %186, %cst_69 [1] : vector<8x8xf32> to vector<8xf32>
    %188 = vector.shape_cast %187 : vector<8xf32> to vector<8x1xf32>
    %189 = vector.broadcast %188 : vector<8x1xf32> to vector<8x8xf32>
    %190 = arith.subf %186, %189 : vector<8x8xf32>
    %191 = math.exp %190 : vector<8x8xf32>
    %cst_70 = arith.constant dense<0.000000e+00> : vector<8xf32>
    %192 = vector.multi_reduction <add>, %191, %cst_70 [1] : vector<8x8xf32> to vector<8xf32>
    %193 = vector.shape_cast %192 : vector<8xf32> to vector<8x1xf32>
    %194 = arith.truncf %191 : vector<8x8xf32> to vector<8x8xbf16>
    %195 = vector.extract_strided_slice %150 {offsets = [0, 8], sizes = [8, 8], strides = [1, 1]} : vector<8x32xbf16> to vector<8x8xbf16>
    %cst_71 = arith.constant dense<0.000000e+00> : vector<8x8xf32>
    %196 = tpu.matmul %194, %195, %cst_71 {dimension_numbers = #tpu.dot_dimension_numbers<[1], [0], [0], [1], [0, 0, 1, 1], [], []>} : vector<8x8xbf16>, vector<8x8xbf16>, vector<8x8xf32> -> vector<8x8xf32>
    %197 = tpu.reciprocal %193 {approx = true} : vector<8x1xf32> -> vector<8x1xf32>
    %198 = vector.broadcast %197 : vector<8x1xf32> to vector<8x8xf32>
    %199 = arith.mulf %196, %198 : vector<8x8xf32>
    %200 = arith.truncf %199 : vector<8x8xf32> to vector<8x8xbf16>
    %201 = vector.extract_strided_slice %153 {offsets = [8, 0], sizes = [8, 32], strides = [1, 1]} : vector<32x32xbf16> to vector<8x32xbf16>
    %cst_72 = arith.constant dense<0.000000e+00> : vector<8x32xf32>
    %202 = tpu.matmul %200, %201, %cst_72 {dimension_numbers = #tpu.dot_dimension_numbers<[1], [0], [0], [1], [0, 0, 1, 1], [], []>} : vector<8x8xbf16>, vector<8x32xbf16>, vector<8x32xf32> -> vector<8x32xf32>
    %203 = arith.addf %179, %202 : vector<8x32xf32>
    %204 = vector.extract_strided_slice %148 {offsets = [0, 16], sizes = [8, 8], strides = [1, 1]} : vector<8x32xbf16> to vector<8x8xbf16>
    %205 = vector.extract_strided_slice %149 {offsets = [0, 16], sizes = [8, 8], strides = [1, 1]} : vector<8x32xbf16> to vector<8x8xbf16>
    %cst_73 = arith.constant dense<0.000000e+00> : vector<8x8xf32>
    %206 = tpu.matmul %204, %205, %cst_73 {dimension_numbers = #tpu.dot_dimension_numbers<[1], [1], [0], [0], [0, 0, 1, 0], [], []>} : vector<8x8xbf16>, vector<8x8xbf16>, vector<8x8xf32> -> vector<8x8xf32>
    %cst_74 = arith.constant 0.353553385 : f32
    %207 = vector.broadcast %cst_74 : f32 to vector<8x8xf32>
    %208 = arith.mulf %206, %207 : vector<8x8xf32>
    %209 = vector.broadcast %152 : vector<1x8xf32> to vector<8x8xf32>
    %210 = arith.addf %208, %209 : vector<8x8xf32>
    %cst_75 = arith.constant dense<0xFF800000> : vector<8xf32>
    %211 = vector.multi_reduction <maximumf>, %210, %cst_75 [1] : vector<8x8xf32> to vector<8xf32>
    %212 = vector.shape_cast %211 : vector<8xf32> to vector<8x1xf32>
    %213 = vector.broadcast %212 : vector<8x1xf32> to vector<8x8xf32>
    %214 = arith.subf %210, %213 : vector<8x8xf32>
    %215 = math.exp %214 : vector<8x8xf32>
    %cst_76 = arith.constant dense<0.000000e+00> : vector<8xf32>
    %216 = vector.multi_reduction <add>, %215, %cst_76 [1] : vector<8x8xf32> to vector<8xf32>
    %217 = vector.shape_cast %216 : vector<8xf32> to vector<8x1xf32>
    %218 = arith.truncf %215 : vector<8x8xf32> to vector<8x8xbf16>
    %219 = vector.extract_strided_slice %150 {offsets = [0, 16], sizes = [8, 8], strides = [1, 1]} : vector<8x32xbf16> to vector<8x8xbf16>
    %cst_77 = arith.constant dense<0.000000e+00> : vector<8x8xf32>
    %220 = tpu.matmul %218, %219, %cst_77 {dimension_numbers = #tpu.dot_dimension_numbers<[1], [0], [0], [1], [0, 0, 1, 1], [], []>} : vector<8x8xbf16>, vector<8x8xbf16>, vector<8x8xf32> -> vector<8x8xf32>
    %221 = tpu.reciprocal %217 {approx = true} : vector<8x1xf32> -> vector<8x1xf32>
    %222 = vector.broadcast %221 : vector<8x1xf32> to vector<8x8xf32>
    %223 = arith.mulf %220, %222 : vector<8x8xf32>
    %224 = arith.truncf %223 : vector<8x8xf32> to vector<8x8xbf16>
    %225 = vector.extract_strided_slice %153 {offsets = [16, 0], sizes = [8, 32], strides = [1, 1]} : vector<32x32xbf16> to vector<8x32xbf16>
    %cst_78 = arith.constant dense<0.000000e+00> : vector<8x32xf32>
    %226 = tpu.matmul %224, %225, %cst_78 {dimension_numbers = #tpu.dot_dimension_numbers<[1], [0], [0], [1], [0, 0, 1, 1], [], []>} : vector<8x8xbf16>, vector<8x32xbf16>, vector<8x32xf32> -> vector<8x32xf32>
    %227 = arith.addf %203, %226 : vector<8x32xf32>
    %228 = vector.extract_strided_slice %148 {offsets = [0, 24], sizes = [8, 8], strides = [1, 1]} : vector<8x32xbf16> to vector<8x8xbf16>
    %229 = vector.extract_strided_slice %149 {offsets = [0, 24], sizes = [8, 8], strides = [1, 1]} : vector<8x32xbf16> to vector<8x8xbf16>
    %cst_79 = arith.constant dense<0.000000e+00> : vector<8x8xf32>
    %230 = tpu.matmul %228, %229, %cst_79 {dimension_numbers = #tpu.dot_dimension_numbers<[1], [1], [0], [0], [0, 0, 1, 0], [], []>} : vector<8x8xbf16>, vector<8x8xbf16>, vector<8x8xf32> -> vector<8x8xf32>
    %cst_80 = arith.constant 0.353553385 : f32
    %231 = vector.broadcast %cst_80 : f32 to vector<8x8xf32>
    %232 = arith.mulf %230, %231 : vector<8x8xf32>
    %233 = vector.broadcast %152 : vector<1x8xf32> to vector<8x8xf32>
    %234 = arith.addf %232, %233 : vector<8x8xf32>
    %cst_81 = arith.constant dense<0xFF800000> : vector<8xf32>
    %235 = vector.multi_reduction <maximumf>, %234, %cst_81 [1] : vector<8x8xf32> to vector<8xf32>
    %236 = vector.shape_cast %235 : vector<8xf32> to vector<8x1xf32>
    %237 = vector.broadcast %236 : vector<8x1xf32> to vector<8x8xf32>
    %238 = arith.subf %234, %237 : vector<8x8xf32>
    %239 = math.exp %238 : vector<8x8xf32>
    %cst_82 = arith.constant dense<0.000000e+00> : vector<8xf32>
    %240 = vector.multi_reduction <add>, %239, %cst_82 [1] : vector<8x8xf32> to vector<8xf32>
    %241 = vector.shape_cast %240 : vector<8xf32> to vector<8x1xf32>
    %242 = arith.truncf %239 : vector<8x8xf32> to vector<8x8xbf16>
    %243 = vector.extract_strided_slice %150 {offsets = [0, 24], sizes = [8, 8], strides = [1, 1]} : vector<8x32xbf16> to vector<8x8xbf16>
    %cst_83 = arith.constant dense<0.000000e+00> : vector<8x8xf32>
    %244 = tpu.matmul %242, %243, %cst_83 {dimension_numbers = #tpu.dot_dimension_numbers<[1], [0], [0], [1], [0, 0, 1, 1], [], []>} : vector<8x8xbf16>, vector<8x8xbf16>, vector<8x8xf32> -> vector<8x8xf32>
    %245 = tpu.reciprocal %241 {approx = true} : vector<8x1xf32> -> vector<8x1xf32>
    %246 = vector.broadcast %245 : vector<8x1xf32> to vector<8x8xf32>
    %247 = arith.mulf %244, %246 : vector<8x8xf32>
    %248 = arith.truncf %247 : vector<8x8xf32> to vector<8x8xbf16>
    %249 = vector.extract_strided_slice %153 {offsets = [24, 0], sizes = [8, 32], strides = [1, 1]} : vector<32x32xbf16> to vector<8x32xbf16>
    %cst_84 = arith.constant dense<0.000000e+00> : vector<8x32xf32>
    %250 = tpu.matmul %248, %249, %cst_84 {dimension_numbers = #tpu.dot_dimension_numbers<[1], [0], [0], [1], [0, 0, 1, 1], [], []>} : vector<8x8xbf16>, vector<8x32xbf16>, vector<8x32xf32> -> vector<8x32xf32>
    %251 = arith.addf %227, %250 : vector<8x32xf32>
    %252 = vector.broadcast %154 : vector<1x32xf32> to vector<8x32xf32>
    %253 = arith.addf %251, %252 : vector<8x32xf32>
    %254 = arith.addf %119, %253 : vector<8x32xf32>
    %255 = vector.extract_strided_slice %2 {offsets = [2, 0], sizes = [1, 32], strides = [1, 1]} : vector<3x32xf32> to vector<1x32xf32>
    %256 = vector.extract_strided_slice %3 {offsets = [2, 0], sizes = [1, 32], strides = [1, 1]} : vector<3x32xf32> to vector<1x32xf32>
    %cst_85 = arith.constant dense<0.000000e+00> : vector<8xf32>
    %257 = vector.multi_reduction <add>, %254, %cst_85 [1] : vector<8x32xf32> to vector<8xf32>
    %258 = vector.shape_cast %257 : vector<8xf32> to vector<8x1xf32>
    %cst_86 = arith.constant 3.200000e+01 : f32
    %259 = vector.broadcast %cst_86 : f32 to vector<8x1xf32>
    %260 = arith.divf %258, %259 : vector<8x1xf32>
    %261 = vector.broadcast %260 : vector<8x1xf32> to vector<8x32xf32>
    %262 = arith.subf %254, %261 : vector<8x32xf32>
    %263 = arith.mulf %262, %262 : vector<8x32xf32>
    %cst_87 = arith.constant dense<0.000000e+00> : vector<8xf32>
    %264 = vector.multi_reduction <add>, %263, %cst_87 [1] : vector<8x32xf32> to vector<8xf32>
    %265 = vector.shape_cast %264 : vector<8xf32> to vector<8x1xf32>
    %cst_88 = arith.constant 3.200000e+01 : f32
    %266 = vector.broadcast %cst_88 : f32 to vector<8x1xf32>
    %267 = arith.divf %265, %266 : vector<8x1xf32>
    %cst_89 = arith.constant 9.99999974E-6 : f32
    %268 = vector.broadcast %cst_89 : f32 to vector<8x1xf32>
    %269 = arith.addf %267, %268 : vector<8x1xf32>
    %270 = math.rsqrt %269 : vector<8x1xf32>
    %271 = vector.broadcast %270 : vector<8x1xf32> to vector<8x32xf32>
    %272 = arith.mulf %262, %271 : vector<8x32xf32>
    %273 = vector.broadcast %255 : vector<1x32xf32> to vector<8x32xf32>
    %274 = arith.mulf %272, %273 : vector<8x32xf32>
    %275 = vector.broadcast %256 : vector<1x32xf32> to vector<8x32xf32>
    %276 = arith.addf %274, %275 : vector<8x32xf32>
    %277 = arith.truncf %276 : vector<8x32xf32> to vector<8x32xbf16>
    %c0_90 = arith.constant 0 : index
    %c0_91 = arith.constant 0 : index
    %278 = vector.load %arg17[%c0_90, %c0_91] : memref<32x64xbf16, #tpu.memory_space<vmem>>, vector<32x64xbf16>
    %cst_92 = arith.constant dense<0.000000e+00> : vector<8x64xf32>
    %279 = tpu.matmul %277, %278, %cst_92 {dimension_numbers = #tpu.dot_dimension_numbers<[1], [0], [0], [1], [0, 0, 1, 1], [], []>} : vector<8x32xbf16>, vector<32x64xbf16>, vector<8x64xf32> -> vector<8x64xf32>
    %c0_93 = arith.constant 0 : index
    %c0_94 = arith.constant 0 : index
    %280 = vector.load %arg18[%c0_93, %c0_94] : memref<1x64xf32, #tpu.memory_space<vmem>>, vector<1x64xf32>
    %281 = vector.broadcast %280 : vector<1x64xf32> to vector<8x64xf32>
    %282 = arith.addf %279, %281 : vector<8x64xf32>
    %cst_95 = arith.constant 0.000000e+00 : f32
    %283 = vector.broadcast %cst_95 : f32 to vector<8x64xf32>
    %284 = arith.maximumf %282, %283 : vector<8x64xf32>
    %285 = arith.truncf %284 : vector<8x64xf32> to vector<8x64xbf16>
    %c0_96 = arith.constant 0 : index
    %c0_97 = arith.constant 0 : index
    %286 = vector.load %arg19[%c0_96, %c0_97] : memref<64x32xbf16, #tpu.memory_space<vmem>>, vector<64x32xbf16>
    %cst_98 = arith.constant dense<0.000000e+00> : vector<8x32xf32>
    %287 = tpu.matmul %285, %286, %cst_98 {dimension_numbers = #tpu.dot_dimension_numbers<[1], [0], [0], [1], [0, 0, 1, 1], [], []>} : vector<8x64xbf16>, vector<64x32xbf16>, vector<8x32xf32> -> vector<8x32xf32>
    %288 = arith.addf %254, %287 : vector<8x32xf32>
    %c0_99 = arith.constant 0 : index
    %c0_100 = arith.constant 0 : index
    %289 = vector.load %arg20[%c0_99, %c0_100] : memref<1x32xf32, #tpu.memory_space<vmem>>, vector<1x32xf32>
    %290 = vector.broadcast %289 : vector<1x32xf32> to vector<8x32xf32>
    %291 = arith.addf %288, %290 : vector<8x32xf32>
    %c0_101 = arith.constant 0 : index
    %c0_102 = arith.constant 0 : index
    %c0_103 = arith.constant 0 : index
    %292 = vector.load %arg21[%c0_101, %c0_102, %c0_103] : memref<1x8x32xf32, #tpu.memory_space<vmem>>, vector<1x8x32xf32>
    %293 = vector.shape_cast %292 : vector<1x8x32xf32> to vector<8x32xf32>
    %294 = vector.shape_cast %291 : vector<8x32xf32> to vector<1x8x32xf32>
    tpu.vector_store %arg21[%c0_101, %c0_102, %c0_103], %294 {strides = array<i32>} : memref<1x8x32xf32, #tpu.memory_space<vmem>>, vector<1x8x32xf32>,
    return
  }
  func.func @transform_0(%arg0: i32, %arg1: i32) -> (i32, i32, i32) {
    %c0_i32 = arith.constant 0 : i32
    %c0_i32_0 = arith.constant 0 : i32
    %c0_i32_1 = arith.constant 0 : i32
    return %arg0, %c0_i32, %c0_i32_0 : i32, i32, i32
  }
  func.func @transform_1(%arg0: i32, %arg1: i32) -> (i32, i32, i32) {
    %c0_i32 = arith.constant 0 : i32
    %c0_i32_0 = arith.constant 0 : i32
    %c0_i32_1 = arith.constant 0 : i32
    return %arg0, %c0_i32, %c0_i32_0 : i32, i32, i32
  }
  func.func @transform_2(%arg0: i32, %arg1: i32) -> (i32, i32, i32) {
    %c0_i32 = arith.constant 0 : i32
    %c0_i32_0 = arith.constant 0 : i32
    %c0_i32_1 = arith.constant 0 : i32
    return %arg0, %c0_i32, %c0_i32_0 : i32, i32, i32
  }
  func.func @transform_3(%arg0: i32, %arg1: i32) -> (i32, i32) {
    %c0_i32 = arith.constant 0 : i32
    %c0_i32_0 = arith.constant 0 : i32
    %c0_i32_1 = arith.constant 0 : i32
    return %c0_i32, %c0_i32_0 : i32, i32
  }
  func.func @transform_4(%arg0: i32, %arg1: i32) -> (i32, i32) {
    %c0_i32 = arith.constant 0 : i32
    %c0_i32_0 = arith.constant 0 : i32
    %c0_i32_1 = arith.constant 0 : i32
    return %c0_i32, %c0_i32_0 : i32, i32
  }
  func.func @transform_5(%arg0: i32, %arg1: i32) -> (i32, i32) {
    %c0_i32 = arith.constant 0 : i32
    %c0_i32_0 = arith.constant 0 : i32
    %c0_i32_1 = arith.constant 0 : i32
    return %c0_i32, %c0_i32_0 : i32, i32
  }
  func.func @transform_6(%arg0: i32, %arg1: i32) -> (i32, i32) {
    %c0_i32 = arith.constant 0 : i32
    %c0_i32_0 = arith.constant 0 : i32
    %c0_i32_1 = arith.constant 0 : i32
    return %c0_i32, %c0_i32_0 : i32, i32
  }
  func.func @transform_7(%arg0: i32, %arg1: i32) -> (i32, i32) {
    %c0_i32 = arith.constant 0 : i32
    %c0_i32_0 = arith.constant 0 : i32
    %c0_i32_1 = arith.constant 0 : i32
    return %c0_i32, %c0_i32_0 : i32, i32
  }
  func.func @transform_8(%arg0: i32, %arg1: i32) -> (i32, i32) {
    %c0_i32 = arith.constant 0 : i32
    %c0_i32_0 = arith.constant 0 : i32
    %c0_i32_1 = arith.constant 0 : i32
    return %c0_i32, %c0_i32_0 : i32, i32
  }
  func.func @transform_9(%arg0: i32, %arg1: i32) -> (i32, i32) {
    %c0_i32 = arith.constant 0 : i32
    %c0_i32_0 = arith.constant 0 : i32
    %c0_i32_1 = arith.constant 0 : i32
    return %c0_i32, %c0_i32_0 : i32, i32
  }
  func.func @transform_10(%arg0: i32, %arg1: i32) -> (i32, i32) {
    %c0_i32 = arith.constant 0 : i32
    %c0_i32_0 = arith.constant 0 : i32
    %c0_i32_1 = arith.constant 0 : i32
    return %c0_i32, %c0_i32_0 : i32, i32
  }
  func.func @transform_11(%arg0: i32, %arg1: i32) -> (i32, i32) {
    %c0_i32 = arith.constant 0 : i32
    %c0_i32_0 = arith.constant 0 : i32
    %c0_i32_1 = arith.constant 0 : i32
    return %c0_i32, %c0_i32_0 : i32, i32
  }
  func.func @transform_12(%arg0: i32, %arg1: i32) -> (i32, i32) {
    %c0_i32 = arith.constant 0 : i32
    %c0_i32_0 = arith.constant 0 : i32
    %c0_i32_1 = arith.constant 0 : i32
    return %c0_i32, %c0_i32_0 : i32, i32
  }
  func.func @transform_13(%arg0: i32, %arg1: i32) -> (i32, i32) {
    %c0_i32 = arith.constant 0 : i32
    %c0_i32_0 = arith.constant 0 : i32
    %c0_i32_1 = arith.constant 0 : i32
    return %c0_i32, %c0_i32_0 : i32, i32
  }
  func.func @transform_14(%arg0: i32, %arg1: i32) -> (i32, i32) {
    %c0_i32 = arith.constant 0 : i32
    %c0_i32_0 = arith.constant 0 : i32
    %c0_i32_1 = arith.constant 0 : i32
    return %c0_i32, %c0_i32_0 : i32, i32
  }
  func.func @transform_15(%arg0: i32, %arg1: i32) -> (i32, i32) {
    %c0_i32 = arith.constant 0 : i32
    %c0_i32_0 = arith.constant 0 : i32
    %c0_i32_1 = arith.constant 0 : i32
    return %c0_i32, %c0_i32_0 : i32, i32
  }
  func.func @transform_16(%arg0: i32, %arg1: i32) -> (i32, i32) {
    %c0_i32 = arith.constant 0 : i32
    %c0_i32_0 = arith.constant 0 : i32
    %c0_i32_1 = arith.constant 0 : i32
    return %c0_i32, %c0_i32_0 : i32, i32
  }
  func.func @transform_17(%arg0: i32, %arg1: i32) -> (i32, i32) {
    %c0_i32 = arith.constant 0 : i32
    %c0_i32_0 = arith.constant 0 : i32
    %c0_i32_1 = arith.constant 0 : i32
    return %c0_i32, %c0_i32_0 : i32, i32
  }
  func.func @transform_18(%arg0: i32, %arg1: i32) -> (i32, i32) {
    %c0_i32 = arith.constant 0 : i32
    %c0_i32_0 = arith.constant 0 : i32
    %c0_i32_1 = arith.constant 0 : i32
    return %c0_i32, %c0_i32_0 : i32, i32
  }
  func.func @transform_19(%arg0: i32, %arg1: i32) -> (i32, i32, i32) {
    %c0_i32 = arith.constant 0 : i32
    %c0_i32_0 = arith.constant 0 : i32
    return %arg0, %arg1, %c0_i32 : i32, i32, i32
  }
}

</mosaic_0001>

<llo_original>
// kernel: decoder_block.1
$region0: #{decoder_block.1}
  #allocation0 [shape = 'u32[]', space=smem, size = 0x4, offset = 0x4, fixed_abs, tag = 'smem constant byte address 0x4 - core index']
  #allocation1 [shape = 'u32[144,128]{1,0:T(1,128)}', space=vmem, size = 0x12000, scoped, tag = 'internal scratch']
  #allocation2 [shape = 'bf16[8,96]{1,0:T(8,128)(2,1)}', space=vmem, size = 0x800, scoped, tag = 'scratch operand']
  #allocation3 [shape = 'bf16[8,64]{1,0:T(8,128)(2,1)}', space=vmem, size = 0x800, scoped, tag = 'scratch operand']
  %s0 = inlined_call_operand.vmem [shape: f32[2,8,32], index: 0, kind: input, shape index: {}]
  %s1 = inlined_call_operand.vmem [shape: f32[2,8,32], index: 1, kind: input, shape index: {}]
  %s2 = inlined_call_operand.vmem [shape: f32[2,1,8], index: 2, kind: input, shape index: {}]
  %s3 = inlined_call_operand.vmem [shape: f32[3,32], index: 3, kind: input, shape index: {}]
  %s4 = inlined_call_operand.vmem [shape: f32[3,32], index: 4, kind: input, shape index: {}]
  %s5 = inlined_call_operand.vmem [shape: bf16[32,96], index: 5, kind: input, shape index: {}]
  %s6 = inlined_call_operand.vmem [shape: f32[1,96], index: 6, kind: input, shape index: {}]
  %s7 = inlined_call_operand.vmem [shape: bf16[32,32], index: 7, kind: input, shape index: {}]
  %s8 = inlined_call_operand.vmem [shape: f32[1,32], index: 8, kind: input, shape index: {}]
  %s9 = inlined_call_operand.hbm [shape: bf16[32,32], index: 9, kind: input, shape index: {}]
  %s10 = inlined_call_operand.hbm [shape: f32[1,32], index: 10, kind: input, shape index: {}]
  %s11 = inlined_call_operand.hbm [shape: bf16[32,64], index: 11, kind: input, shape index: {}]
  %s12 = inlined_call_operand.hbm [shape: f32[1,64], index: 12, kind: input, shape index: {}]
  %s13 = inlined_call_operand.hbm [shape: bf16[32,32], index: 13, kind: input, shape index: {}]
  %s14 = inlined_call_operand.hbm [shape: f32[1,32], index: 14, kind: input, shape index: {}]
  %s15 = inlined_call_operand.hbm [shape: bf16[32,64], index: 15, kind: input, shape index: {}]
  %s16 = inlined_call_operand.hbm [shape: f32[1,64], index: 16, kind: input, shape index: {}]
  %s17 = inlined_call_operand.vmem [shape: bf16[64,32], index: 17, kind: input, shape index: {}]
  %s18 = inlined_call_operand.hbm [shape: f32[1,32], index: 18, kind: input, shape index: {}]
  %s19 = inlined_call_operand.hbm [shape: f32[2,8,32], index: 19, kind: output, shape index: {}]
  %s20 = sld [smem:[#allocation0]]
  $region149: #{decoder_block.1} parent=0
    _
  %s22 = ssub.s32 1, %s20
  %s23 = scalar_select 0, %s22, %s20
  $region1: #{decoder_block.1} parent=0
    #allocation4 [shape = 'u8[8192]{0}', space=vmem, size = 0x2000, scoped, tag = 'input window, operand 9, single buffered']
    #allocation5 [shape = 's32[2]{0}', space=sflag, size = 0x8, scoped, tag = 'scoped memory for decoder_block.1']
    #allocation6 [shape = 's32[2]{0}', space=sflag, size = 0x8, scoped, tag = 'scoped memory for decoder_block.1']
    #allocation7 [shape = 'u8[512]{0}', space=vmem, size = 0x400, scoped, tag = 'input window, operand 10, single buffered']
    #allocation8 [shape = 's32[1]{0}', space=sflag, size = 0x4, scoped, tag = 'scoped memory for decoder_block.1']
    #allocation9 [shape = 'u8[8192]{0}', space=vmem, size = 0x2000, scoped, tag = 'input window, operand 11, single buffered']
    #allocation10 [shape = 'u8[512]{0}', space=vmem, size = 0x400, scoped, tag = 'input window, operand 12, single buffered']
    #allocation11 [shape = 's32[1]{0}', space=sflag, size = 0x4, scoped, tag = 'scoped memory for decoder_block.1']
    #allocation12 [shape = 'u8[8192]{0}', space=vmem, size = 0x2000, scoped, tag = 'input window, operand 13, single buffered']
    #allocation13 [shape = 'u8[512]{0}', space=vmem, size = 0x400, scoped, tag = 'input window, operand 14, single buffered']
    #allocation14 [shape = 's32[1]{0}', space=sflag, size = 0x4, scoped, tag = 'scoped memory for decoder_block.1']
    #allocation15 [shape = 'u8[8192]{0}', space=vmem, size = 0x2000, scoped, tag = 'input window, operand 15, single buffered']
    #allocation16 [shape = 'u8[512]{0}', space=vmem, size = 0x400, scoped, tag = 'input window, operand 16, single buffered']
    #allocation17 [shape = 's32[1]{0}', space=sflag, size = 0x4, scoped, tag = 'scoped memory for decoder_block.1']
    #allocation18 [shape = 'u8[512]{0}', space=vmem, size = 0x400, scoped, tag = 'input window, operand 18, single buffered']
    #allocation19 [shape = 'u8[8192]{0}', space=vmem, size = 0x2000, scoped, tag = 'output window, operand 0']
    %24 = vsyncpa [#allocation5], 0
    %25 = vsyncpa [#allocation8], 0
    %26 = vsyncpa [#allocation11], 0
    %27 = vsyncpa [#allocation14], 0
    %28 = vsyncpa [#allocation17], 0
    %29 = vsyncpa [#allocation6], 0
    %s30 = scalar_lea.sflag [#allocation6], 1
    %31 = vsyncpa %s30, 0
    loop: start=0, step=1, limit=4
    $region2: #{decoder_block.1} parent=1 // loop_pre_header
      _
    $region3: #{decoder_block.1} parent=1 // loop_header
      %s33 = sphi 0, %s37
      %p34 = scmp.ge.s32.totalorder %s33, 4
      %s40 = sphi 0, %s52
      %s41 = sphi 0, %s48
      %s42 = sphi 0, %s40
      %s43 = sphi 0, %s41
      %s44 = sphi 0, %s42
      %s45 = sphi 0, %s43
      %s55 = sphi 0, %s57
      %s58 = sphi 0, %s55
      %s59 = sphi 0, %s58
      %s75 = sphi 0, %s59
      %s81 = sphi 0, %s83
      %s84 = sphi 0, %s81
      %s85 = sphi 0, %s84
      %s101 = sphi 0, %s85
      %s107 = sphi 0, %s109
      %s110 = sphi 0, %s107
      %s111 = sphi 0, %s110
      %s127 = sphi 0, %s111
      %s131 = sphi 0, %s131
      %s133 = sphi 0, %s131
      %s134 = sphi 0, %s133
      %s148 = sphi 0, %s134
      %s152 = sphi 0, %s152
      %s154 = sphi 0, %s152
      %s155 = sphi 0, %s154
      %s169 = sphi 0, %s155
      %s173 = sphi 0, %s173
      %s175 = sphi 0, %s173
      %s176 = sphi 0, %s175
      %s190 = sphi 0, %s176
      %s194 = sphi 0, %s194
      %s196 = sphi 0, %s194
      %s197 = sphi 0, %s196
      %s211 = sphi 0, %s197
      %s215 = sphi 0, %s215
      %s217 = sphi 0, %s215
      %s218 = sphi 0, %s217
      %s232 = sphi 0, %s218
      %s236 = sphi 0, %s236
      %s238 = sphi 0, %s236
      %s239 = sphi 0, %s238
      %s253 = sphi 0, %s239
      %s257 = sphi 0, %s257
      %s259 = sphi 0, %s257
      %s260 = sphi 0, %s259
      %s274 = sphi 0, %s260
      %s278 = sphi 0, %s278
      %s280 = sphi 0, %s278
      %s281 = sphi 0, %s280
      %s295 = sphi 0, %s281
      %s299 = sphi 0, %s299
      %s301 = sphi 0, %s299
      %s302 = sphi 0, %s301
      %s316 = sphi 0, %s302
      %s320 = sphi 0, %s320
      %s322 = sphi 0, %s320
      %s323 = sphi 0, %s322
      %s337 = sphi 0, %s323
      %s341 = sphi 0, %s341
      %s343 = sphi 0, %s341
      %s344 = sphi 0, %s343
      %s358 = sphi 0, %s344
      %s362 = sphi 0, %s362
      %s364 = sphi 0, %s362
      %s365 = sphi 0, %s364
      %s379 = sphi 0, %s365
      %s383 = sphi 0, %s383
      %s385 = sphi 0, %s383
      %s386 = sphi 0, %s385
      %s400 = sphi 0, %s386
      %s404 = sphi 0, %s404
      %s406 = sphi 0, %s404
      %s407 = sphi 0, %s406
      %s421 = sphi 0, %s407
      %s425 = sphi 0, %s425
      %s427 = sphi 0, %s425
      %s428 = sphi 0, %s427
      %s442 = sphi 0, %s428
      %s446 = sphi 0, %s446
      %s448 = sphi 0, %s446
      %s449 = sphi 0, %s448
      %s463 = sphi 0, %s449
      %s471 = sphi 0, %s473
      %s474 = sphi 0, %s471
      %s475 = sphi 0, %s474
      %s491 = sphi 0, %s475
    $region4: #{decoder_block.1} parent=1 // loop_header_branch
      %36 = sbr.rel (%p34) target = $region8
    $region5: #{decoder_block.1} parent=1 // loop_body
      %s38 = ssub.s32 %s33, 1
      %s39 = ssub.s32 %s33, 2
      %s46 = sadd.s32 1, %s41
      %p47 = scmp.ge.s32.totalorder %s46, 1
      %s48 = scalar_select %p47, 0, %s46
      %s49 = sadd.s32 1, %s40
      %s50 = scalar_select %p47, %s49, %s40
      %p51 = scmp.ge.s32.totalorder %s50, 2
      %s52 = scalar_select %p51, 0, %s50
      %s53 = ssub.s32 %s40, %s52
      %p54 = scmp.eq.s32.totalorder %s53, 0
      %s56 = sadd.s32 %s55, 1
      %s57 = scalar_select %p54, %s55, %s56
      %p60 = pneg %p54
      %p61 = scmp.eq.s32.totalorder %s33, 1
      %p62 = por %p60, %p61
      %p63 = scmp.ne.s32.totalorder %s55, %s58
      %p64 = scmp.eq.s32.totalorder %s33, 0
      %p65 = por %p63, %p64
      %p66 = scmp.ne.s32.totalorder %s55, %s58
      %p67 = scmp.eq.s32.totalorder %s38, 1
      %p68 = por %p66, %p67
      %p69 = scmp.ne.s32.totalorder %s58, %s59
      %p70 = scmp.eq.s32.totalorder %s38, 0
      %p71 = por %p69, %p70
      %p72 = scmp.ne.s32.totalorder %s58, %s59
      %p73 = scmp.eq.s32.totalorder %s39, 1
      %p74 = por %p72, %p73
      %p76 = scmp.ne.s32.totalorder %s59, %s75
      %p77 = scmp.eq.s32.totalorder %s39, 0
      %p78 = por %p76, %p77
      %s79 = ssub.s32 %s40, %s52
      %p80 = scmp.eq.s32.totalorder %s79, 0
      %s82 = sadd.s32 %s81, 1
      %s83 = scalar_select %p80, %s81, %s82
      %p86 = pneg %p80
      %p87 = scmp.eq.s32.totalorder %s33, 1
      %p88 = por %p86, %p87
      %p89 = scmp.ne.s32.totalorder %s81, %s84
      %p90 = scmp.eq.s32.totalorder %s33, 0
      %p91 = por %p89, %p90
      %p92 = scmp.ne.s32.totalorder %s81, %s84
      %p93 = scmp.eq.s32.totalorder %s38, 1
      %p94 = por %p92, %p93
      %p95 = scmp.ne.s32.totalorder %s84, %s85
      %p96 = scmp.eq.s32.totalorder %s38, 0
      %p97 = por %p95, %p96
      %p98 = scmp.ne.s32.totalorder %s84, %s85
      %p99 = scmp.eq.s32.totalorder %s39, 1
      %p100 = por %p98, %p99
      %p102 = scmp.ne.s32.totalorder %s85, %s101
      %p103 = scmp.eq.s32.totalorder %s39, 0
      %p104 = por %p102, %p103
      %s105 = ssub.s32 %s40, %s52
      %p106 = scmp.eq.s32.totalorder %s105, 0
      %s108 = sadd.s32 %s107, 1
      %s109 = scalar_select %p106, %s107, %s108
      %p112 = pneg %p106
      %p113 = scmp.eq.s32.totalorder %s33, 1
      %p114 = por %p112, %p113
      %p115 = scmp.ne.s32.totalorder %s107, %s110
      %p116 = scmp.eq.s32.totalorder %s33, 0
      %p117 = por %p115, %p116
      %p118 = scmp.ne.s32.totalorder %s107, %s110
      %p119 = scmp.eq.s32.totalorder %s38, 1
      %p120 = por %p118, %p119
      %p121 = scmp.ne.s32.totalorder %s110, %s111
      %p122 = scmp.eq.s32.totalorder %s38, 0
      %p123 = por %p121, %p122
      %p124 = scmp.ne.s32.totalorder %s110, %s111
      %p125 = scmp.eq.s32.totalorder %s39, 1
      %p126 = por %p124, %p125
      %p128 = scmp.ne.s32.totalorder %s111, %s127
      %p129 = scmp.eq.s32.totalorder %s39, 0
      %p130 = por %p128, %p129
      %s132 = sadd.s32 %s131, 1
      %p135 = scmp.eq.s32.totalorder %s33, 1
      %p136 = scmp.ne.s32.totalorder %s131, %s133
      %p137 = scmp.eq.s32.totalorder %s33, 0
      %p138 = por %p136, %p137
      %p139 = scmp.ne.s32.totalorder %s131, %s133
      %p140 = scmp.eq.s32.totalorder %s38, 1
      %p141 = por %p139, %p140
      %p142 = scmp.ne.s32.totalorder %s133, %s134
      %p143 = scmp.eq.s32.totalorder %s38, 0
      %p144 = por %p142, %p143
      %p145 = scmp.ne.s32.totalorder %s133, %s134
      %p146 = scmp.eq.s32.totalorder %s39, 1
      %p147 = por %p145, %p146
      %p149 = scmp.ne.s32.totalorder %s134, %s148
      %p150 = scmp.eq.s32.totalorder %s39, 0
      %p151 = por %p149, %p150
      %s153 = sadd.s32 %s152, 1
      %p156 = scmp.eq.s32.totalorder %s33, 1
      %p157 = scmp.ne.s32.totalorder %s152, %s154
      %p158 = scmp.eq.s32.totalorder %s33, 0
      %p159 = por %p157, %p158
      %p160 = scmp.ne.s32.totalorder %s152, %s154
      %p161 = scmp.eq.s32.totalorder %s38, 1
      %p162 = por %p160, %p161
      %p163 = scmp.ne.s32.totalorder %s154, %s155
      %p164 = scmp.eq.s32.totalorder %s38, 0
      %p165 = por %p163, %p164
      %p166 = scmp.ne.s32.totalorder %s154, %s155
      %p167 = scmp.eq.s32.totalorder %s39, 1
      %p168 = por %p166, %p167
      %p170 = scmp.ne.s32.totalorder %s155, %s169
      %p171 = scmp.eq.s32.totalorder %s39, 0
      %p172 = por %p170, %p171
      %s174 = sadd.s32 %s173, 1
      %p177 = scmp.eq.s32.totalorder %s33, 1
      %p178 = scmp.ne.s32.totalorder %s173, %s175
      %p179 = scmp.eq.s32.totalorder %s33, 0
      %p180 = por %p178, %p179
      %p181 = scmp.ne.s32.totalorder %s173, %s175
      %p182 = scmp.eq.s32.totalorder %s38, 1
      %p183 = por %p181, %p182
      %p184 = scmp.ne.s32.totalorder %s175, %s176
      %p185 = scmp.eq.s32.totalorder %s38, 0
      %p186 = por %p184, %p185
      %p187 = scmp.ne.s32.totalorder %s175, %s176
      %p188 = scmp.eq.s32.totalorder %s39, 1
      %p189 = por %p187, %p188
      %p191 = scmp.ne.s32.totalorder %s176, %s190
      %p192 = scmp.eq.s32.totalorder %s39, 0
      %p193 = por %p191, %p192
      %s195 = sadd.s32 %s194, 1
      %p198 = scmp.eq.s32.totalorder %s33, 1
      %p199 = scmp.ne.s32.totalorder %s194, %s196
      %p200 = scmp.eq.s32.totalorder %s33, 0
      %p201 = por %p199, %p200
      %p202 = scmp.ne.s32.totalorder %s194, %s196
      %p203 = scmp.eq.s32.totalorder %s38, 1
      %p204 = por %p202, %p203
      %p205 = scmp.ne.s32.totalorder %s196, %s197
      %p206 = scmp.eq.s32.totalorder %s38, 0
      %p207 = por %p205, %p206
      %p208 = scmp.ne.s32.totalorder %s196, %s197
      %p209 = scmp.eq.s32.totalorder %s39, 1
      %p210 = por %p208, %p209
      %p212 = scmp.ne.s32.totalorder %s197, %s211
      %p213 = scmp.eq.s32.totalorder %s39, 0
      %p214 = por %p212, %p213
      %s216 = sadd.s32 %s215, 1
      %p219 = scmp.eq.s32.totalorder %s33, 1
      %p220 = scmp.ne.s32.totalorder %s215, %s217
      %p221 = scmp.eq.s32.totalorder %s33, 0
      %p222 = por %p220, %p221
      %p223 = scmp.ne.s32.totalorder %s215, %s217
      %p224 = scmp.eq.s32.totalorder %s38, 1
      %p225 = por %p223, %p224
      %p226 = scmp.ne.s32.totalorder %s217, %s218
      %p227 = scmp.eq.s32.totalorder %s38, 0
      %p228 = por %p226, %p227
      %p229 = scmp.ne.s32.totalorder %s217, %s218
      %p230 = scmp.eq.s32.totalorder %s39, 1
      %p231 = por %p229, %p230
      %p233 = scmp.ne.s32.totalorder %s218, %s232
      %p234 = scmp.eq.s32.totalorder %s39, 0
      %p235 = por %p233, %p234
      %s237 = sadd.s32 %s236, 1
      %p240 = scmp.eq.s32.totalorder %s33, 1
      %p241 = scmp.ne.s32.totalorder %s236, %s238
      %p242 = scmp.eq.s32.totalorder %s33, 0
      %p243 = por %p241, %p242
      %p244 = scmp.ne.s32.totalorder %s236, %s238
      %p245 = scmp.eq.s32.totalorder %s38, 1
      %p246 = por %p244, %p245
      %p247 = scmp.ne.s32.totalorder %s238, %s239
      %p248 = scmp.eq.s32.totalorder %s38, 0
      %p249 = por %p247, %p248
      %p250 = scmp.ne.s32.totalorder %s238, %s239
      %p251 = scmp.eq.s32.totalorder %s39, 1
      %p252 = por %p250, %p251
      %p254 = scmp.ne.s32.totalorder %s239, %s253
      %p255 = scmp.eq.s32.totalorder %s39, 0
      %p256 = por %p254, %p255
      %s258 = sadd.s32 %s257, 1
      %p261 = scmp.eq.s32.totalorder %s33, 1
      %p262 = scmp.ne.s32.totalorder %s257, %s259
      %p263 = scmp.eq.s32.totalorder %s33, 0
      %p264 = por %p262, %p263
      %p265 = scmp.ne.s32.totalorder %s257, %s259
      %p266 = scmp.eq.s32.totalorder %s38, 1
      %p267 = por %p265, %p266
      %p268 = scmp.ne.s32.totalorder %s259, %s260
      %p269 = scmp.eq.s32.totalorder %s38, 0
      %p270 = por %p268, %p269
      %p271 = scmp.ne.s32.totalorder %s259, %s260
      %p272 = scmp.eq.s32.totalorder %s39, 1
      %p273 = por %p271, %p272
      %p275 = scmp.ne.s32.totalorder %s260, %s274
      %p276 = scmp.eq.s32.totalorder %s39, 0
      %p277 = por %p275, %p276
      %s279 = sadd.s32 %s278, 1
      %p282 = scmp.eq.s32.totalorder %s33, 1
      %p283 = scmp.ne.s32.totalorder %s278, %s280
      %p284 = scmp.eq.s32.totalorder %s33, 0
      %p285 = por %p283, %p284
      %p286 = scmp.ne.s32.totalorder %s278, %s280
      %p287 = scmp.eq.s32.totalorder %s38, 1
      %p288 = por %p286, %p287
      %p289 = scmp.ne.s32.totalorder %s280, %s281
      %p290 = scmp.eq.s32.totalorder %s38, 0
      %p291 = por %p289, %p290
      %p292 = scmp.ne.s32.totalorder %s280, %s281
      %p293 = scmp.eq.s32.totalorder %s39, 1
      %p294 = por %p292, %p293
      %p296 = scmp.ne.s32.totalorder %s281, %s295
      %p297 = scmp.eq.s32.totalorder %s39, 0
      %p298 = por %p296, %p297
      %s300 = sadd.s32 %s299, 1
      %p303 = scmp.eq.s32.totalorder %s33, 1
      %p304 = scmp.ne.s32.totalorder %s299, %s301
      %p305 = scmp.eq.s32.totalorder %s33, 0
      %p306 = por %p304, %p305
      %p307 = scmp.ne.s32.totalorder %s299, %s301
      %p308 = scmp.eq.s32.totalorder %s38, 1
      %p309 = por %p307, %p308
      %p310 = scmp.ne.s32.totalorder %s301, %s302
      %p311 = scmp.eq.s32.totalorder %s38, 0
      %p312 = por %p310, %p311
      %p313 = scmp.ne.s32.totalorder %s301, %s302
      %p314 = scmp.eq.s32.totalorder %s39, 1
      %p315 = por %p313, %p314
      %p317 = scmp.ne.s32.totalorder %s302, %s316
      %p318 = scmp.eq.s32.totalorder %s39, 0
      %p319 = por %p317, %p318
      %s321 = sadd.s32 %s320, 1
      %p324 = scmp.eq.s32.totalorder %s33, 1
      %p325 = scmp.ne.s32.totalorder %s320, %s322
      %p326 = scmp.eq.s32.totalorder %s33, 0
      %p327 = por %p325, %p326
      %p328 = scmp.ne.s32.totalorder %s320, %s322
      %p329 = scmp.eq.s32.totalorder %s38, 1
      %p330 = por %p328, %p329
      %p331 = scmp.ne.s32.totalorder %s322, %s323
      %p332 = scmp.eq.s32.totalorder %s38, 0
      %p333 = por %p331, %p332
      %p334 = scmp.ne.s32.totalorder %s322, %s323
      %p335 = scmp.eq.s32.totalorder %s39, 1
      %p336 = por %p334, %p335
      %p338 = scmp.ne.s32.totalorder %s323, %s337
      %p339 = scmp.eq.s32.totalorder %s39, 0
      %p340 = por %p338, %p339
      %s342 = sadd.s32 %s341, 1
      %p345 = scmp.eq.s32.totalorder %s33, 1
      %p346 = scmp.ne.s32.totalorder %s341, %s343
      %p347 = scmp.eq.s32.totalorder %s33, 0
      %p348 = por %p346, %p347
      %p349 = scmp.ne.s32.totalorder %s341, %s343
      %p350 = scmp.eq.s32.totalorder %s38, 1
      %p351 = por %p349, %p350
      %p352 = scmp.ne.s32.totalorder %s343, %s344
      %p353 = scmp.eq.s32.totalorder %s38, 0
      %p354 = por %p352, %p353
      %p355 = scmp.ne.s32.totalorder %s343, %s344
      %p356 = scmp.eq.s32.totalorder %s39, 1
      %p357 = por %p355, %p356
      %p359 = scmp.ne.s32.totalorder %s344, %s358
      %p360 = scmp.eq.s32.totalorder %s39, 0
      %p361 = por %p359, %p360
      %s363 = sadd.s32 %s362, 1
      %p366 = scmp.eq.s32.totalorder %s33, 1
      %p367 = scmp.ne.s32.totalorder %s362, %s364
      %p368 = scmp.eq.s32.totalorder %s33, 0
      %p369 = por %p367, %p368
      %p370 = scmp.ne.s32.totalorder %s362, %s364
      %p371 = scmp.eq.s32.totalorder %s38, 1
      %p372 = por %p370, %p371
      %p373 = scmp.ne.s32.totalorder %s364, %s365
      %p374 = scmp.eq.s32.totalorder %s38, 0
      %p375 = por %p373, %p374
      %p376 = scmp.ne.s32.totalorder %s364, %s365
      %p377 = scmp.eq.s32.totalorder %s39, 1
      %p378 = por %p376, %p377
      %p380 = scmp.ne.s32.totalorder %s365, %s379
      %p381 = scmp.eq.s32.totalorder %s39, 0
      %p382 = por %p380, %p381
      %s384 = sadd.s32 %s383, 1
      %p387 = scmp.eq.s32.totalorder %s33, 1
      %p388 = scmp.ne.s32.totalorder %s383, %s385
      %p389 = scmp.eq.s32.totalorder %s33, 0
      %p390 = por %p388, %p389
      %p391 = scmp.ne.s32.totalorder %s383, %s385
      %p392 = scmp.eq.s32.totalorder %s38, 1
      %p393 = por %p391, %p392
      %p394 = scmp.ne.s32.totalorder %s385, %s386
      %p395 = scmp.eq.s32.totalorder %s38, 0
      %p396 = por %p394, %p395
      %p397 = scmp.ne.s32.totalorder %s385, %s386
      %p398 = scmp.eq.s32.totalorder %s39, 1
      %p399 = por %p397, %p398
      %p401 = scmp.ne.s32.totalorder %s386, %s400
      %p402 = scmp.eq.s32.totalorder %s39, 0
      %p403 = por %p401, %p402
      %s405 = sadd.s32 %s404, 1
      %p408 = scmp.eq.s32.totalorder %s33, 1
      %p409 = scmp.ne.s32.totalorder %s404, %s406
      %p410 = scmp.eq.s32.totalorder %s33, 0
      %p411 = por %p409, %p410
      %p412 = scmp.ne.s32.totalorder %s404, %s406
      %p413 = scmp.eq.s32.totalorder %s38, 1
      %p414 = por %p412, %p413
      %p415 = scmp.ne.s32.totalorder %s406, %s407
      %p416 = scmp.eq.s32.totalorder %s38, 0
      %p417 = por %p415, %p416
      %p418 = scmp.ne.s32.totalorder %s406, %s407
      %p419 = scmp.eq.s32.totalorder %s39, 1
      %p420 = por %p418, %p419
      %p422 = scmp.ne.s32.totalorder %s407, %s421
      %p423 = scmp.eq.s32.totalorder %s39, 0
      %p424 = por %p422, %p423
      %s426 = sadd.s32 %s425, 1
      %p429 = scmp.eq.s32.totalorder %s33, 1
      %p430 = scmp.ne.s32.totalorder %s425, %s427
      %p431 = scmp.eq.s32.totalorder %s33, 0
      %p432 = por %p430, %p431
      %p433 = scmp.ne.s32.totalorder %s425, %s427
      %p434 = scmp.eq.s32.totalorder %s38, 1
      %p435 = por %p433, %p434
      %p436 = scmp.ne.s32.totalorder %s427, %s428
      %p437 = scmp.eq.s32.totalorder %s38, 0
      %p438 = por %p436, %p437
      %p439 = scmp.ne.s32.totalorder %s427, %s428
      %p440 = scmp.eq.s32.totalorder %s39, 1
      %p441 = por %p439, %p440
      %p443 = scmp.ne.s32.totalorder %s428, %s442
      %p444 = scmp.eq.s32.totalorder %s39, 0
      %p445 = por %p443, %p444
      %s447 = sadd.s32 %s446, 1
      %p450 = scmp.eq.s32.totalorder %s33, 1
      %p451 = scmp.ne.s32.totalorder %s446, %s448
      %p452 = scmp.eq.s32.totalorder %s33, 0
      %p453 = por %p451, %p452
      %p454 = scmp.ne.s32.totalorder %s446, %s448
      %p455 = scmp.eq.s32.totalorder %s38, 1
      %p456 = por %p454, %p455
      %p457 = scmp.ne.s32.totalorder %s448, %s449
      %p458 = scmp.eq.s32.totalorder %s38, 0
      %p459 = por %p457, %p458
      %p460 = scmp.ne.s32.totalorder %s448, %s449
      %p461 = scmp.eq.s32.totalorder %s39, 1
      %p462 = por %p460, %p461
      %p464 = scmp.ne.s32.totalorder %s449, %s463
      %p465 = scmp.eq.s32.totalorder %s39, 0
      %p466 = por %p464, %p465
      %s467 = ssub.s32 %s40, %s52
      %s468 = ssub.s32 %s41, %s48
      %s469 = sor.u32 %s467, %s468
      %p470 = scmp.eq.s32.totalorder %s469, 0
      %s472 = sadd.s32 %s471, 1
      %s473 = scalar_select %p470, %s471, %s472
      %p476 = pneg %p470
      %p477 = scmp.eq.s32.totalorder %s33, 1
      %p478 = por %p476, %p477
      %p479 = scmp.ne.s32.totalorder %s471, %s474
      %p480 = scmp.eq.s32.totalorder %s33, 0
      %p481 = por %p479, %p480
      %p482 = scmp.ne.s32.totalorder %s471, %s474
      %p483 = scmp.eq.s32.totalorder %s38, 1
      %p484 = por %p482, %p483
      %p485 = scmp.ne.s32.totalorder %s474, %s475
      %p486 = scmp.eq.s32.totalorder %s38, 0
      %p487 = por %p485, %p486
      %p488 = scmp.ne.s32.totalorder %s474, %s475
      %p489 = scmp.eq.s32.totalorder %s39, 1
      %p490 = por %p488, %p489
      %p492 = scmp.ne.s32.totalorder %s475, %s491
      %p493 = scmp.eq.s32.totalorder %s39, 0
      %p494 = por %p492, %p493
      %p495 = scmp.le.s32.totalorder 1, %s33
      %p496 = scmp.lt.s32.totalorder %s33, 3
      %p497 = pnand %p495, %p496
      %p498 = pneg %p497
      // Predicated region
      $region9: #{decoder_block.1} parent=5 // pred_check
        _
      $region10: #{decoder_block.1} parent=5 // pred_check_branch
        %500 = sbr.rel (%p497) target = $region12
      $region11: #{decoder_block.1} parent=5 // pred_region
        %s501 = ssub.s32 %s33, 1
        // Predicated region
        $region13: #{decoder_block.1} parent=11 // pred_check
          %p502 = pneg %p144
        $region14: #{decoder_block.1} parent=11 // pred_check_branch
          %504 = sbr.rel (%p502) target = $region16
        $region15: #{decoder_block.1} parent=11 // pred_region
          _
        $region16: #{decoder_block.1} parent=11 // pred_fallthru
          _
        // Predicated region
        $region17: #{decoder_block.1} parent=11 // pred_check
          %p505 = pneg %p165
        $region18: #{decoder_block.1} parent=11 // pred_check_branch
          %507 = sbr.rel (%p505) target = $region20
        $region19: #{decoder_block.1} parent=11 // pred_region
          _
        $region20: #{decoder_block.1} parent=11 // pred_fallthru
          _
        // Predicated region
        $region21: #{decoder_block.1} parent=11 // pred_check
          %p508 = pneg %p186
        $region22: #{decoder_block.1} parent=11 // pred_check_branch
          %510 = sbr.rel (%p508) target = $region24
        $region23: #{decoder_block.1} parent=11 // pred_region
          _
        $region24: #{decoder_block.1} parent=11 // pred_fallthru
          _
        // Predicated region
        $region25: #{decoder_block.1} parent=11 // pred_check
          %p511 = pneg %p207
        $region26: #{decoder_block.1} parent=11 // pred_check_branch
          %513 = sbr.rel (%p511) target = $region28
        $region27: #{decoder_block.1} parent=11 // pred_region
          _
        $region28: #{decoder_block.1} parent=11 // pred_fallthru
          _
        // Predicated region
        $region29: #{decoder_block.1} parent=11 // pred_check
          %p514 = pneg %p228
        $region30: #{decoder_block.1} parent=11 // pred_check_branch
          %516 = sbr.rel (%p514) target = $region32
        $region31: #{decoder_block.1} parent=11 // pred_region
          _
        $region32: #{decoder_block.1} parent=11 // pred_fallthru
          _
        // Predicated region
        $region33: #{decoder_block.1} parent=11 // pred_check
          %p517 = pneg %p249
        $region34: #{decoder_block.1} parent=11 // pred_check_branch
          %519 = sbr.rel (%p517) target = $region36
        $region35: #{decoder_block.1} parent=11 // pred_region
          _
        $region36: #{decoder_block.1} parent=11 // pred_fallthru
          _
        // Predicated region
        $region37: #{decoder_block.1} parent=11 // pred_check
          %p520 = pneg %p270
        $region38: #{decoder_block.1} parent=11 // pred_check_branch
          %522 = sbr.rel (%p520) target = $region40
        $region39: #{decoder_block.1} parent=11 // pred_region
          %s524 = ssub.s32 256, 256
          %525 = vsyncadd [#allocation5], %s524
          %s526 = sshll.u32 [#allocation4], 4
          %s527 = int_to_ptr.vmem [resolvable:$true] %s526
          %532 = dma.hbm_to_vmem [thread:$0]  %s9, 256, %s527, [#allocation5], 64, 64, 4
        $region40: #{decoder_block.1} parent=11 // pred_fallthru
          _
        // Predicated region
        $region41: #{decoder_block.1} parent=11 // pred_check
          %p533 = pneg %p291
        $region42: #{decoder_block.1} parent=11 // pred_check_branch
          %535 = sbr.rel (%p533) target = $region44
        $region43: #{decoder_block.1} parent=11 // pred_region
          %s537 = ssub.s32 16, 16
          %538 = vsyncadd [#allocation8], %s537
          %s540 = sshll.u32 [#allocation7], 4
          %s541 = int_to_ptr.vmem [resolvable:$true] %s540
          %543 = dma.hbm_to_vmem [thread:$0]  %s10, 16, %s541, [#allocation8]
        $region44: #{decoder_block.1} parent=11 // pred_fallthru
          _
        // Predicated region
        $region45: #{decoder_block.1} parent=11 // pred_check
          %p544 = pneg %p312
        $region46: #{decoder_block.1} parent=11 // pred_check_branch
          %546 = sbr.rel (%p544) target = $region48
        $region47: #{decoder_block.1} parent=11 // pred_region
          %s548 = ssub.s32 256, 256
          %549 = vsyncadd [#allocation8], %s548
          %s550 = sshll.u32 [#allocation9], 4
          %s551 = int_to_ptr.vmem [resolvable:$true] %s550
          %556 = dma.hbm_to_vmem [thread:$0]  %s11, 256, %s551, [#allocation8], 64, 64, 4
        $region48: #{decoder_block.1} parent=11 // pred_fallthru
          _
        // Predicated region
        $region49: #{decoder_block.1} parent=11 // pred_check
          %p557 = pneg %p333
        $region50: #{decoder_block.1} parent=11 // pred_check_branch
          %559 = sbr.rel (%p557) target = $region52
        $region51: #{decoder_block.1} parent=11 // pred_region
          %s561 = ssub.s32 16, 16
          %562 = vsyncadd [#allocation11], %s561
          %s564 = sshll.u32 [#allocation10], 4
          %s565 = int_to_ptr.vmem [resolvable:$true] %s564
          %567 = dma.hbm_to_vmem [thread:$0]  %s12, 16, %s565, [#allocation11]
        $region52: #{decoder_block.1} parent=11 // pred_fallthru
          _
        // Predicated region
        $region53: #{decoder_block.1} parent=11 // pred_check
          %p568 = pneg %p354
        $region54: #{decoder_block.1} parent=11 // pred_check_branch
          %570 = sbr.rel (%p568) target = $region56
        $region55: #{decoder_block.1} parent=11 // pred_region
          %s572 = ssub.s32 256, 256
          %573 = vsyncadd [#allocation11], %s572
          %s574 = sshll.u32 [#allocation12], 4
          %s575 = int_to_ptr.vmem [resolvable:$true] %s574
          %580 = dma.hbm_to_vmem [thread:$0]  %s13, 256, %s575, [#allocation11], 64, 64, 4
        $region56: #{decoder_block.1} parent=11 // pred_fallthru
          _
        // Predicated region
        $region57: #{decoder_block.1} parent=11 // pred_check
          %p581 = pneg %p375
        $region58: #{decoder_block.1} parent=11 // pred_check_branch
          %583 = sbr.rel (%p581) target = $region60
        $region59: #{decoder_block.1} parent=11 // pred_region
          %s585 = ssub.s32 16, 16
          %586 = vsyncadd [#allocation14], %s585
          %s588 = sshll.u32 [#allocation13], 4
          %s589 = int_to_ptr.vmem [resolvable:$true] %s588
          %591 = dma.hbm_to_vmem [thread:$0]  %s14, 16, %s589, [#allocation14]
        $region60: #{decoder_block.1} parent=11 // pred_fallthru
          _
        // Predicated region
        $region61: #{decoder_block.1} parent=11 // pred_check
          %p592 = pneg %p396
        $region62: #{decoder_block.1} parent=11 // pred_check_branch
          %594 = sbr.rel (%p592) target = $region64
        $region63: #{decoder_block.1} parent=11 // pred_region
          %s596 = ssub.s32 256, 256
          %597 = vsyncadd [#allocation14], %s596
          %s598 = sshll.u32 [#allocation15], 4
          %s599 = int_to_ptr.vmem [resolvable:$true] %s598
          %604 = dma.hbm_to_vmem [thread:$0]  %s15, 256, %s599, [#allocation14], 64, 64, 4
        $region64: #{decoder_block.1} parent=11 // pred_fallthru
          _
        // Predicated region
        $region65: #{decoder_block.1} parent=11 // pred_check
          %p605 = pneg %p417
        $region66: #{decoder_block.1} parent=11 // pred_check_branch
          %607 = sbr.rel (%p605) target = $region68
        $region67: #{decoder_block.1} parent=11 // pred_region
          %s609 = ssub.s32 16, 16
          %610 = vsyncadd [#allocation17], %s609
          %s612 = sshll.u32 [#allocation16], 4
          %s613 = int_to_ptr.vmem [resolvable:$true] %s612
          %615 = dma.hbm_to_vmem [thread:$0]  %s16, 16, %s613, [#allocation17]
        $region68: #{decoder_block.1} parent=11 // pred_fallthru
          _
        // Predicated region
        $region69: #{decoder_block.1} parent=11 // pred_check
          %p616 = pneg %p438
        $region70: #{decoder_block.1} parent=11 // pred_check_branch
          %618 = sbr.rel (%p616) target = $region72
        $region71: #{decoder_block.1} parent=11 // pred_region
          _
        $region72: #{decoder_block.1} parent=11 // pred_fallthru
          _
        // Predicated region
        $region73: #{decoder_block.1} parent=11 // pred_check
          %p619 = pneg %p459
        $region74: #{decoder_block.1} parent=11 // pred_check_branch
          %621 = sbr.rel (%p619) target = $region76
        $region75: #{decoder_block.1} parent=11 // pred_region
          %s623 = ssub.s32 16, 16
          %624 = vsyncadd [#allocation17], %s623
          %s626 = sshll.u32 [#allocation18], 4
          %s627 = int_to_ptr.vmem [resolvable:$true] %s626
          %629 = dma.hbm_to_vmem [thread:$0]  %s18, 16, %s627, [#allocation17]
        $region76: #{decoder_block.1} parent=11 // pred_fallthru
          _
      $region12: #{decoder_block.1} parent=5 // pred_fallthru
        _
      %p630 = scmp.lt.s32.totalorder %s33, 2
      // Predicated region
      $region77: #{decoder_block.1} parent=5 // pred_check
        %p631 = pneg %p630
      $region78: #{decoder_block.1} parent=5 // pred_check_branch
        %633 = sbr.rel (%p631) target = $region80
      $region79: #{decoder_block.1} parent=5 // pred_region
        // Predicated region
        $region81: #{decoder_block.1} parent=79 // pred_check
          %p634 = pneg %p65
        $region82: #{decoder_block.1} parent=79 // pred_check_branch
          %636 = sbr.rel (%p634) target = $region84
        $region83: #{decoder_block.1} parent=79 // pred_region
          %p637 = scmp.lt.s32.totalorder %s40, 1
          %s638 = scalar_select %p637, %s40, 1
          %s639 = smul.addr %s638, 8
          %s640 = scalar_lea.vmem %s0, %s639
        $region84: #{decoder_block.1} parent=79 // pred_fallthru
          _
        // Predicated region
        $region85: #{decoder_block.1} parent=79 // pred_check
          %p641 = pneg %p91
        $region86: #{decoder_block.1} parent=79 // pred_check_branch
          %643 = sbr.rel (%p641) target = $region88
        $region87: #{decoder_block.1} parent=79 // pred_region
          %p644 = scmp.lt.s32.totalorder %s40, 1
          %s645 = scalar_select %p644, %s40, 1
          %s646 = smul.addr %s645, 8
          %s647 = scalar_lea.vmem %s1, %s646
        $region88: #{decoder_block.1} parent=79 // pred_fallthru
          _
        // Predicated region
        $region89: #{decoder_block.1} parent=79 // pred_check
          %p648 = pneg %p117
        $region90: #{decoder_block.1} parent=79 // pred_check_branch
          %650 = sbr.rel (%p648) target = $region92
        $region91: #{decoder_block.1} parent=79 // pred_region
          %p651 = scmp.lt.s32.totalorder %s40, 1
          %s652 = scalar_select %p651, %s40, 1
          %s653 = scalar_lea.vmem %s2, %s652
        $region92: #{decoder_block.1} parent=79 // pred_fallthru
          _
      $region80: #{decoder_block.1} parent=5 // pred_fallthru
        _
      %p654 = scmp.le.s32.totalorder 1, %s33
      %p655 = scmp.lt.s32.totalorder %s33, 3
      %p656 = pnand %p654, %p655
      %p657 = pneg %p656
      // Predicated region
      $region93: #{decoder_block.1} parent=5 // pred_check
        _
      $region94: #{decoder_block.1} parent=5 // pred_check_branch
        %659 = sbr.rel (%p656) target = $region96
      $region95: #{decoder_block.1} parent=5 // pred_region
        %s660 = ssub.s32 %s33, 1
        // Predicated region
        $region97: #{decoder_block.1} parent=95 // pred_check
          %p661 = pneg %p270
        $region98: #{decoder_block.1} parent=95 // pred_check_branch
          %663 = sbr.rel (%p661) target = $region100
        $region99: #{decoder_block.1} parent=95 // pred_region
          %664 = dma.done [#allocation5], 256
        $region100: #{decoder_block.1} parent=95 // pred_fallthru
          _
        // Predicated region
        $region101: #{decoder_block.1} parent=95 // pred_check
          %p665 = pneg %p291
        $region102: #{decoder_block.1} parent=95 // pred_check_branch
          %667 = sbr.rel (%p665) target = $region104
        $region103: #{decoder_block.1} parent=95 // pred_region
          %668 = dma.done [#allocation8], 16
        $region104: #{decoder_block.1} parent=95 // pred_fallthru
          _
        // Predicated region
        $region105: #{decoder_block.1} parent=95 // pred_check
          %p669 = pneg %p312
        $region106: #{decoder_block.1} parent=95 // pred_check_branch
          %671 = sbr.rel (%p669) target = $region108
        $region107: #{decoder_block.1} parent=95 // pred_region
          %672 = dma.done [#allocation8], 256
        $region108: #{decoder_block.1} parent=95 // pred_fallthru
          _
        // Predicated region
        $region109: #{decoder_block.1} parent=95 // pred_check
          %p673 = pneg %p333
        $region110: #{decoder_block.1} parent=95 // pred_check_branch
          %675 = sbr.rel (%p673) target = $region112
        $region111: #{decoder_block.1} parent=95 // pred_region
          %676 = dma.done [#allocation11], 16
        $region112: #{decoder_block.1} parent=95 // pred_fallthru
          _
        // Predicated region
        $region113: #{decoder_block.1} parent=95 // pred_check
          %p677 = pneg %p354
        $region114: #{decoder_block.1} parent=95 // pred_check_branch
          %679 = sbr.rel (%p677) target = $region116
        $region115: #{decoder_block.1} parent=95 // pred_region
          %680 = dma.done [#allocation11], 256
        $region116: #{decoder_block.1} parent=95 // pred_fallthru
          _
        // Predicated region
        $region117: #{decoder_block.1} parent=95 // pred_check
          %p681 = pneg %p375
        $region118: #{decoder_block.1} parent=95 // pred_check_branch
          %683 = sbr.rel (%p681) target = $region120
        $region119: #{decoder_block.1} parent=95 // pred_region
          %684 = dma.done [#allocation14], 16
        $region120: #{decoder_block.1} parent=95 // pred_fallthru
          _
        // Predicated region
        $region121: #{decoder_block.1} parent=95 // pred_check
          %p685 = pneg %p396
        $region122: #{decoder_block.1} parent=95 // pred_check_branch
          %687 = sbr.rel (%p685) target = $region124
        $region123: #{decoder_block.1} parent=95 // pred_region
          %688 = dma.done [#allocation14], 256
        $region124: #{decoder_block.1} parent=95 // pred_fallthru
          _
        // Predicated region
        $region125: #{decoder_block.1} parent=95 // pred_check
          %p689 = pneg %p417
        $region126: #{decoder_block.1} parent=95 // pred_check_branch
          %691 = sbr.rel (%p689) target = $region128
        $region127: #{decoder_block.1} parent=95 // pred_region
          %692 = dma.done [#allocation17], 16
        $region128: #{decoder_block.1} parent=95 // pred_fallthru
          _
        // Predicated region
        $region129: #{decoder_block.1} parent=95 // pred_check
          %p693 = pneg %p459
        $region130: #{decoder_block.1} parent=95 // pred_check_branch
          %695 = sbr.rel (%p693) target = $region132
        $region131: #{decoder_block.1} parent=95 // pred_region
          %696 = dma.done [#allocation17], 16
        $region132: #{decoder_block.1} parent=95 // pred_fallthru
          _
        %p697 = scmp.lt.s32.totalorder %s42, 1
        %s698 = scalar_select %p697, %s42, 1
        %s699 = smul.addr %s698, 8
        %s700 = scalar_lea.vmem %s0, %s699
        %p701 = pneg %p71
        %p702 = pneg %p68
        %p703 = scmp.lt.s32.totalorder %s42, 1
        %s704 = scalar_select %p703, %s42, 1
        %s705 = smul.addr %s704, 8
        %s706 = scalar_lea.vmem %s1, %s705
        %p707 = pneg %p97
        %p708 = pneg %p94
        %p709 = scmp.lt.s32.totalorder %s42, 1
        %s710 = scalar_select %p709, %s42, 1
        %s711 = scalar_lea.vmem %s2, %s710
        %p712 = pneg %p123
        %p713 = pneg %p120
        %p714 = pneg %p144
        %p715 = pneg %p141
        %p716 = pneg %p165
        %p717 = pneg %p162
        %p718 = pneg %p186
        %p719 = pneg %p183
        %p720 = pneg %p207
        %p721 = pneg %p204
        %p722 = pneg %p228
        %p723 = pneg %p225
        %p724 = pneg %p249
        %p725 = pneg %p246
        %p726 = pneg %p270
        %p727 = pneg %p267
        %p728 = pneg %p291
        %p729 = pneg %p288
        %p730 = pneg %p312
        %p731 = pneg %p309
        %p732 = pneg %p333
        %p733 = pneg %p330
        %p734 = pneg %p354
        %p735 = pneg %p351
        %p736 = pneg %p375
        %p737 = pneg %p372
        %p738 = pneg %p396
        %p739 = pneg %p393
        %p740 = pneg %p417
        %p741 = pneg %p414
        %p742 = pneg %p438
        %p743 = pneg %p435
        %p744 = pneg %p459
        %p745 = pneg %p456
        %p746 = pneg %p487
        %p747 = pneg %p484
        %s748 = sand.u32 %s474, 1
        %s749 = scalar_lea.sflag [#allocation6], %s748
        %s750 = sand.u32 %s474, 1
        %s751 = smul.addr %s750, 8
        %s752 = scalar_lea.vmem [#allocation19], %s751
        %p753 = scmp.lt.s32.totalorder %s42, 1
        %s754 = scalar_select %p753, %s42, 1
        %s755 = smul.addr %s754, 8
        %s756 = scalar_lea.vmem %s0, %s755
        %p757 = scmp.lt.s32.totalorder %s42, 1
        %s758 = scalar_select %p757, %s42, 1
        %s759 = smul.addr %s758, 8
        %s760 = scalar_lea.vmem %s1, %s759
        %p761 = scmp.lt.s32.totalorder %s42, 1
        %s762 = scalar_select %p761, %s42, 1
        %s763 = scalar_lea.vmem %s2, %s762
        %s765 = smul.u32 %s43, 8
        %v766 = vld [vmem:[%s3] sm:$0x7]
        %v767 = vld [vmem:[%s4] sm:$0x7]
        %p768 = scmp.eq.s32.totalorder %s43, 0
        // Predicated region
        $region133: #{decoder_block.1} parent=95 // pred_check
          %p769 = pneg %p768
        $region134: #{decoder_block.1} parent=95 // pred_check_branch
          %771 = sbr.rel (%p769) target = $region136
        $region135: #{decoder_block.1} parent=95 // pred_region
          %v772 = vld [vmem:[%s756] sm:$0xff]
          %vm773 = vcmask 261120
          %v774 = vsel %vm773, %v772, 0.0
          %775 = vadd.xlane.f32.xlu0 %v774
          %v776 = vpop.xlane.xlu0 %775
          %v777 = vrcp.pop 32.0
          %v778 = vmul.f32 %v776, %v777
          %v779 = vsub.f32 %v772, %v778
          %v780 = vmul.f32 %v779, %v779
          %v781 = vsel %vm773, %v780, 0.0
          %782 = vadd.xlane.f32.xlu0 %v781
          %v783 = vpop.xlane.xlu0 %782
          %v784 = vmul.f32 %v783, %v777
          %v785 = vadd.f32 %v784, 1e-05
          %v786 = vrsqrt.pop %v785
          %v787 = vmul.f32 %v779, %v786
          %v788 = vlaneseq
          %v789 = vshrl.u32 %v788, 7
          %v790 = vsub.s32 0, %v789
          %v791 = vrot.slane %v766, %v790
          %v792 = vmul.f32 %v787, %v791
          %v793 = vlaneseq
          %v794 = vshrl.u32 %v793, 7
          %v795 = vsub.s32 0, %v794
          %v796 = vrot.slane %v767, %v795
          %v797 = vadd.f32 %v792, %v796
          %v798 = vpack.c.bf16 %v797, %v797
          %v799 = vld [vmem:[%s5] sm:$0xf]
          %v800 = vld [vmem:[%s5 + $0x4] sm:$0xf]
          %v801 = vld [vmem:[%s5 + $0x8] sm:$0xf]
          %v802 = vld [vmem:[%s5 + $0xc] sm:$0xf]
          %v803 = vld [vmem:[%s6] sm:$0x1]
          %v805 = vlaneseq
          %v806 = vshrl.u32 %v805, 7
          %v807 = vsub.s32 0, %v806
          %v808 = vrot.slane %v803, %v807
          %v814 = vunpack.c.l.b16 %v799
          %v815 = vunpack.c.l.b16 %v800
          %v816 = vunpack.c.l.b16 %v801
          %v817 = vunpack.c.l.b16 %v802
          %v818 = vpack.c.b16 %v815, %v814
          %v819 = vpack.c.b16 %v817, %v816
          %v823 = vsel %vm773, %v798, 0
          %825 = vmatprep.subr.bf16.mxu0 0
          %826 = vmatpush1.bf16.msra.mxu0 %v818
          %827 = vmatprep.subr.bf16.mxu0 0
          %828 = vmatpush1.bf16.msra.mxu0 %v819
          %829 = vmatprep.subr.bf16.mxu0 0
          %830 = vmatpush1.bf16.msra.mxu0 0
          %831 = vmatprep.subr.bf16.mxu0 0
          %832 = vmatpush1.bf16.msra.mxu0 0
          %833 = vmatprep.subr.bf16.mxu0 0
          %834 = vmatpush1.bf16.msra.mxu0 0
          %835 = vmatprep.subr.bf16.mxu0 0
          %836 = vmatpush1.bf16.msra.mxu0 0
          %837 = vmatprep.subr.bf16.mxu0 0
          %838 = vmatpush1.bf16.msra.mxu0 0
          %839 = vmatprep.subr.bf16.mxu0 0
          %840 = vmatpush1.bf16.msra.mxu0 0
          %841 = vmatprep.subr.bf16.mxu0 0
          %842 = vmatpush1.bf16.msra.mxu0 0
          %843 = vmatprep.subr.bf16.mxu0 0
          %844 = vmatpush1.bf16.msra.mxu0 0
          %845 = vmatprep.subr.bf16.mxu0 0
          %846 = vmatpush1.bf16.msra.mxu0 0
          %847 = vmatprep.subr.bf16.mxu0 0
          %848 = vmatpush1.bf16.msra.mxu0 0
          %849 = vmatprep.subr.bf16.mxu0 0
          %850 = vmatpush1.bf16.msra.mxu0 0
          %851 = vmatprep.subr.bf16.mxu0 0
          %852 = vmatpush1.bf16.msra.mxu0 0
          %853 = vmatprep.subr.bf16.mxu0 0
          %854 = vmatpush1.bf16.msra.mxu0 0
          %855 = vmatprep.subr.bf16.mxu0 0
          %856 = vmatpush1.bf16.msra.mxu0 0
          %857 = vmatprep.mubr.bf16.mxu0 0
          %858 = vmatmul.mubr.bf16.gmra.mrb[0].mxu0 %v823
          %v859 = vpop.f32.mrb[0].mxu0
          %v860 = vadd.f32 %v808, %v859
          %v861 = vpop.f32.mrb[0].mxu0
          %v862 = vpop.f32.mrb[0].mxu0
          %v863 = vpop.f32.mrb[0].mxu0
          %864 = vdwg.mxu0
          %v865 = vpack.c.bf16 %v860, %v860
          %vm866 = vcmask 781312
          %867 = vst.msk [vmem:[#allocation2] sm:$0xf] %vm866, %v865
          %v868 = vld [vmem:[%s760] sm:$0xff]
          %v869 = vpack.c.bf16 %v868, %v868
          %v870 = vld [vmem:[#allocation9] sm:$0xf]
          %v871 = vld [vmem:[#allocation9 + $0x4] sm:$0xf]
          %v872 = vld [vmem:[#allocation9 + $0x8] sm:$0xf]
          %v873 = vld [vmem:[#allocation9 + $0xc] sm:$0xf]
          %v874 = vld [vmem:[#allocation10] sm:$0x1]
          %v876 = vlaneseq
          %v877 = vshrl.u32 %v876, 7
          %v878 = vsub.s32 0, %v877
          %v879 = vrot.slane %v874, %v878
          %v885 = vunpack.c.l.b16 %v870
          %v886 = vunpack.c.l.b16 %v871
          %v887 = vunpack.c.l.b16 %v872
          %v888 = vunpack.c.l.b16 %v873
          %v889 = vpack.c.b16 %v886, %v885
          %v890 = vpack.c.b16 %v888, %v887
          %v894 = vsel %vm773, %v869, 0
          %896 = vmatprep.subr.bf16.mxu0 0
          %897 = vmatpush1.bf16.msra.mxu0 %v889
          %898 = vmatprep.subr.bf16.mxu0 0
          %899 = vmatpush1.bf16.msra.mxu0 %v890
          %900 = vmatprep.subr.bf16.mxu0 0
          %901 = vmatpush1.bf16.msra.mxu0 0
          %902 = vmatprep.subr.bf16.mxu0 0
          %903 = vmatpush1.bf16.msra.mxu0 0
          %904 = vmatprep.subr.bf16.mxu0 0
          %905 = vmatpush1.bf16.msra.mxu0 0
          %906 = vmatprep.subr.bf16.mxu0 0
          %907 = vmatpush1.bf16.msra.mxu0 0
          %908 = vmatprep.subr.bf16.mxu0 0
          %909 = vmatpush1.bf16.msra.mxu0 0
          %910 = vmatprep.subr.bf16.mxu0 0
          %911 = vmatpush1.bf16.msra.mxu0 0
          %912 = vmatprep.subr.bf16.mxu0 0
          %913 = vmatpush1.bf16.msra.mxu0 0
          %914 = vmatprep.subr.bf16.mxu0 0
          %915 = vmatpush1.bf16.msra.mxu0 0
          %916 = vmatprep.subr.bf16.mxu0 0
          %917 = vmatpush1.bf16.msra.mxu0 0
          %918 = vmatprep.subr.bf16.mxu0 0
          %919 = vmatpush1.bf16.msra.mxu0 0
          %920 = vmatprep.subr.bf16.mxu0 0
          %921 = vmatpush1.bf16.msra.mxu0 0
          %922 = vmatprep.subr.bf16.mxu0 0
          %923 = vmatpush1.bf16.msra.mxu0 0
          %924 = vmatprep.subr.bf16.mxu0 0
          %925 = vmatpush1.bf16.msra.mxu0 0
          %926 = vmatprep.subr.bf16.mxu0 0
          %927 = vmatpush1.bf16.msra.mxu0 0
          %928 = vmatprep.mubr.bf16.mxu0 0
          %929 = vmatmul.mubr.bf16.gmra.mrb[0].mxu0 %v894
          %v930 = vpop.f32.mrb[0].mxu0
          %v931 = vadd.f32 %v879, %v930
          %v932 = vpop.f32.mrb[0].mxu0
          %v933 = vpop.f32.mrb[0].mxu0
          %v934 = vpop.f32.mrb[0].mxu0
          %935 = vdwg.mxu0
          %v936 = vpack.c.bf16 %v931, %v931
          %vm937 = vcmask 519168
          %938 = vst.msk [vmem:[#allocation3] sm:$0xf] %vm937, %v936
        $region136: #{decoder_block.1} parent=95 // pred_fallthru
          _
        %v939 = vlaneseq
        %v940 = vshrl.u32 %v939, 7
        %v941 = vstv %s765
        %v942 = vadd.s32 %v941, %v940
        %v943 = vlaneseq
        %v944 = vand.u32 %v943, 127
        %vm945 = vcmp.ge.s32.totalorder %v942, %v944
        %v946 = vsel %vm945, 0.0, -1e+09
        %s947 = scalar_lea.vmem %s756, %s765
        %v948 = vld [vmem:[%s947] sm:$0xff]
        %s949 = sshra.s32 %s765, 3
        %s950 = sand.u32 %s765, 7
        %s951 = smul.addr %s949, 4
        %s952 = scalar_lea.vmem [#allocation2], %s951
        %v953 = vld [vmem:[%s952] sm:$0xf]
        %v954 = vld [vmem:[#allocation2] sm:$0xf]
        %v955 = vld [vmem:[%s7] sm:$0xf]
        %v956 = vld [vmem:[%s7 + $0x4] sm:$0xf]
        %v957 = vld [vmem:[%s7 + $0x8] sm:$0xf]
        %v958 = vld [vmem:[%s7 + $0xc] sm:$0xf]
        %v959 = vld [vmem:[%s8] sm:$0x1]
        %v961 = vunpack.c.l.b16 %v954
        %v962 = vpack.c.b16 %v961, %v961
        %963 = vrot.lane.b32.xlu0 %v962, 96
        %v964 = vpop.permute.xlu0 %963
        %vm965 = vcmask 64512
        %v967 = vsel %vm965, %v953, 0
        %v970 = vsel %vm965, %v964, 0
        %972 = vmatprep.subr.bf16.mxu0 0
        %973 = vmatpush1.bf16.xpose.msra.mxu0 %v970
        %974 = vmatprep.subr.bf16.mxu0 0
        %975 = vmatpush1.bf16.xpose.msra.mxu0 0
        %976 = vmatprep.subr.bf16.mxu0 0
        %977 = vmatpush1.bf16.xpose.msra.mxu0 0
        %978 = vmatprep.subr.bf16.mxu0 0
        %979 = vmatpush1.bf16.xpose.msra.mxu0 0
        %980 = vmatprep.subr.bf16.mxu0 0
        %981 = vmatpush1.bf16.xpose.msra.mxu0 0
        %982 = vmatprep.subr.bf16.mxu0 0
        %983 = vmatpush1.bf16.xpose.msra.mxu0 0
        %984 = vmatprep.subr.bf16.mxu0 0
        %985 = vmatpush1.bf16.xpose.msra.mxu0 0
        %986 = vmatprep.subr.bf16.mxu0 0
        %987 = vmatpush1.bf16.xpose.msra.mxu0 0
        %988 = vmatprep.subr.bf16.mxu0 0
        %989 = vmatpush1.bf16.xpose.msra.mxu0 0
        %990 = vmatprep.subr.bf16.mxu0 0
        %991 = vmatpush1.bf16.xpose.msra.mxu0 0
        %992 = vmatprep.subr.bf16.mxu0 0
        %993 = vmatpush1.bf16.xpose.msra.mxu0 0
        %994 = vmatprep.subr.bf16.mxu0 0
        %995 = vmatpush1.bf16.xpose.msra.mxu0 0
        %996 = vmatprep.subr.bf16.mxu0 0
        %997 = vmatpush1.bf16.xpose.msra.mxu0 0
        %998 = vmatprep.subr.bf16.mxu0 0
        %999 = vmatpush1.bf16.xpose.msra.mxu0 0
        %1000 = vmatprep.subr.bf16.mxu0 0
        %1001 = vmatpush1.bf16.xpose.msra.mxu0 0
        %1002 = vmatprep.subr.bf16.mxu0 0
        %1003 = vmatpush1.bf16.xpose.msra.mxu0 0
        %1004 = vmatprep.mubr.bf16.mxu0 0
        %1005 = vmatmul.mubr.bf16.gmra.mrb[0].mxu0 %v967
        %v1006 = vpop.f32.mrb[0].mxu0
        %v1007 = vadd.f32 0.0, %v1006
        %v1008 = vpop.f32.mrb[0].mxu0
        %v1009 = vpop.f32.mrb[0].mxu0
        %v1010 = vpop.f32.mrb[0].mxu0
        %1011 = vdwg.mxu0
        %v1012 = vmul.f32 %v1007, 0.35355338
        %v1013 = vadd.f32 %v1012, %v946
        %v1014 = vsel %vm965, %v1013, -inf
        %1015 = vmax.xlane.f32.xlu0 %v1014
        %v1016 = vpop.xlane.xlu0 %1015
        %v1017 = vsub.f32 %v1013, %v1016
        %v1018 = vmul.f32 %v1017, 1.442695
        %v1019 = vpow.pop %v1018
        %v1020 = vsel %vm965, %v1019, 0.0
        %1021 = vadd.xlane.f32.xlu0 %v1020
        %v1022 = vpop.xlane.xlu0 %1021
        %v1023 = vpack.c.bf16 %v1019, %v1019
        %1024 = vrot.lane.b32.xlu0 %v962, 64
        %v1025 = vpop.permute.xlu0 %1024
        %v1027 = vsel %vm965, %v1023, 0
        %vm1029 = vcmask 1043456
        %v1031 = vsel %vm1029, %v1025, 0
        %1033 = vmatprep.subr.bf16.mxu0 0
        %1034 = vmatpush1.bf16.msra.mxu0 %v1031
        %1035 = vmatprep.subr.bf16.mxu0 0
        %1036 = vmatpush1.bf16.msra.mxu0 0
        %1037 = vmatprep.subr.bf16.mxu0 0
        %1038 = vmatpush1.bf16.msra.mxu0 0
        %1039 = vmatprep.subr.bf16.mxu0 0
        %1040 = vmatpush1.bf16.msra.mxu0 0
        %1041 = vmatprep.subr.bf16.mxu0 0
        %1042 = vmatpush1.bf16.msra.mxu0 0
        %1043 = vmatprep.subr.bf16.mxu0 0
        %1044 = vmatpush1.bf16.msra.mxu0 0
        %1045 = vmatprep.subr.bf16.mxu0 0
        %1046 = vmatpush1.bf16.msra.mxu0 0
        %1047 = vmatprep.subr.bf16.mxu0 0
        %1048 = vmatpush1.bf16.msra.mxu0 0
        %1049 = vmatprep.subr.bf16.mxu0 0
        %1050 = vmatpush1.bf16.msra.mxu0 0
        %1051 = vmatprep.subr.bf16.mxu0 0
        %1052 = vmatpush1.bf16.msra.mxu0 0
        %1053 = vmatprep.subr.bf16.mxu0 0
        %1054 = vmatpush1.bf16.msra.mxu0 0
        %1055 = vmatprep.subr.bf16.mxu0 0
        %1056 = vmatpush1.bf16.msra.mxu0 0
        %1057 = vmatprep.subr.bf16.mxu0 0
        %1058 = vmatpush1.bf16.msra.mxu0 0
        %1059 = vmatprep.subr.bf16.mxu0 0
        %1060 = vmatpush1.bf16.msra.mxu0 0
        %1061 = vmatprep.subr.bf16.mxu0 0
        %1062 = vmatpush1.bf16.msra.mxu0 0
        %1063 = vmatprep.subr.bf16.mxu0 0
        %1064 = vmatpush1.bf16.msra.mxu0 0
        %1065 = vmatprep.mubr.bf16.mxu0 0
        %1066 = vmatmul.mubr.bf16.gmra.mrb[0].mxu0 %v1027
        %v1067 = vpop.f32.mrb[0].mxu0
        %v1068 = vadd.f32 0.0, %v1067
        %v1069 = vpop.f32.mrb[0].mxu0
        %v1070 = vpop.f32.mrb[0].mxu0
        %v1071 = vpop.f32.mrb[0].mxu0
        %1072 = vdwg.mxu0
        %v1073 = vrcp.pop %v1022
        %v1074 = vmul.f32 %v1068, %v1073
        %v1075 = vpack.c.bf16 %v1074, %v1074
        %v1077 = vunpack.c.l.b16 %v953
        %v1078 = vpack.c.b16 %v1077, %v1077
        %1079 = vrot.lane.b32.xlu0 %v1078, 120
        %v1080 = vpop.permute.xlu0 %1079
        %1081 = vrot.lane.b32.xlu0 %v962, 88
        %v1082 = vpop.permute.xlu0 %1081
        %v1084 = vsel %vm965, %v1080, 0
        %v1087 = vsel %vm965, %v1082, 0
        %1089 = vmatprep.subr.bf16.mxu0 0
        %1090 = vmatpush1.bf16.xpose.msra.mxu0 %v1087
        %1091 = vmatprep.subr.bf16.mxu0 0
        %1092 = vmatpush1.bf16.xpose.msra.mxu0 0
        %1093 = vmatprep.subr.bf16.mxu0 0
        %1094 = vmatpush1.bf16.xpose.msra.mxu0 0
        %1095 = vmatprep.subr.bf16.mxu0 0
        %1096 = vmatpush1.bf16.xpose.msra.mxu0 0
        %1097 = vmatprep.subr.bf16.mxu0 0
        %1098 = vmatpush1.bf16.xpose.msra.mxu0 0
        %1099 = vmatprep.subr.bf16.mxu0 0
        %1100 = vmatpush1.bf16.xpose.msra.mxu0 0
        %1101 = vmatprep.subr.bf16.mxu0 0
        %1102 = vmatpush1.bf16.xpose.msra.mxu0 0
        %1103 = vmatprep.subr.bf16.mxu0 0
        %1104 = vmatpush1.bf16.xpose.msra.mxu0 0
        %1105 = vmatprep.subr.bf16.mxu0 0
        %1106 = vmatpush1.bf16.xpose.msra.mxu0 0
        %1107 = vmatprep.subr.bf16.mxu0 0
        %1108 = vmatpush1.bf16.xpose.msra.mxu0 0
        %1109 = vmatprep.subr.bf16.mxu0 0
        %1110 = vmatpush1.bf16.xpose.msra.mxu0 0
        %1111 = vmatprep.subr.bf16.mxu0 0
        %1112 = vmatpush1.bf16.xpose.msra.mxu0 0
        %1113 = vmatprep.subr.bf16.mxu0 0
        %1114 = vmatpush1.bf16.xpose.msra.mxu0 0
        %1115 = vmatprep.subr.bf16.mxu0 0
        %1116 = vmatpush1.bf16.xpose.msra.mxu0 0
        %1117 = vmatprep.subr.bf16.mxu0 0
        %1118 = vmatpush1.bf16.xpose.msra.mxu0 0
        %1119 = vmatprep.subr.bf16.mxu0 0
        %1120 = vmatpush1.bf16.xpose.msra.mxu0 0
        %1121 = vmatprep.mubr.bf16.mxu0 0
        %1122 = vmatmul.mubr.bf16.gmra.mrb[0].mxu0 %v1084
        %v1123 = vpop.f32.mrb[0].mxu0
        %v1124 = vadd.f32 0.0, %v1123
        %v1125 = vpop.f32.mrb[0].mxu0
        %v1126 = vpop.f32.mrb[0].mxu0
        %v1127 = vpop.f32.mrb[0].mxu0
        %1128 = vdwg.mxu0
        %v1129 = vmul.f32 %v1124, 0.35355338
        %v1130 = vadd.f32 %v1129, %v946
        %v1131 = vsel %vm965, %v1130, -inf
        %1132 = vmax.xlane.f32.xlu0 %v1131
        %v1133 = vpop.xlane.xlu0 %1132
        %v1134 = vsub.f32 %v1130, %v1133
        %v1135 = vmul.f32 %v1134, 1.442695
        %v1136 = vpow.pop %v1135
        %v1137 = vsel %vm965, %v1136, 0.0
        %1138 = vadd.xlane.f32.xlu0 %v1137
        %v1139 = vpop.xlane.xlu0 %1138
        %v1140 = vpack.c.bf16 %v1136, %v1136
        %1141 = vrot.lane.b32.xlu0 %v962, 56
        %v1142 = vpop.permute.xlu0 %1141
        %v1144 = vsel %vm965, %v1140, 0
        %v1147 = vsel %vm1029, %v1142, 0
        %1149 = vmatprep.subr.bf16.mxu0 0
        %1150 = vmatpush1.bf16.msra.mxu0 %v1147
        %1151 = vmatprep.subr.bf16.mxu0 0
        %1152 = vmatpush1.bf16.msra.mxu0 0
        %1153 = vmatprep.subr.bf16.mxu0 0
        %1154 = vmatpush1.bf16.msra.mxu0 0
        %1155 = vmatprep.subr.bf16.mxu0 0
        %1156 = vmatpush1.bf16.msra.mxu0 0
        %1157 = vmatprep.subr.bf16.mxu0 0
        %1158 = vmatpush1.bf16.msra.mxu0 0
        %1159 = vmatprep.subr.bf16.mxu0 0
        %1160 = vmatpush1.bf16.msra.mxu0 0
        %1161 = vmatprep.subr.bf16.mxu0 0
        %1162 = vmatpush1.bf16.msra.mxu0 0
        %1163 = vmatprep.subr.bf16.mxu0 0
        %1164 = vmatpush1.bf16.msra.mxu0 0
        %1165 = vmatprep.subr.bf16.mxu0 0
        %1166 = vmatpush1.bf16.msra.mxu0 0
        %1167 = vmatprep.subr.bf16.mxu0 0
        %1168 = vmatpush1.bf16.msra.mxu0 0
        %1169 = vmatprep.subr.bf16.mxu0 0
        %1170 = vmatpush1.bf16.msra.mxu0 0
        %1171 = vmatprep.subr.bf16.mxu0 0
        %1172 = vmatpush1.bf16.msra.mxu0 0
        %1173 = vmatprep.subr.bf16.mxu0 0
        %1174 = vmatpush1.bf16.msra.mxu0 0
        %1175 = vmatprep.subr.bf16.mxu0 0
        %1176 = vmatpush1.bf16.msra.mxu0 0
        %1177 = vmatprep.subr.bf16.mxu0 0
        %1178 = vmatpush1.bf16.msra.mxu0 0
        %1179 = vmatprep.subr.bf16.mxu0 0
        %1180 = vmatpush1.bf16.msra.mxu0 0
        %1181 = vmatprep.mubr.bf16.mxu0 0
        %1182 = vmatmul.mubr.bf16.gmra.mrb[0].mxu0 %v1144
        %v1183 = vpop.f32.mrb[0].mxu0
        %v1184 = vadd.f32 0.0, %v1183
        %v1185 = vpop.f32.mrb[0].mxu0
        %v1186 = vpop.f32.mrb[0].mxu0
        %v1187 = vpop.f32.mrb[0].mxu0
        %1188 = vdwg.mxu0
        %v1189 = vrcp.pop %v1139
        %v1190 = vmul.f32 %v1184, %v1189
        %v1191 = vpack.c.bf16 %v1190, %v1190
        %v1193 = vsel %vm965, %v1191, 0
        %v1196 = vsel %vm1029, %v956, 0
        %1198 = vmatprep.subr.bf16.mxu0 0
        %1199 = vmatpush1.bf16.msra.mxu0 %v1196
        %1200 = vmatprep.subr.bf16.mxu0 0
        %1201 = vmatpush1.bf16.msra.mxu0 0
        %1202 = vmatprep.subr.bf16.mxu0 0
        %1203 = vmatpush1.bf16.msra.mxu0 0
        %1204 = vmatprep.subr.bf16.mxu0 0
        %1205 = vmatpush1.bf16.msra.mxu0 0
        %1206 = vmatprep.subr.bf16.mxu0 0
        %1207 = vmatpush1.bf16.msra.mxu0 0
        %1208 = vmatprep.subr.bf16.mxu0 0
        %1209 = vmatpush1.bf16.msra.mxu0 0
        %1210 = vmatprep.subr.bf16.mxu0 0
        %1211 = vmatpush1.bf16.msra.mxu0 0
        %1212 = vmatprep.subr.bf16.mxu0 0
        %1213 = vmatpush1.bf16.msra.mxu0 0
        %1214 = vmatprep.subr.bf16.mxu0 0
        %1215 = vmatpush1.bf16.msra.mxu0 0
        %1216 = vmatprep.subr.bf16.mxu0 0
        %1217 = vmatpush1.bf16.msra.mxu0 0
        %1218 = vmatprep.subr.bf16.mxu0 0
        %1219 = vmatpush1.bf16.msra.mxu0 0
        %1220 = vmatprep.subr.bf16.mxu0 0
        %1221 = vmatpush1.bf16.msra.mxu0 0
        %1222 = vmatprep.subr.bf16.mxu0 0
        %1223 = vmatpush1.bf16.msra.mxu0 0
        %1224 = vmatprep.subr.bf16.mxu0 0
        %1225 = vmatpush1.bf16.msra.mxu0 0
        %1226 = vmatprep.subr.bf16.mxu0 0
        %1227 = vmatpush1.bf16.msra.mxu0 0
        %1228 = vmatprep.subr.bf16.mxu0 0
        %1229 = vmatpush1.bf16.msra.mxu0 0
        %1230 = vmatprep.mubr.bf16.mxu0 0
        %1231 = vmatmul.mubr.bf16.gmra.mrb[0].mxu0 %v1193
        %v1232 = vpop.f32.mrb[0].mxu0
        %v1233 = vadd.f32 0.0, %v1232
        %v1234 = vpop.f32.mrb[0].mxu0
        %v1235 = vpop.f32.mrb[0].mxu0
        %v1236 = vpop.f32.mrb[0].mxu0
        %1237 = vdwg.mxu0
        %v1239 = vsel %vm965, %v1075, 0
        %v1242 = vsel %vm1029, %v955, 0
        %1244 = vmatprep.subr.bf16.mxu0 0
        %1245 = vmatpush1.bf16.msra.mxu0 %v1242
        %1246 = vmatprep.subr.bf16.mxu0 0
        %1247 = vmatpush1.bf16.msra.mxu0 0
        %1248 = vmatprep.subr.bf16.mxu0 0
        %1249 = vmatpush1.bf16.msra.mxu0 0
        %1250 = vmatprep.subr.bf16.mxu0 0
        %1251 = vmatpush1.bf16.msra.mxu0 0
        %1252 = vmatprep.subr.bf16.mxu0 0
        %1253 = vmatpush1.bf16.msra.mxu0 0
        %1254 = vmatprep.subr.bf16.mxu0 0
        %1255 = vmatpush1.bf16.msra.mxu0 0
        %1256 = vmatprep.subr.bf16.mxu0 0
        %1257 = vmatpush1.bf16.msra.mxu0 0
        %1258 = vmatprep.subr.bf16.mxu0 0
        %1259 = vmatpush1.bf16.msra.mxu0 0
        %1260 = vmatprep.subr.bf16.mxu0 0
        %1261 = vmatpush1.bf16.msra.mxu0 0
        %1262 = vmatprep.subr.bf16.mxu0 0
        %1263 = vmatpush1.bf16.msra.mxu0 0
        %1264 = vmatprep.subr.bf16.mxu0 0
        %1265 = vmatpush1.bf16.msra.mxu0 0
        %1266 = vmatprep.subr.bf16.mxu0 0
        %1267 = vmatpush1.bf16.msra.mxu0 0
        %1268 = vmatprep.subr.bf16.mxu0 0
        %1269 = vmatpush1.bf16.msra.mxu0 0
        %1270 = vmatprep.subr.bf16.mxu0 0
        %1271 = vmatpush1.bf16.msra.mxu0 0
        %1272 = vmatprep.subr.bf16.mxu0 0
        %1273 = vmatpush1.bf16.msra.mxu0 0
        %1274 = vmatprep.subr.bf16.mxu0 0
        %1275 = vmatpush1.bf16.msra.mxu0 0
        %1276 = vmatprep.mubr.bf16.mxu0 0
        %1277 = vmatmul.mubr.bf16.gmra.mrb[0].mxu0 %v1239
        %v1278 = vpop.f32.mrb[0].mxu0
        %v1279 = vadd.f32 %v1233, %v1278
        %v1280 = vpop.f32.mrb[0].mxu0
        %v1281 = vpop.f32.mrb[0].mxu0
        %v1282 = vpop.f32.mrb[0].mxu0
        %1283 = vdwg.mxu0
        %1284 = vrot.lane.b32.xlu0 %v1078, 112
        %v1285 = vpop.permute.xlu0 %1284
        %1286 = vrot.lane.b32.xlu0 %v962, 80
        %v1287 = vpop.permute.xlu0 %1286
        %v1289 = vsel %vm965, %v1285, 0
        %v1292 = vsel %vm965, %v1287, 0
        %1294 = vmatprep.subr.bf16.mxu0 0
        %1295 = vmatpush1.bf16.xpose.msra.mxu0 %v1292
        %1296 = vmatprep.subr.bf16.mxu0 0
        %1297 = vmatpush1.bf16.xpose.msra.mxu0 0
        %1298 = vmatprep.subr.bf16.mxu0 0
        %1299 = vmatpush1.bf16.xpose.msra.mxu0 0
        %1300 = vmatprep.subr.bf16.mxu0 0
        %1301 = vmatpush1.bf16.xpose.msra.mxu0 0
        %1302 = vmatprep.subr.bf16.mxu0 0
        %1303 = vmatpush1.bf16.xpose.msra.mxu0 0
        %1304 = vmatprep.subr.bf16.mxu0 0
        %1305 = vmatpush1.bf16.xpose.msra.mxu0 0
        %1306 = vmatprep.subr.bf16.mxu0 0
        %1307 = vmatpush1.bf16.xpose.msra.mxu0 0
        %1308 = vmatprep.subr.bf16.mxu0 0
        %1309 = vmatpush1.bf16.xpose.msra.mxu0 0
        %1310 = vmatprep.subr.bf16.mxu0 0
        %1311 = vmatpush1.bf16.xpose.msra.mxu0 0
        %1312 = vmatprep.subr.bf16.mxu0 0
        %1313 = vmatpush1.bf16.xpose.msra.mxu0 0
        %1314 = vmatprep.subr.bf16.mxu0 0
        %1315 = vmatpush1.bf16.xpose.msra.mxu0 0
        %1316 = vmatprep.subr.bf16.mxu0 0
        %1317 = vmatpush1.bf16.xpose.msra.mxu0 0
        %1318 = vmatprep.subr.bf16.mxu0 0
        %1319 = vmatpush1.bf16.xpose.msra.mxu0 0
        %1320 = vmatprep.subr.bf16.mxu0 0
        %1321 = vmatpush1.bf16.xpose.msra.mxu0 0
        %1322 = vmatprep.subr.bf16.mxu0 0
        %1323 = vmatpush1.bf16.xpose.msra.mxu0 0
        %1324 = vmatprep.subr.bf16.mxu0 0
        %1325 = vmatpush1.bf16.xpose.msra.mxu0 0
        %1326 = vmatprep.mubr.bf16.mxu0 0
        %1327 = vmatmul.mubr.bf16.gmra.mrb[0].mxu0 %v1289
        %v1328 = vpop.f32.mrb[0].mxu0
        %v1329 = vadd.f32 0.0, %v1328
        %v1330 = vpop.f32.mrb[0].mxu0
        %v1331 = vpop.f32.mrb[0].mxu0
        %v1332 = vpop.f32.mrb[0].mxu0
        %1333 = vdwg.mxu0
        %v1334 = vmul.f32 %v1329, 0.35355338
        %v1335 = vadd.f32 %v1334, %v946
        %v1336 = vsel %vm965, %v1335, -inf
        %1337 = vmax.xlane.f32.xlu0 %v1336
        %v1338 = vpop.xlane.xlu0 %1337
        %v1339 = vsub.f32 %v1335, %v1338
        %v1340 = vmul.f32 %v1339, 1.442695
        %v1341 = vpow.pop %v1340
        %v1342 = vsel %vm965, %v1341, 0.0
        %1343 = vadd.xlane.f32.xlu0 %v1342
        %v1344 = vpop.xlane.xlu0 %1343
        %v1345 = vpack.c.bf16 %v1341, %v1341
        %1346 = vrot.lane.b32.xlu0 %v962, 48
        %v1347 = vpop.permute.xlu0 %1346
        %v1349 = vsel %vm965, %v1345, 0
        %v1352 = vsel %vm1029, %v1347, 0
        %1354 = vmatprep.subr.bf16.mxu0 0
        %1355 = vmatpush1.bf16.msra.mxu0 %v1352
        %1356 = vmatprep.subr.bf16.mxu0 0
        %1357 = vmatpush1.bf16.msra.mxu0 0
        %1358 = vmatprep.subr.bf16.mxu0 0
        %1359 = vmatpush1.bf16.msra.mxu0 0
        %1360 = vmatprep.subr.bf16.mxu0 0
        %1361 = vmatpush1.bf16.msra.mxu0 0
        %1362 = vmatprep.subr.bf16.mxu0 0
        %1363 = vmatpush1.bf16.msra.mxu0 0
        %1364 = vmatprep.subr.bf16.mxu0 0
        %1365 = vmatpush1.bf16.msra.mxu0 0
        %1366 = vmatprep.subr.bf16.mxu0 0
        %1367 = vmatpush1.bf16.msra.mxu0 0
        %1368 = vmatprep.subr.bf16.mxu0 0
        %1369 = vmatpush1.bf16.msra.mxu0 0
        %1370 = vmatprep.subr.bf16.mxu0 0
        %1371 = vmatpush1.bf16.msra.mxu0 0
        %1372 = vmatprep.subr.bf16.mxu0 0
        %1373 = vmatpush1.bf16.msra.mxu0 0
        %1374 = vmatprep.subr.bf16.mxu0 0
        %1375 = vmatpush1.bf16.msra.mxu0 0
        %1376 = vmatprep.subr.bf16.mxu0 0
        %1377 = vmatpush1.bf16.msra.mxu0 0
        %1378 = vmatprep.subr.bf16.mxu0 0
        %1379 = vmatpush1.bf16.msra.mxu0 0
        %1380 = vmatprep.subr.bf16.mxu0 0
        %1381 = vmatpush1.bf16.msra.mxu0 0
        %1382 = vmatprep.subr.bf16.mxu0 0
        %1383 = vmatpush1.bf16.msra.mxu0 0
        %1384 = vmatprep.subr.bf16.mxu0 0
        %1385 = vmatpush1.bf16.msra.mxu0 0
        %1386 = vmatprep.mubr.bf16.mxu0 0
        %1387 = vmatmul.mubr.bf16.gmra.mrb[0].mxu0 %v1349
        %v1388 = vpop.f32.mrb[0].mxu0
        %v1389 = vadd.f32 0.0, %v1388
        %v1390 = vpop.f32.mrb[0].mxu0
        %v1391 = vpop.f32.mrb[0].mxu0
        %v1392 = vpop.f32.mrb[0].mxu0
        %1393 = vdwg.mxu0
        %v1394 = vrcp.pop %v1344
        %v1395 = vmul.f32 %v1389, %v1394
        %v1396 = vpack.c.bf16 %v1395, %v1395
        %v1398 = vsel %vm965, %v1396, 0
        %v1401 = vsel %vm1029, %v957, 0
        %1403 = vmatprep.subr.bf16.mxu0 0
        %1404 = vmatpush1.bf16.msra.mxu0 %v1401
        %1405 = vmatprep.subr.bf16.mxu0 0
        %1406 = vmatpush1.bf16.msra.mxu0 0
        %1407 = vmatprep.subr.bf16.mxu0 0
        %1408 = vmatpush1.bf16.msra.mxu0 0
        %1409 = vmatprep.subr.bf16.mxu0 0
        %1410 = vmatpush1.bf16.msra.mxu0 0
        %1411 = vmatprep.subr.bf16.mxu0 0
        %1412 = vmatpush1.bf16.msra.mxu0 0
        %1413 = vmatprep.subr.bf16.mxu0 0
        %1414 = vmatpush1.bf16.msra.mxu0 0
        %1415 = vmatprep.subr.bf16.mxu0 0
        %1416 = vmatpush1.bf16.msra.mxu0 0
        %1417 = vmatprep.subr.bf16.mxu0 0
        %1418 = vmatpush1.bf16.msra.mxu0 0
        %1419 = vmatprep.subr.bf16.mxu0 0
        %1420 = vmatpush1.bf16.msra.mxu0 0
        %1421 = vmatprep.subr.bf16.mxu0 0
        %1422 = vmatpush1.bf16.msra.mxu0 0
        %1423 = vmatprep.subr.bf16.mxu0 0
        %1424 = vmatpush1.bf16.msra.mxu0 0
        %1425 = vmatprep.subr.bf16.mxu0 0
        %1426 = vmatpush1.bf16.msra.mxu0 0
        %1427 = vmatprep.subr.bf16.mxu0 0
        %1428 = vmatpush1.bf16.msra.mxu0 0
        %1429 = vmatprep.subr.bf16.mxu0 0
        %1430 = vmatpush1.bf16.msra.mxu0 0
        %1431 = vmatprep.subr.bf16.mxu0 0
        %1432 = vmatpush1.bf16.msra.mxu0 0
        %1433 = vmatprep.subr.bf16.mxu0 0
        %1434 = vmatpush1.bf16.msra.mxu0 0
        %1435 = vmatprep.mubr.bf16.mxu0 0
        %1436 = vmatmul.mubr.bf16.gmra.mrb[0].mxu0 %v1398
        %v1437 = vpop.f32.mrb[0].mxu0
        %v1438 = vadd.f32 0.0, %v1437
        %v1439 = vpop.f32.mrb[0].mxu0
        %v1440 = vpop.f32.mrb[0].mxu0
        %v1441 = vpop.f32.mrb[0].mxu0
        %1442 = vdwg.mxu0
        %v1443 = vadd.f32 %v1279, %v1438
        %1444 = vrot.lane.b32.xlu0 %v1078, 104
        %v1445 = vpop.permute.xlu0 %1444
        %1446 = vrot.lane.b32.xlu0 %v962, 72
        %v1447 = vpop.permute.xlu0 %1446
        %v1449 = vsel %vm965, %v1445, 0
        %v1452 = vsel %vm965, %v1447, 0
        %1454 = vmatprep.subr.bf16.mxu0 0
        %1455 = vmatpush1.bf16.xpose.msra.mxu0 %v1452
        %1456 = vmatprep.subr.bf16.mxu0 0
        %1457 = vmatpush1.bf16.xpose.msra.mxu0 0
        %1458 = vmatprep.subr.bf16.mxu0 0
        %1459 = vmatpush1.bf16.xpose.msra.mxu0 0
        %1460 = vmatprep.subr.bf16.mxu0 0
        %1461 = vmatpush1.bf16.xpose.msra.mxu0 0
        %1462 = vmatprep.subr.bf16.mxu0 0
        %1463 = vmatpush1.bf16.xpose.msra.mxu0 0
        %1464 = vmatprep.subr.bf16.mxu0 0
        %1465 = vmatpush1.bf16.xpose.msra.mxu0 0
        %1466 = vmatprep.subr.bf16.mxu0 0
        %1467 = vmatpush1.bf16.xpose.msra.mxu0 0
        %1468 = vmatprep.subr.bf16.mxu0 0
        %1469 = vmatpush1.bf16.xpose.msra.mxu0 0
        %1470 = vmatprep.subr.bf16.mxu0 0
        %1471 = vmatpush1.bf16.xpose.msra.mxu0 0
        %1472 = vmatprep.subr.bf16.mxu0 0
        %1473 = vmatpush1.bf16.xpose.msra.mxu0 0
        %1474 = vmatprep.subr.bf16.mxu0 0
        %1475 = vmatpush1.bf16.xpose.msra.mxu0 0
        %1476 = vmatprep.subr.bf16.mxu0 0
        %1477 = vmatpush1.bf16.xpose.msra.mxu0 0
        %1478 = vmatprep.subr.bf16.mxu0 0
        %1479 = vmatpush1.bf16.xpose.msra.mxu0 0
        %1480 = vmatprep.subr.bf16.mxu0 0
        %1481 = vmatpush1.bf16.xpose.msra.mxu0 0
        %1482 = vmatprep.subr.bf16.mxu0 0
        %1483 = vmatpush1.bf16.xpose.msra.mxu0 0
        %1484 = vmatprep.subr.bf16.mxu0 0
        %1485 = vmatpush1.bf16.xpose.msra.mxu0 0
        %1486 = vmatprep.mubr.bf16.mxu0 0
        %1487 = vmatmul.mubr.bf16.gmra.mrb[0].mxu0 %v1449
        %v1488 = vpop.f32.mrb[0].mxu0
        %v1489 = vadd.f32 0.0, %v1488
        %v1490 = vpop.f32.mrb[0].mxu0
        %v1491 = vpop.f32.mrb[0].mxu0
        %v1492 = vpop.f32.mrb[0].mxu0
        %1493 = vdwg.mxu0
        %v1494 = vmul.f32 %v1489, 0.35355338
        %v1495 = vadd.f32 %v1494, %v946
        %v1496 = vsel %vm965, %v1495, -inf
        %1497 = vmax.xlane.f32.xlu0 %v1496
        %v1498 = vpop.xlane.xlu0 %1497
        %v1499 = vsub.f32 %v1495, %v1498
        %v1500 = vmul.f32 %v1499, 1.442695
        %v1501 = vpow.pop %v1500
        %v1502 = vsel %vm965, %v1501, 0.0
        %1503 = vadd.xlane.f32.xlu0 %v1502
        %v1504 = vpop.xlane.xlu0 %1503
        %v1505 = vpack.c.bf16 %v1501, %v1501
        %1506 = vrot.lane.b32.xlu0 %v962, 40
        %v1507 = vpop.permute.xlu0 %1506
        %v1509 = vsel %vm965, %v1505, 0
        %v1512 = vsel %vm1029, %v1507, 0
        %1514 = vmatprep.subr.bf16.mxu0 0
        %1515 = vmatpush1.bf16.msra.mxu0 %v1512
        %1516 = vmatprep.subr.bf16.mxu0 0
        %1517 = vmatpush1.bf16.msra.mxu0 0
        %1518 = vmatprep.subr.bf16.mxu0 0
        %1519 = vmatpush1.bf16.msra.mxu0 0
        %1520 = vmatprep.subr.bf16.mxu0 0
        %1521 = vmatpush1.bf16.msra.mxu0 0
        %1522 = vmatprep.subr.bf16.mxu0 0
        %1523 = vmatpush1.bf16.msra.mxu0 0
        %1524 = vmatprep.subr.bf16.mxu0 0
        %1525 = vmatpush1.bf16.msra.mxu0 0
        %1526 = vmatprep.subr.bf16.mxu0 0
        %1527 = vmatpush1.bf16.msra.mxu0 0
        %1528 = vmatprep.subr.bf16.mxu0 0
        %1529 = vmatpush1.bf16.msra.mxu0 0
        %1530 = vmatprep.subr.bf16.mxu0 0
        %1531 = vmatpush1.bf16.msra.mxu0 0
        %1532 = vmatprep.subr.bf16.mxu0 0
        %1533 = vmatpush1.bf16.msra.mxu0 0
        %1534 = vmatprep.subr.bf16.mxu0 0
        %1535 = vmatpush1.bf16.msra.mxu0 0
        %1536 = vmatprep.subr.bf16.mxu0 0
        %1537 = vmatpush1.bf16.msra.mxu0 0
        %1538 = vmatprep.subr.bf16.mxu0 0
        %1539 = vmatpush1.bf16.msra.mxu0 0
        %1540 = vmatprep.subr.bf16.mxu0 0
        %1541 = vmatpush1.bf16.msra.mxu0 0
        %1542 = vmatprep.subr.bf16.mxu0 0
        %1543 = vmatpush1.bf16.msra.mxu0 0
        %1544 = vmatprep.subr.bf16.mxu0 0
        %1545 = vmatpush1.bf16.msra.mxu0 0
        %1546 = vmatprep.mubr.bf16.mxu0 0
        %1547 = vmatmul.mubr.bf16.gmra.mrb[0].mxu0 %v1509
        %v1548 = vpop.f32.mrb[0].mxu0
        %v1549 = vadd.f32 0.0, %v1548
        %v1550 = vpop.f32.mrb[0].mxu0
        %v1551 = vpop.f32.mrb[0].mxu0
        %v1552 = vpop.f32.mrb[0].mxu0
        %1553 = vdwg.mxu0
        %v1554 = vrcp.pop %v1504
        %v1555 = vmul.f32 %v1549, %v1554
        %v1556 = vpack.c.bf16 %v1555, %v1555
        %v1558 = vsel %vm965, %v1556, 0
        %v1561 = vsel %vm1029, %v958, 0
        %1563 = vmatprep.subr.bf16.mxu0 0
        %1564 = vmatpush1.bf16.msra.mxu0 %v1561
        %1565 = vmatprep.subr.bf16.mxu0 0
        %1566 = vmatpush1.bf16.msra.mxu0 0
        %1567 = vmatprep.subr.bf16.mxu0 0
        %1568 = vmatpush1.bf16.msra.mxu0 0
        %1569 = vmatprep.subr.bf16.mxu0 0
        %1570 = vmatpush1.bf16.msra.mxu0 0
        %1571 = vmatprep.subr.bf16.mxu0 0
        %1572 = vmatpush1.bf16.msra.mxu0 0
        %1573 = vmatprep.subr.bf16.mxu0 0
        %1574 = vmatpush1.bf16.msra.mxu0 0
        %1575 = vmatprep.subr.bf16.mxu0 0
        %1576 = vmatpush1.bf16.msra.mxu0 0
        %1577 = vmatprep.subr.bf16.mxu0 0
        %1578 = vmatpush1.bf16.msra.mxu0 0
        %1579 = vmatprep.subr.bf16.mxu0 0
        %1580 = vmatpush1.bf16.msra.mxu0 0
        %1581 = vmatprep.subr.bf16.mxu0 0
        %1582 = vmatpush1.bf16.msra.mxu0 0
        %1583 = vmatprep.subr.bf16.mxu0 0
        %1584 = vmatpush1.bf16.msra.mxu0 0
        %1585 = vmatprep.subr.bf16.mxu0 0
        %1586 = vmatpush1.bf16.msra.mxu0 0
        %1587 = vmatprep.subr.bf16.mxu0 0
        %1588 = vmatpush1.bf16.msra.mxu0 0
        %1589 = vmatprep.subr.bf16.mxu0 0
        %1590 = vmatpush1.bf16.msra.mxu0 0
        %1591 = vmatprep.subr.bf16.mxu0 0
        %1592 = vmatpush1.bf16.msra.mxu0 0
        %1593 = vmatprep.subr.bf16.mxu0 0
        %1594 = vmatpush1.bf16.msra.mxu0 0
        %1595 = vmatprep.mubr.bf16.mxu0 0
        %1596 = vmatmul.mubr.bf16.gmra.mrb[0].mxu0 %v1558
        %v1597 = vpop.f32.mrb[0].mxu0
        %v1598 = vadd.f32 0.0, %v1597
        %v1599 = vpop.f32.mrb[0].mxu0
        %v1600 = vpop.f32.mrb[0].mxu0
        %v1601 = vpop.f32.mrb[0].mxu0
        %1602 = vdwg.mxu0
        %v1603 = vadd.f32 %v1443, %v1598
        %v1605 = vlaneseq
        %v1606 = vshrl.u32 %v1605, 7
        %v1607 = vsub.s32 0, %v1606
        %v1608 = vrot.slane %v959, %v1607
        %v1610 = vadd.f32 %v1603, %v1608
        %v1611 = vadd.f32 %v948, %v1610
        %vm1612 = vcmask 261120
        %v1613 = vsel %vm1612, %v1611, 0.0
        %1614 = vadd.xlane.f32.xlu0 %v1613
        %v1615 = vpop.xlane.xlu0 %1614
        %v1616 = vrcp.pop 32.0
        %v1617 = vmul.f32 %v1615, %v1616
        %v1618 = vsub.f32 %v1611, %v1617
        %v1619 = vmul.f32 %v1618, %v1618
        %v1620 = vsel %vm1612, %v1619, 0.0
        %1621 = vadd.xlane.f32.xlu0 %v1620
        %v1622 = vpop.xlane.xlu0 %1621
        %v1623 = vmul.f32 %v1622, %v1616
        %v1624 = vadd.f32 %v1623, 1e-05
        %v1625 = vrsqrt.pop %v1624
        %v1626 = vmul.f32 %v1618, %v1625
        %v1627 = vlaneseq
        %v1628 = vshrl.u32 %v1627, 7
        %v1629 = vsub.s32 1, %v1628
        %v1630 = vrot.slane %v766, %v1629
        %v1631 = vmul.f32 %v1626, %v1630
        %v1632 = vlaneseq
        %v1633 = vshrl.u32 %v1632, 7
        %v1634 = vsub.s32 1, %v1633
        %v1635 = vrot.slane %v767, %v1634
        %v1636 = vadd.f32 %v1631, %v1635
        %v1637 = vpack.c.bf16 %v1636, %v1636
        %v1638 = vld [vmem:[#allocation4] sm:$0xf]
        %v1639 = vld [vmem:[#allocation4 + $0x4] sm:$0xf]
        %v1640 = vld [vmem:[#allocation4 + $0x8] sm:$0xf]
        %v1641 = vld [vmem:[#allocation4 + $0xc] sm:$0xf]
        %v1642 = vld [vmem:[#allocation7] sm:$0x1]
        %v1644 = vlaneseq
        %v1645 = vshrl.u32 %v1644, 7
        %v1646 = vsub.s32 0, %v1645
        %v1647 = vrot.slane %v1642, %v1646
        %v1653 = vunpack.c.l.b16 %v1638
        %v1654 = vunpack.c.l.b16 %v1639
        %v1655 = vunpack.c.l.b16 %v1640
        %v1656 = vunpack.c.l.b16 %v1641
        %v1657 = vpack.c.b16 %v1654, %v1653
        %v1658 = vpack.c.b16 %v1656, %v1655
        %v1662 = vsel %vm1612, %v1637, 0
        %1664 = vmatprep.subr.bf16.mxu0 0
        %1665 = vmatpush1.bf16.msra.mxu0 %v1657
        %1666 = vmatprep.subr.bf16.mxu0 0
        %1667 = vmatpush1.bf16.msra.mxu0 %v1658
        %1668 = vmatprep.subr.bf16.mxu0 0
        %1669 = vmatpush1.bf16.msra.mxu0 0
        %1670 = vmatprep.subr.bf16.mxu0 0
        %1671 = vmatpush1.bf16.msra.mxu0 0
        %1672 = vmatprep.subr.bf16.mxu0 0
        %1673 = vmatpush1.bf16.msra.mxu0 0
        %1674 = vmatprep.subr.bf16.mxu0 0
        %1675 = vmatpush1.bf16.msra.mxu0 0
        %1676 = vmatprep.subr.bf16.mxu0 0
        %1677 = vmatpush1.bf16.msra.mxu0 0
        %1678 = vmatprep.subr.bf16.mxu0 0
        %1679 = vmatpush1.bf16.msra.mxu0 0
        %1680 = vmatprep.subr.bf16.mxu0 0
        %1681 = vmatpush1.bf16.msra.mxu0 0
        %1682 = vmatprep.subr.bf16.mxu0 0
        %1683 = vmatpush1.bf16.msra.mxu0 0
        %1684 = vmatprep.subr.bf16.mxu0 0
        %1685 = vmatpush1.bf16.msra.mxu0 0
        %1686 = vmatprep.subr.bf16.mxu0 0
        %1687 = vmatpush1.bf16.msra.mxu0 0
        %1688 = vmatprep.subr.bf16.mxu0 0
        %1689 = vmatpush1.bf16.msra.mxu0 0
        %1690 = vmatprep.subr.bf16.mxu0 0
        %1691 = vmatpush1.bf16.msra.mxu0 0
        %1692 = vmatprep.subr.bf16.mxu0 0
        %1693 = vmatpush1.bf16.msra.mxu0 0
        %1694 = vmatprep.subr.bf16.mxu0 0
        %1695 = vmatpush1.bf16.msra.mxu0 0
        %1696 = vmatprep.mubr.bf16.mxu0 0
        %1697 = vmatmul.mubr.bf16.gmra.mrb[0].mxu0 %v1662
        %v1698 = vpop.f32.mrb[0].mxu0
        %v1699 = vadd.f32 %v1647, %v1698
        %v1700 = vpop.f32.mrb[0].mxu0
        %v1701 = vpop.f32.mrb[0].mxu0
        %v1702 = vpop.f32.mrb[0].mxu0
        %1703 = vdwg.mxu0
        %v1704 = vpack.c.bf16 %v1699, %v1699
        %v1705 = vld [vmem:[#allocation3] sm:$0xf]
        %v1706 = vld [vmem:[%s763] sm:$0x1]
        %v1707 = vld [vmem:[#allocation12] sm:$0xf]
        %v1708 = vld [vmem:[#allocation12 + $0x4] sm:$0xf]
        %v1709 = vld [vmem:[#allocation12 + $0x8] sm:$0xf]
        %v1710 = vld [vmem:[#allocation12 + $0xc] sm:$0xf]
        %v1711 = vld [vmem:[#allocation13] sm:$0x1]
        %v1713 = vsel %vm965, %v1704, 0
        %v1716 = vsel %vm965, %v1705, 0
        %1718 = vmatprep.subr.bf16.mxu0 0
        %1719 = vmatpush1.bf16.xpose.msra.mxu0 %v1716
        %1720 = vmatprep.subr.bf16.mxu0 0
        %1721 = vmatpush1.bf16.xpose.msra.mxu0 0
        %1722 = vmatprep.subr.bf16.mxu0 0
        %1723 = vmatpush1.bf16.xpose.msra.mxu0 0
        %1724 = vmatprep.subr.bf16.mxu0 0
        %1725 = vmatpush1.bf16.xpose.msra.mxu0 0
        %1726 = vmatprep.subr.bf16.mxu0 0
        %1727 = vmatpush1.bf16.xpose.msra.mxu0 0
        %1728 = vmatprep.subr.bf16.mxu0 0
        %1729 = vmatpush1.bf16.xpose.msra.mxu0 0
        %1730 = vmatprep.subr.bf16.mxu0 0
        %1731 = vmatpush1.bf16.xpose.msra.mxu0 0
        %1732 = vmatprep.subr.bf16.mxu0 0
        %1733 = vmatpush1.bf16.xpose.msra.mxu0 0
        %1734 = vmatprep.subr.bf16.mxu0 0
        %1735 = vmatpush1.bf16.xpose.msra.mxu0 0
        %1736 = vmatprep.subr.bf16.mxu0 0
        %1737 = vmatpush1.bf16.xpose.msra.mxu0 0
        %1738 = vmatprep.subr.bf16.mxu0 0
        %1739 = vmatpush1.bf16.xpose.msra.mxu0 0
        %1740 = vmatprep.subr.bf16.mxu0 0
        %1741 = vmatpush1.bf16.xpose.msra.mxu0 0
        %1742 = vmatprep.subr.bf16.mxu0 0
        %1743 = vmatpush1.bf16.xpose.msra.mxu0 0
        %1744 = vmatprep.subr.bf16.mxu0 0
        %1745 = vmatpush1.bf16.xpose.msra.mxu0 0
        %1746 = vmatprep.subr.bf16.mxu0 0
        %1747 = vmatpush1.bf16.xpose.msra.mxu0 0
        %1748 = vmatprep.subr.bf16.mxu0 0
        %1749 = vmatpush1.bf16.xpose.msra.mxu0 0
        %1750 = vmatprep.mubr.bf16.mxu0 0
        %1751 = vmatmul.mubr.bf16.gmra.mrb[0].mxu0 %v1713
        %v1752 = vpop.f32.mrb[0].mxu0
        %v1753 = vadd.f32 0.0, %v1752
        %v1754 = vpop.f32.mrb[0].mxu0
        %v1755 = vpop.f32.mrb[0].mxu0
        %v1756 = vpop.f32.mrb[0].mxu0
        %1757 = vdwg.mxu0
        %v1758 = vmul.f32 %v1753, 0.35355338
        %v1760 = vlaneseq
        %v1761 = vshrl.u32 %v1760, 7
        %v1762 = vsub.s32 0, %v1761
        %v1763 = vrot.slane %v1706, %v1762
        %v1765 = vadd.f32 %v1758, %v1763
        %v1766 = vsel %vm965, %v1765, -inf
        %1767 = vmax.xlane.f32.xlu0 %v1766
        %v1768 = vpop.xlane.xlu0 %1767
        %v1769 = vsub.f32 %v1765, %v1768
        %v1770 = vmul.f32 %v1769, 1.442695
        %v1771 = vpow.pop %v1770
        %v1772 = vsel %vm965, %v1771, 0.0
        %1773 = vadd.xlane.f32.xlu0 %v1772
        %v1774 = vpop.xlane.xlu0 %1773
        %v1775 = vpack.c.bf16 %v1771, %v1771
        %v1777 = vunpack.c.l.b16 %v1705
        %v1778 = vpack.c.b16 %v1777, %v1777
        %1779 = vrot.lane.b32.xlu0 %v1778, 96
        %v1780 = vpop.permute.xlu0 %1779
        %v1782 = vsel %vm965, %v1775, 0
        %v1785 = vsel %vm1029, %v1780, 0
        %1787 = vmatprep.subr.bf16.mxu0 0
        %1788 = vmatpush1.bf16.msra.mxu0 %v1785
        %1789 = vmatprep.subr.bf16.mxu0 0
        %1790 = vmatpush1.bf16.msra.mxu0 0
        %1791 = vmatprep.subr.bf16.mxu0 0
        %1792 = vmatpush1.bf16.msra.mxu0 0
        %1793 = vmatprep.subr.bf16.mxu0 0
        %1794 = vmatpush1.bf16.msra.mxu0 0
        %1795 = vmatprep.subr.bf16.mxu0 0
        %1796 = vmatpush1.bf16.msra.mxu0 0
        %1797 = vmatprep.subr.bf16.mxu0 0
        %1798 = vmatpush1.bf16.msra.mxu0 0
        %1799 = vmatprep.subr.bf16.mxu0 0
        %1800 = vmatpush1.bf16.msra.mxu0 0
        %1801 = vmatprep.subr.bf16.mxu0 0
        %1802 = vmatpush1.bf16.msra.mxu0 0
        %1803 = vmatprep.subr.bf16.mxu0 0
        %1804 = vmatpush1.bf16.msra.mxu0 0
        %1805 = vmatprep.subr.bf16.mxu0 0
        %1806 = vmatpush1.bf16.msra.mxu0 0
        %1807 = vmatprep.subr.bf16.mxu0 0
        %1808 = vmatpush1.bf16.msra.mxu0 0
        %1809 = vmatprep.subr.bf16.mxu0 0
        %1810 = vmatpush1.bf16.msra.mxu0 0
        %1811 = vmatprep.subr.bf16.mxu0 0
        %1812 = vmatpush1.bf16.msra.mxu0 0
        %1813 = vmatprep.subr.bf16.mxu0 0
        %1814 = vmatpush1.bf16.msra.mxu0 0
        %1815 = vmatprep.subr.bf16.mxu0 0
        %1816 = vmatpush1.bf16.msra.mxu0 0
        %1817 = vmatprep.subr.bf16.mxu0 0
        %1818 = vmatpush1.bf16.msra.mxu0 0
        %1819 = vmatprep.mubr.bf16.mxu0 0
        %1820 = vmatmul.mubr.bf16.gmra.mrb[0].mxu0 %v1782
        %v1821 = vpop.f32.mrb[0].mxu0
        %v1822 = vadd.f32 0.0, %v1821
        %v1823 = vpop.f32.mrb[0].mxu0
        %v1824 = vpop.f32.mrb[0].mxu0
        %v1825 = vpop.f32.mrb[0].mxu0
        %1826 = vdwg.mxu0
        %v1827 = vrcp.pop %v1774
        %v1828 = vmul.f32 %v1822, %v1827
        %v1829 = vpack.c.bf16 %v1828, %v1828
        %1831 = vrot.lane.b32.xlu0 %v1704, 120
        %v1832 = vpop.permute.xlu0 %1831
        %1833 = vrot.lane.b32.xlu0 %v1778, 120
        %v1834 = vpop.permute.xlu0 %1833
        %v1836 = vsel %vm965, %v1832, 0
        %v1839 = vsel %vm965, %v1834, 0
        %1841 = vmatprep.subr.bf16.mxu0 0
        %1842 = vmatpush1.bf16.xpose.msra.mxu0 %v1839
        %1843 = vmatprep.subr.bf16.mxu0 0
        %1844 = vmatpush1.bf16.xpose.msra.mxu0 0
        %1845 = vmatprep.subr.bf16.mxu0 0
        %1846 = vmatpush1.bf16.xpose.msra.mxu0 0
        %1847 = vmatprep.subr.bf16.mxu0 0
        %1848 = vmatpush1.bf16.xpose.msra.mxu0 0
        %1849 = vmatprep.subr.bf16.mxu0 0
        %1850 = vmatpush1.bf16.xpose.msra.mxu0 0
        %1851 = vmatprep.subr.bf16.mxu0 0
        %1852 = vmatpush1.bf16.xpose.msra.mxu0 0
        %1853 = vmatprep.subr.bf16.mxu0 0
        %1854 = vmatpush1.bf16.xpose.msra.mxu0 0
        %1855 = vmatprep.subr.bf16.mxu0 0
        %1856 = vmatpush1.bf16.xpose.msra.mxu0 0
        %1857 = vmatprep.subr.bf16.mxu0 0
        %1858 = vmatpush1.bf16.xpose.msra.mxu0 0
        %1859 = vmatprep.subr.bf16.mxu0 0
        %1860 = vmatpush1.bf16.xpose.msra.mxu0 0
        %1861 = vmatprep.subr.bf16.mxu0 0
        %1862 = vmatpush1.bf16.xpose.msra.mxu0 0
        %1863 = vmatprep.subr.bf16.mxu0 0
        %1864 = vmatpush1.bf16.xpose.msra.mxu0 0
        %1865 = vmatprep.subr.bf16.mxu0 0
        %1866 = vmatpush1.bf16.xpose.msra.mxu0 0
        %1867 = vmatprep.subr.bf16.mxu0 0
        %1868 = vmatpush1.bf16.xpose.msra.mxu0 0
        %1869 = vmatprep.subr.bf16.mxu0 0
        %1870 = vmatpush1.bf16.xpose.msra.mxu0 0
        %1871 = vmatprep.subr.bf16.mxu0 0
        %1872 = vmatpush1.bf16.xpose.msra.mxu0 0
        %1873 = vmatprep.mubr.bf16.mxu0 0
        %1874 = vmatmul.mubr.bf16.gmra.mrb[0].mxu0 %v1836
        %v1875 = vpop.f32.mrb[0].mxu0
        %v1876 = vadd.f32 0.0, %v1875
        %v1877 = vpop.f32.mrb[0].mxu0
        %v1878 = vpop.f32.mrb[0].mxu0
        %v1879 = vpop.f32.mrb[0].mxu0
        %1880 = vdwg.mxu0
        %v1881 = vmul.f32 %v1876, 0.35355338
        %v1882 = vadd.f32 %v1881, %v1763
        %v1883 = vsel %vm965, %v1882, -inf
        %1884 = vmax.xlane.f32.xlu0 %v1883
        %v1885 = vpop.xlane.xlu0 %1884
        %v1886 = vsub.f32 %v1882, %v1885
        %v1887 = vmul.f32 %v1886, 1.442695
        %v1888 = vpow.pop %v1887
        %v1889 = vsel %vm965, %v1888, 0.0
        %1890 = vadd.xlane.f32.xlu0 %v1889
        %v1891 = vpop.xlane.xlu0 %1890
        %v1892 = vpack.c.bf16 %v1888, %v1888
        %1893 = vrot.lane.b32.xlu0 %v1778, 88
        %v1894 = vpop.permute.xlu0 %1893
        %v1896 = vsel %vm965, %v1892, 0
        %v1899 = vsel %vm1029, %v1894, 0
        %1901 = vmatprep.subr.bf16.mxu0 0
        %1902 = vmatpush1.bf16.msra.mxu0 %v1899
        %1903 = vmatprep.subr.bf16.mxu0 0
        %1904 = vmatpush1.bf16.msra.mxu0 0
        %1905 = vmatprep.subr.bf16.mxu0 0
        %1906 = vmatpush1.bf16.msra.mxu0 0
        %1907 = vmatprep.subr.bf16.mxu0 0
        %1908 = vmatpush1.bf16.msra.mxu0 0
        %1909 = vmatprep.subr.bf16.mxu0 0
        %1910 = vmatpush1.bf16.msra.mxu0 0
        %1911 = vmatprep.subr.bf16.mxu0 0
        %1912 = vmatpush1.bf16.msra.mxu0 0
        %1913 = vmatprep.subr.bf16.mxu0 0
        %1914 = vmatpush1.bf16.msra.mxu0 0
        %1915 = vmatprep.subr.bf16.mxu0 0
        %1916 = vmatpush1.bf16.msra.mxu0 0
        %1917 = vmatprep.subr.bf16.mxu0 0
        %1918 = vmatpush1.bf16.msra.mxu0 0
        %1919 = vmatprep.subr.bf16.mxu0 0
        %1920 = vmatpush1.bf16.msra.mxu0 0
        %1921 = vmatprep.subr.bf16.mxu0 0
        %1922 = vmatpush1.bf16.msra.mxu0 0
        %1923 = vmatprep.subr.bf16.mxu0 0
        %1924 = vmatpush1.bf16.msra.mxu0 0
        %1925 = vmatprep.subr.bf16.mxu0 0
        %1926 = vmatpush1.bf16.msra.mxu0 0
        %1927 = vmatprep.subr.bf16.mxu0 0
        %1928 = vmatpush1.bf16.msra.mxu0 0
        %1929 = vmatprep.subr.bf16.mxu0 0
        %1930 = vmatpush1.bf16.msra.mxu0 0
        %1931 = vmatprep.subr.bf16.mxu0 0
        %1932 = vmatpush1.bf16.msra.mxu0 0
        %1933 = vmatprep.mubr.bf16.mxu0 0
        %1934 = vmatmul.mubr.bf16.gmra.mrb[0].mxu0 %v1896
        %v1935 = vpop.f32.mrb[0].mxu0
        %v1936 = vadd.f32 0.0, %v1935
        %v1937 = vpop.f32.mrb[0].mxu0
        %v1938 = vpop.f32.mrb[0].mxu0
        %v1939 = vpop.f32.mrb[0].mxu0
        %1940 = vdwg.mxu0
        %v1941 = vrcp.pop %v1891
        %v1942 = vmul.f32 %v1936, %v1941
        %v1943 = vpack.c.bf16 %v1942, %v1942
        %v1945 = vsel %vm965, %v1943, 0
        %v1948 = vsel %vm1029, %v1708, 0
        %1950 = vmatprep.subr.bf16.mxu0 0
        %1951 = vmatpush1.bf16.msra.mxu0 %v1948
        %1952 = vmatprep.subr.bf16.mxu0 0
        %1953 = vmatpush1.bf16.msra.mxu0 0
        %1954 = vmatprep.subr.bf16.mxu0 0
        %1955 = vmatpush1.bf16.msra.mxu0 0
        %1956 = vmatprep.subr.bf16.mxu0 0
        %1957 = vmatpush1.bf16.msra.mxu0 0
        %1958 = vmatprep.subr.bf16.mxu0 0
        %1959 = vmatpush1.bf16.msra.mxu0 0
        %1960 = vmatprep.subr.bf16.mxu0 0
        %1961 = vmatpush1.bf16.msra.mxu0 0
        %1962 = vmatprep.subr.bf16.mxu0 0
        %1963 = vmatpush1.bf16.msra.mxu0 0
        %1964 = vmatprep.subr.bf16.mxu0 0
        %1965 = vmatpush1.bf16.msra.mxu0 0
        %1966 = vmatprep.subr.bf16.mxu0 0
        %1967 = vmatpush1.bf16.msra.mxu0 0
        %1968 = vmatprep.subr.bf16.mxu0 0
        %1969 = vmatpush1.bf16.msra.mxu0 0
        %1970 = vmatprep.subr.bf16.mxu0 0
        %1971 = vmatpush1.bf16.msra.mxu0 0
        %1972 = vmatprep.subr.bf16.mxu0 0
        %1973 = vmatpush1.bf16.msra.mxu0 0
        %1974 = vmatprep.subr.bf16.mxu0 0
        %1975 = vmatpush1.bf16.msra.mxu0 0
        %1976 = vmatprep.subr.bf16.mxu0 0
        %1977 = vmatpush1.bf16.msra.mxu0 0
        %1978 = vmatprep.subr.bf16.mxu0 0
        %1979 = vmatpush1.bf16.msra.mxu0 0
        %1980 = vmatprep.subr.bf16.mxu0 0
        %1981 = vmatpush1.bf16.msra.mxu0 0
        %1982 = vmatprep.mubr.bf16.mxu0 0
        %1983 = vmatmul.mubr.bf16.gmra.mrb[0].mxu0 %v1945
        %v1984 = vpop.f32.mrb[0].mxu0
        %v1985 = vadd.f32 0.0, %v1984
        %v1986 = vpop.f32.mrb[0].mxu0
        %v1987 = vpop.f32.mrb[0].mxu0
        %v1988 = vpop.f32.mrb[0].mxu0
        %1989 = vdwg.mxu0
        %v1991 = vsel %vm965, %v1829, 0
        %v1994 = vsel %vm1029, %v1707, 0
        %1996 = vmatprep.subr.bf16.mxu0 0
        %1997 = vmatpush1.bf16.msra.mxu0 %v1994
        %1998 = vmatprep.subr.bf16.mxu0 0
        %1999 = vmatpush1.bf16.msra.mxu0 0
        %2000 = vmatprep.subr.bf16.mxu0 0
        %2001 = vmatpush1.bf16.msra.mxu0 0
        %2002 = vmatprep.subr.bf16.mxu0 0
        %2003 = vmatpush1.bf16.msra.mxu0 0
        %2004 = vmatprep.subr.bf16.mxu0 0
        %2005 = vmatpush1.bf16.msra.mxu0 0
        %2006 = vmatprep.subr.bf16.mxu0 0
        %2007 = vmatpush1.bf16.msra.mxu0 0
        %2008 = vmatprep.subr.bf16.mxu0 0
        %2009 = vmatpush1.bf16.msra.mxu0 0
        %2010 = vmatprep.subr.bf16.mxu0 0
        %2011 = vmatpush1.bf16.msra.mxu0 0
        %2012 = vmatprep.subr.bf16.mxu0 0
        %2013 = vmatpush1.bf16.msra.mxu0 0
        %2014 = vmatprep.subr.bf16.mxu0 0
        %2015 = vmatpush1.bf16.msra.mxu0 0
        %2016 = vmatprep.subr.bf16.mxu0 0
        %2017 = vmatpush1.bf16.msra.mxu0 0
        %2018 = vmatprep.subr.bf16.mxu0 0
        %2019 = vmatpush1.bf16.msra.mxu0 0
        %2020 = vmatprep.subr.bf16.mxu0 0
        %2021 = vmatpush1.bf16.msra.mxu0 0
        %2022 = vmatprep.subr.bf16.mxu0 0
        %2023 = vmatpush1.bf16.msra.mxu0 0
        %2024 = vmatprep.subr.bf16.mxu0 0
        %2025 = vmatpush1.bf16.msra.mxu0 0
        %2026 = vmatprep.subr.bf16.mxu0 0
        %2027 = vmatpush1.bf16.msra.mxu0 0
        %2028 = vmatprep.mubr.bf16.mxu0 0
        %2029 = vmatmul.mubr.bf16.gmra.mrb[0].mxu0 %v1991
        %v2030 = vpop.f32.mrb[0].mxu0
        %v2031 = vadd.f32 %v1985, %v2030
        %v2032 = vpop.f32.mrb[0].mxu0
        %v2033 = vpop.f32.mrb[0].mxu0
        %v2034 = vpop.f32.mrb[0].mxu0
        %2035 = vdwg.mxu0
        %2036 = vrot.lane.b32.xlu0 %v1704, 112
        %v2037 = vpop.permute.xlu0 %2036
        %2038 = vrot.lane.b32.xlu0 %v1778, 112
        %v2039 = vpop.permute.xlu0 %2038
        %v2041 = vsel %vm965, %v2037, 0
        %v2044 = vsel %vm965, %v2039, 0
        %2046 = vmatprep.subr.bf16.mxu0 0
        %2047 = vmatpush1.bf16.xpose.msra.mxu0 %v2044
        %2048 = vmatprep.subr.bf16.mxu0 0
        %2049 = vmatpush1.bf16.xpose.msra.mxu0 0
        %2050 = vmatprep.subr.bf16.mxu0 0
        %2051 = vmatpush1.bf16.xpose.msra.mxu0 0
        %2052 = vmatprep.subr.bf16.mxu0 0
        %2053 = vmatpush1.bf16.xpose.msra.mxu0 0
        %2054 = vmatprep.subr.bf16.mxu0 0
        %2055 = vmatpush1.bf16.xpose.msra.mxu0 0
        %2056 = vmatprep.subr.bf16.mxu0 0
        %2057 = vmatpush1.bf16.xpose.msra.mxu0 0
        %2058 = vmatprep.subr.bf16.mxu0 0
        %2059 = vmatpush1.bf16.xpose.msra.mxu0 0
        %2060 = vmatprep.subr.bf16.mxu0 0
        %2061 = vmatpush1.bf16.xpose.msra.mxu0 0
        %2062 = vmatprep.subr.bf16.mxu0 0
        %2063 = vmatpush1.bf16.xpose.msra.mxu0 0
        %2064 = vmatprep.subr.bf16.mxu0 0
        %2065 = vmatpush1.bf16.xpose.msra.mxu0 0
        %2066 = vmatprep.subr.bf16.mxu0 0
        %2067 = vmatpush1.bf16.xpose.msra.mxu0 0
        %2068 = vmatprep.subr.bf16.mxu0 0
        %2069 = vmatpush1.bf16.xpose.msra.mxu0 0
        %2070 = vmatprep.subr.bf16.mxu0 0
        %2071 = vmatpush1.bf16.xpose.msra.mxu0 0
        %2072 = vmatprep.subr.bf16.mxu0 0
        %2073 = vmatpush1.bf16.xpose.msra.mxu0 0
        %2074 = vmatprep.subr.bf16.mxu0 0
        %2075 = vmatpush1.bf16.xpose.msra.mxu0 0
        %2076 = vmatprep.subr.bf16.mxu0 0
        %2077 = vmatpush1.bf16.xpose.msra.mxu0 0
        %2078 = vmatprep.mubr.bf16.mxu0 0
        %2079 = vmatmul.mubr.bf16.gmra.mrb[0].mxu0 %v2041
        %v2080 = vpop.f32.mrb[0].mxu0
        %v2081 = vadd.f32 0.0, %v2080
        %v2082 = vpop.f32.mrb[0].mxu0
        %v2083 = vpop.f32.mrb[0].mxu0
        %v2084 = vpop.f32.mrb[0].mxu0
        %2085 = vdwg.mxu0
        %v2086 = vmul.f32 %v2081, 0.35355338
        %v2087 = vadd.f32 %v2086, %v1763
        %v2088 = vsel %vm965, %v2087, -inf
        %2089 = vmax.xlane.f32.xlu0 %v2088
        %v2090 = vpop.xlane.xlu0 %2089
        %v2091 = vsub.f32 %v2087, %v2090
        %v2092 = vmul.f32 %v2091, 1.442695
        %v2093 = vpow.pop %v2092
        %v2094 = vsel %vm965, %v2093, 0.0
        %2095 = vadd.xlane.f32.xlu0 %v2094
        %v2096 = vpop.xlane.xlu0 %2095
        %v2097 = vpack.c.bf16 %v2093, %v2093
        %2098 = vrot.lane.b32.xlu0 %v1778, 80
        %v2099 = vpop.permute.xlu0 %2098
        %v2101 = vsel %vm965, %v2097, 0
        %v2104 = vsel %vm1029, %v2099, 0
        %2106 = vmatprep.subr.bf16.mxu0 0
        %2107 = vmatpush1.bf16.msra.mxu0 %v2104
        %2108 = vmatprep.subr.bf16.mxu0 0
        %2109 = vmatpush1.bf16.msra.mxu0 0
        %2110 = vmatprep.subr.bf16.mxu0 0
        %2111 = vmatpush1.bf16.msra.mxu0 0
        %2112 = vmatprep.subr.bf16.mxu0 0
        %2113 = vmatpush1.bf16.msra.mxu0 0
        %2114 = vmatprep.subr.bf16.mxu0 0
        %2115 = vmatpush1.bf16.msra.mxu0 0
        %2116 = vmatprep.subr.bf16.mxu0 0
        %2117 = vmatpush1.bf16.msra.mxu0 0
        %2118 = vmatprep.subr.bf16.mxu0 0
        %2119 = vmatpush1.bf16.msra.mxu0 0
        %2120 = vmatprep.subr.bf16.mxu0 0
        %2121 = vmatpush1.bf16.msra.mxu0 0
        %2122 = vmatprep.subr.bf16.mxu0 0
        %2123 = vmatpush1.bf16.msra.mxu0 0
        %2124 = vmatprep.subr.bf16.mxu0 0
        %2125 = vmatpush1.bf16.msra.mxu0 0
        %2126 = vmatprep.subr.bf16.mxu0 0
        %2127 = vmatpush1.bf16.msra.mxu0 0
        %2128 = vmatprep.subr.bf16.mxu0 0
        %2129 = vmatpush1.bf16.msra.mxu0 0
        %2130 = vmatprep.subr.bf16.mxu0 0
        %2131 = vmatpush1.bf16.msra.mxu0 0
        %2132 = vmatprep.subr.bf16.mxu0 0
        %2133 = vmatpush1.bf16.msra.mxu0 0
        %2134 = vmatprep.subr.bf16.mxu0 0
        %2135 = vmatpush1.bf16.msra.mxu0 0
        %2136 = vmatprep.subr.bf16.mxu0 0
        %2137 = vmatpush1.bf16.msra.mxu0 0
        %2138 = vmatprep.mubr.bf16.mxu0 0
        %2139 = vmatmul.mubr.bf16.gmra.mrb[0].mxu0 %v2101
        %v2140 = vpop.f32.mrb[0].mxu0
        %v2141 = vadd.f32 0.0, %v2140
        %v2142 = vpop.f32.mrb[0].mxu0
        %v2143 = vpop.f32.mrb[0].mxu0
        %v2144 = vpop.f32.mrb[0].mxu0
        %2145 = vdwg.mxu0
        %v2146 = vrcp.pop %v2096
        %v2147 = vmul.f32 %v2141, %v2146
        %v2148 = vpack.c.bf16 %v2147, %v2147
        %v2150 = vsel %vm965, %v2148, 0
        %v2153 = vsel %vm1029, %v1709, 0
        %2155 = vmatprep.subr.bf16.mxu0 0
        %2156 = vmatpush1.bf16.msra.mxu0 %v2153
        %2157 = vmatprep.subr.bf16.mxu0 0
        %2158 = vmatpush1.bf16.msra.mxu0 0
        %2159 = vmatprep.subr.bf16.mxu0 0
        %2160 = vmatpush1.bf16.msra.mxu0 0
        %2161 = vmatprep.subr.bf16.mxu0 0
        %2162 = vmatpush1.bf16.msra.mxu0 0
        %2163 = vmatprep.subr.bf16.mxu0 0
        %2164 = vmatpush1.bf16.msra.mxu0 0
        %2165 = vmatprep.subr.bf16.mxu0 0
        %2166 = vmatpush1.bf16.msra.mxu0 0
        %2167 = vmatprep.subr.bf16.mxu0 0
        %2168 = vmatpush1.bf16.msra.mxu0 0
        %2169 = vmatprep.subr.bf16.mxu0 0
        %2170 = vmatpush1.bf16.msra.mxu0 0
        %2171 = vmatprep.subr.bf16.mxu0 0
        %2172 = vmatpush1.bf16.msra.mxu0 0
        %2173 = vmatprep.subr.bf16.mxu0 0
        %2174 = vmatpush1.bf16.msra.mxu0 0
        %2175 = vmatprep.subr.bf16.mxu0 0
        %2176 = vmatpush1.bf16.msra.mxu0 0
        %2177 = vmatprep.subr.bf16.mxu0 0
        %2178 = vmatpush1.bf16.msra.mxu0 0
        %2179 = vmatprep.subr.bf16.mxu0 0
        %2180 = vmatpush1.bf16.msra.mxu0 0
        %2181 = vmatprep.subr.bf16.mxu0 0
        %2182 = vmatpush1.bf16.msra.mxu0 0
        %2183 = vmatprep.subr.bf16.mxu0 0
        %2184 = vmatpush1.bf16.msra.mxu0 0
        %2185 = vmatprep.subr.bf16.mxu0 0
        %2186 = vmatpush1.bf16.msra.mxu0 0
        %2187 = vmatprep.mubr.bf16.mxu0 0
        %2188 = vmatmul.mubr.bf16.gmra.mrb[0].mxu0 %v2150
        %v2189 = vpop.f32.mrb[0].mxu0
        %v2190 = vadd.f32 0.0, %v2189
        %v2191 = vpop.f32.mrb[0].mxu0
        %v2192 = vpop.f32.mrb[0].mxu0
        %v2193 = vpop.f32.mrb[0].mxu0
        %2194 = vdwg.mxu0
        %v2195 = vadd.f32 %v2031, %v2190
        %2196 = vrot.lane.b32.xlu0 %v1704, 104
        %v2197 = vpop.permute.xlu0 %2196
        %2198 = vrot.lane.b32.xlu0 %v1778, 104
        %v2199 = vpop.permute.xlu0 %2198
        %v2201 = vsel %vm965, %v2197, 0
        %v2204 = vsel %vm965, %v2199, 0
        %2206 = vmatprep.subr.bf16.mxu0 0
        %2207 = vmatpush1.bf16.xpose.msra.mxu0 %v2204
        %2208 = vmatprep.subr.bf16.mxu0 0
        %2209 = vmatpush1.bf16.xpose.msra.mxu0 0
        %2210 = vmatprep.subr.bf16.mxu0 0
        %2211 = vmatpush1.bf16.xpose.msra.mxu0 0
        %2212 = vmatprep.subr.bf16.mxu0 0
        %2213 = vmatpush1.bf16.xpose.msra.mxu0 0
        %2214 = vmatprep.subr.bf16.mxu0 0
        %2215 = vmatpush1.bf16.xpose.msra.mxu0 0
        %2216 = vmatprep.subr.bf16.mxu0 0
        %2217 = vmatpush1.bf16.xpose.msra.mxu0 0
        %2218 = vmatprep.subr.bf16.mxu0 0
        %2219 = vmatpush1.bf16.xpose.msra.mxu0 0
        %2220 = vmatprep.subr.bf16.mxu0 0
        %2221 = vmatpush1.bf16.xpose.msra.mxu0 0
        %2222 = vmatprep.subr.bf16.mxu0 0
        %2223 = vmatpush1.bf16.xpose.msra.mxu0 0
        %2224 = vmatprep.subr.bf16.mxu0 0
        %2225 = vmatpush1.bf16.xpose.msra.mxu0 0
        %2226 = vmatprep.subr.bf16.mxu0 0
        %2227 = vmatpush1.bf16.xpose.msra.mxu0 0
        %2228 = vmatprep.subr.bf16.mxu0 0
        %2229 = vmatpush1.bf16.xpose.msra.mxu0 0
        %2230 = vmatprep.subr.bf16.mxu0 0
        %2231 = vmatpush1.bf16.xpose.msra.mxu0 0
        %2232 = vmatprep.subr.bf16.mxu0 0
        %2233 = vmatpush1.bf16.xpose.msra.mxu0 0
        %2234 = vmatprep.subr.bf16.mxu0 0
        %2235 = vmatpush1.bf16.xpose.msra.mxu0 0
        %2236 = vmatprep.subr.bf16.mxu0 0
        %2237 = vmatpush1.bf16.xpose.msra.mxu0 0
        %2238 = vmatprep.mubr.bf16.mxu0 0
        %2239 = vmatmul.mubr.bf16.gmra.mrb[0].mxu0 %v2201
        %v2240 = vpop.f32.mrb[0].mxu0
        %v2241 = vadd.f32 0.0, %v2240
        %v2242 = vpop.f32.mrb[0].mxu0
        %v2243 = vpop.f32.mrb[0].mxu0
        %v2244 = vpop.f32.mrb[0].mxu0
        %2245 = vdwg.mxu0
        %v2246 = vmul.f32 %v2241, 0.35355338
        %v2247 = vadd.f32 %v2246, %v1763
        %v2248 = vsel %vm965, %v2247, -inf
        %2249 = vmax.xlane.f32.xlu0 %v2248
        %v2250 = vpop.xlane.xlu0 %2249
        %v2251 = vsub.f32 %v2247, %v2250
        %v2252 = vmul.f32 %v2251, 1.442695
        %v2253 = vpow.pop %v2252
        %v2254 = vsel %vm965, %v2253, 0.0
        %2255 = vadd.xlane.f32.xlu0 %v2254
        %v2256 = vpop.xlane.xlu0 %2255
        %v2257 = vpack.c.bf16 %v2253, %v2253
        %2258 = vrot.lane.b32.xlu0 %v1778, 72
        %v2259 = vpop.permute.xlu0 %2258
        %v2261 = vsel %vm965, %v2257, 0
        %v2264 = vsel %vm1029, %v2259, 0
        %2266 = vmatprep.subr.bf16.mxu0 0
        %2267 = vmatpush1.bf16.msra.mxu0 %v2264
        %2268 = vmatprep.subr.bf16.mxu0 0
        %2269 = vmatpush1.bf16.msra.mxu0 0
        %2270 = vmatprep.subr.bf16.mxu0 0
        %2271 = vmatpush1.bf16.msra.mxu0 0
        %2272 = vmatprep.subr.bf16.mxu0 0
        %2273 = vmatpush1.bf16.msra.mxu0 0
        %2274 = vmatprep.subr.bf16.mxu0 0
        %2275 = vmatpush1.bf16.msra.mxu0 0
        %2276 = vmatprep.subr.bf16.mxu0 0
        %2277 = vmatpush1.bf16.msra.mxu0 0
        %2278 = vmatprep.subr.bf16.mxu0 0
        %2279 = vmatpush1.bf16.msra.mxu0 0
        %2280 = vmatprep.subr.bf16.mxu0 0
        %2281 = vmatpush1.bf16.msra.mxu0 0
        %2282 = vmatprep.subr.bf16.mxu0 0
        %2283 = vmatpush1.bf16.msra.mxu0 0
        %2284 = vmatprep.subr.bf16.mxu0 0
        %2285 = vmatpush1.bf16.msra.mxu0 0
        %2286 = vmatprep.subr.bf16.mxu0 0
        %2287 = vmatpush1.bf16.msra.mxu0 0
        %2288 = vmatprep.subr.bf16.mxu0 0
        %2289 = vmatpush1.bf16.msra.mxu0 0
        %2290 = vmatprep.subr.bf16.mxu0 0
        %2291 = vmatpush1.bf16.msra.mxu0 0
        %2292 = vmatprep.subr.bf16.mxu0 0
        %2293 = vmatpush1.bf16.msra.mxu0 0
        %2294 = vmatprep.subr.bf16.mxu0 0
        %2295 = vmatpush1.bf16.msra.mxu0 0
        %2296 = vmatprep.subr.bf16.mxu0 0
        %2297 = vmatpush1.bf16.msra.mxu0 0
        %2298 = vmatprep.mubr.bf16.mxu0 0
        %2299 = vmatmul.mubr.bf16.gmra.mrb[0].mxu0 %v2261
        %v2300 = vpop.f32.mrb[0].mxu0
        %v2301 = vadd.f32 0.0, %v2300
        %v2302 = vpop.f32.mrb[0].mxu0
        %v2303 = vpop.f32.mrb[0].mxu0
        %v2304 = vpop.f32.mrb[0].mxu0
        %2305 = vdwg.mxu0
        %v2306 = vrcp.pop %v2256
        %v2307 = vmul.f32 %v2301, %v2306
        %v2308 = vpack.c.bf16 %v2307, %v2307
        %v2310 = vsel %vm965, %v2308, 0
        %v2313 = vsel %vm1029, %v1710, 0
        %2315 = vmatprep.subr.bf16.mxu0 0
        %2316 = vmatpush1.bf16.msra.mxu0 %v2313
        %2317 = vmatprep.subr.bf16.mxu0 0
        %2318 = vmatpush1.bf16.msra.mxu0 0
        %2319 = vmatprep.subr.bf16.mxu0 0
        %2320 = vmatpush1.bf16.msra.mxu0 0
        %2321 = vmatprep.subr.bf16.mxu0 0
        %2322 = vmatpush1.bf16.msra.mxu0 0
        %2323 = vmatprep.subr.bf16.mxu0 0
        %2324 = vmatpush1.bf16.msra.mxu0 0
        %2325 = vmatprep.subr.bf16.mxu0 0
        %2326 = vmatpush1.bf16.msra.mxu0 0
        %2327 = vmatprep.subr.bf16.mxu0 0
        %2328 = vmatpush1.bf16.msra.mxu0 0
        %2329 = vmatprep.subr.bf16.mxu0 0
        %2330 = vmatpush1.bf16.msra.mxu0 0
        %2331 = vmatprep.subr.bf16.mxu0 0
        %2332 = vmatpush1.bf16.msra.mxu0 0
        %2333 = vmatprep.subr.bf16.mxu0 0
        %2334 = vmatpush1.bf16.msra.mxu0 0
        %2335 = vmatprep.subr.bf16.mxu0 0
        %2336 = vmatpush1.bf16.msra.mxu0 0
        %2337 = vmatprep.subr.bf16.mxu0 0
        %2338 = vmatpush1.bf16.msra.mxu0 0
        %2339 = vmatprep.subr.bf16.mxu0 0
        %2340 = vmatpush1.bf16.msra.mxu0 0
        %2341 = vmatprep.subr.bf16.mxu0 0
        %2342 = vmatpush1.bf16.msra.mxu0 0
        %2343 = vmatprep.subr.bf16.mxu0 0
        %2344 = vmatpush1.bf16.msra.mxu0 0
        %2345 = vmatprep.subr.bf16.mxu0 0
        %2346 = vmatpush1.bf16.msra.mxu0 0
        %2347 = vmatprep.mubr.bf16.mxu0 0
        %2348 = vmatmul.mubr.bf16.gmra.mrb[0].mxu0 %v2310
        %v2349 = vpop.f32.mrb[0].mxu0
        %v2350 = vadd.f32 0.0, %v2349
        %v2351 = vpop.f32.mrb[0].mxu0
        %v2352 = vpop.f32.mrb[0].mxu0
        %v2353 = vpop.f32.mrb[0].mxu0
        %2354 = vdwg.mxu0
        %v2355 = vadd.f32 %v2195, %v2350
        %v2357 = vlaneseq
        %v2358 = vshrl.u32 %v2357, 7
        %v2359 = vsub.s32 0, %v2358
        %v2360 = vrot.slane %v1711, %v2359
        %v2362 = vadd.f32 %v2355, %v2360
        %v2363 = vadd.f32 %v1611, %v2362
        %v2364 = vsel %vm1612, %v2363, 0.0
        %2365 = vadd.xlane.f32.xlu0 %v2364
        %v2366 = vpop.xlane.xlu0 %2365
        %v2367 = vmul.f32 %v2366, %v1616
        %v2368 = vsub.f32 %v2363, %v2367
        %v2369 = vmul.f32 %v2368, %v2368
        %v2370 = vsel %vm1612, %v2369, 0.0
        %2371 = vadd.xlane.f32.xlu0 %v2370
        %v2372 = vpop.xlane.xlu0 %2371
        %v2373 = vmul.f32 %v2372, %v1616
        %v2374 = vadd.f32 %v2373, 1e-05
        %v2375 = vrsqrt.pop %v2374
        %v2376 = vmul.f32 %v2368, %v2375
        %v2377 = vlaneseq
        %v2378 = vshrl.u32 %v2377, 7
        %v2379 = vsub.s32 2, %v2378
        %v2380 = vrot.slane %v766, %v2379
        %v2381 = vmul.f32 %v2376, %v2380
        %v2382 = vlaneseq
        %v2383 = vshrl.u32 %v2382, 7
        %v2384 = vsub.s32 2, %v2383
        %v2385 = vrot.slane %v767, %v2384
        %v2386 = vadd.f32 %v2381, %v2385
        %v2387 = vpack.c.bf16 %v2386, %v2386
        %v2388 = vld [vmem:[#allocation15] sm:$0xf]
        %v2389 = vld [vmem:[#allocation15 + $0x4] sm:$0xf]
        %v2390 = vld [vmem:[#allocation15 + $0x8] sm:$0xf]
        %v2391 = vld [vmem:[#allocation15 + $0xc] sm:$0xf]
        %v2392 = vld [vmem:[#allocation16] sm:$0x1]
        %v2394 = vlaneseq
        %v2395 = vshrl.u32 %v2394, 7
        %v2396 = vsub.s32 0, %v2395
        %v2397 = vrot.slane %v2392, %v2396
        %v2403 = vunpack.c.l.b16 %v2388
        %v2404 = vunpack.c.l.b16 %v2389
        %v2405 = vunpack.c.l.b16 %v2390
        %v2406 = vunpack.c.l.b16 %v2391
        %v2407 = vpack.c.b16 %v2404, %v2403
        %v2408 = vpack.c.b16 %v2406, %v2405
        %v2412 = vsel %vm1612, %v2387, 0
        %2414 = vmatprep.subr.bf16.mxu0 0
        %2415 = vmatpush1.bf16.msra.mxu0 %v2407
        %2416 = vmatprep.subr.bf16.mxu0 0
        %2417 = vmatpush1.bf16.msra.mxu0 %v2408
        %2418 = vmatprep.subr.bf16.mxu0 0
        %2419 = vmatpush1.bf16.msra.mxu0 0
        %2420 = vmatprep.subr.bf16.mxu0 0
        %2421 = vmatpush1.bf16.msra.mxu0 0
        %2422 = vmatprep.subr.bf16.mxu0 0
        %2423 = vmatpush1.bf16.msra.mxu0 0
        %2424 = vmatprep.subr.bf16.mxu0 0
        %2425 = vmatpush1.bf16.msra.mxu0 0
        %2426 = vmatprep.subr.bf16.mxu0 0
        %2427 = vmatpush1.bf16.msra.mxu0 0
        %2428 = vmatprep.subr.bf16.mxu0 0
        %2429 = vmatpush1.bf16.msra.mxu0 0
        %2430 = vmatprep.subr.bf16.mxu0 0
        %2431 = vmatpush1.bf16.msra.mxu0 0
        %2432 = vmatprep.subr.bf16.mxu0 0
        %2433 = vmatpush1.bf16.msra.mxu0 0
        %2434 = vmatprep.subr.bf16.mxu0 0
        %2435 = vmatpush1.bf16.msra.mxu0 0
        %2436 = vmatprep.subr.bf16.mxu0 0
        %2437 = vmatpush1.bf16.msra.mxu0 0
        %2438 = vmatprep.subr.bf16.mxu0 0
        %2439 = vmatpush1.bf16.msra.mxu0 0
        %2440 = vmatprep.subr.bf16.mxu0 0
        %2441 = vmatpush1.bf16.msra.mxu0 0
        %2442 = vmatprep.subr.bf16.mxu0 0
        %2443 = vmatpush1.bf16.msra.mxu0 0
        %2444 = vmatprep.subr.bf16.mxu0 0
        %2445 = vmatpush1.bf16.msra.mxu0 0
        %2446 = vmatprep.mubr.bf16.mxu0 0
        %2447 = vmatmul.mubr.bf16.gmra.mrb[0].mxu0 %v2412
        %v2448 = vpop.f32.mrb[0].mxu0
        %v2449 = vadd.f32 %v2397, %v2448
        %v2450 = vpop.f32.mrb[0].mxu0
        %v2451 = vpop.f32.mrb[0].mxu0
        %v2452 = vpop.f32.mrb[0].mxu0
        %2453 = vdwg.mxu0
        %v2454 = vmax.f32 %v2449, 0.0
        %v2455 = vpack.c.bf16 %v2454, %v2454
        %v2456 = vld [vmem:[%s17] sm:$0xf]
        %v2457 = vld [vmem:[%s17 + $0x4] sm:$0xf]
        %v2458 = vld [vmem:[%s17 + $0x8] sm:$0xf]
        %v2459 = vld [vmem:[%s17 + $0xc] sm:$0xf]
        %v2460 = vld [vmem:[%s17 + $0x10] sm:$0xf]
        %v2461 = vld [vmem:[%s17 + $0x14] sm:$0xf]
        %v2462 = vld [vmem:[%s17 + $0x18] sm:$0xf]
        %v2463 = vld [vmem:[%s17 + $0x1c] sm:$0xf]
        %v2472 = vunpack.c.l.b16 %v2456
        %v2473 = vunpack.c.l.b16 %v2457
        %v2474 = vunpack.c.l.b16 %v2458
        %v2475 = vunpack.c.l.b16 %v2459
        %v2476 = vunpack.c.l.b16 %v2460
        %v2477 = vunpack.c.l.b16 %v2461
        %v2478 = vunpack.c.l.b16 %v2462
        %v2479 = vunpack.c.l.b16 %v2463
        %v2480 = vpack.c.b16 %v2473, %v2472
        %v2481 = vpack.c.b16 %v2475, %v2474
        %v2482 = vpack.c.b16 %v2477, %v2476
        %v2483 = vpack.c.b16 %v2479, %v2478
        %vm2488 = vcmask 523264
        %v2490 = vsel %vm2488, %v2455, 0
        %2492 = vmatprep.subr.bf16.mxu0 0
        %2493 = vmatpush1.bf16.msra.mxu0 %v2480
        %2494 = vmatprep.subr.bf16.mxu0 0
        %2495 = vmatpush1.bf16.msra.mxu0 %v2481
        %2496 = vmatprep.subr.bf16.mxu0 0
        %2497 = vmatpush1.bf16.msra.mxu0 %v2482
        %2498 = vmatprep.subr.bf16.mxu0 0
        %2499 = vmatpush1.bf16.msra.mxu0 %v2483
        %2500 = vmatprep.subr.bf16.mxu0 0
        %2501 = vmatpush1.bf16.msra.mxu0 0
        %2502 = vmatprep.subr.bf16.mxu0 0
        %2503 = vmatpush1.bf16.msra.mxu0 0
        %2504 = vmatprep.subr.bf16.mxu0 0
        %2505 = vmatpush1.bf16.msra.mxu0 0
        %2506 = vmatprep.subr.bf16.mxu0 0
        %2507 = vmatpush1.bf16.msra.mxu0 0
        %2508 = vmatprep.subr.bf16.mxu0 0
        %2509 = vmatpush1.bf16.msra.mxu0 0
        %2510 = vmatprep.subr.bf16.mxu0 0
        %2511 = vmatpush1.bf16.msra.mxu0 0
        %2512 = vmatprep.subr.bf16.mxu0 0
        %2513 = vmatpush1.bf16.msra.mxu0 0
        %2514 = vmatprep.subr.bf16.mxu0 0
        %2515 = vmatpush1.bf16.msra.mxu0 0
        %2516 = vmatprep.subr.bf16.mxu0 0
        %2517 = vmatpush1.bf16.msra.mxu0 0
        %2518 = vmatprep.subr.bf16.mxu0 0
        %2519 = vmatpush1.bf16.msra.mxu0 0
        %2520 = vmatprep.subr.bf16.mxu0 0
        %2521 = vmatpush1.bf16.msra.mxu0 0
        %2522 = vmatprep.subr.bf16.mxu0 0
        %2523 = vmatpush1.bf16.msra.mxu0 0
        %2524 = vmatprep.mubr.bf16.mxu0 0
        %2525 = vmatmul.mubr.bf16.gmra.mrb[0].mxu0 %v2490
        %v2526 = vpop.f32.mrb[0].mxu0
        %v2527 = vadd.f32 0.0, %v2526
        %v2528 = vpop.f32.mrb[0].mxu0
        %v2529 = vpop.f32.mrb[0].mxu0
        %v2530 = vpop.f32.mrb[0].mxu0
        %2531 = vdwg.mxu0
        %v2532 = vadd.f32 %v2363, %v2527
        %v2533 = vld [vmem:[#allocation18] sm:$0x1]
        %v2535 = vlaneseq
        %v2536 = vshrl.u32 %v2535, 7
        %v2537 = vsub.s32 0, %v2536
        %v2538 = vrot.slane %v2533, %v2537
        %v2540 = vadd.f32 %v2532, %v2538
        %2541 = vst.msk [vmem:[%s752] sm:$0xff] %vm1612, %v2540
        %s2542 = sand.u32 %s474, 1
        %s2543 = scalar_lea.sflag [#allocation6], %s2542
        %s2544 = sand.u32 %s474, 1
        %s2545 = smul.addr %s2544, 8
        %s2546 = scalar_lea.vmem [#allocation19], %s2545
        // Predicated region
        $region137: #{decoder_block.1} parent=95 // pred_check
          %p2547 = pneg %p484
        $region138: #{decoder_block.1} parent=95 // pred_check_branch
          %2549 = sbr.rel (%p2547) target = $region140
        $region139: #{decoder_block.1} parent=95 // pred_region
          %s2551 = ssub.s32 128, 128
          %2552 = vsyncadd %s2543, %s2551
          %s2553 = sadd.s32 %s43, %s42
          %s2554 = smul.addr %s2553, 128
          %s2555 = scalar_lea.hbm %s19, %s2554
          %s2557 = sshll.u32 %s2546, 4
          %s2558 = int_to_ptr.vmem [resolvable:$true] %s2557
          %2560 = dma.vmem_to_hbm [thread:$0]  %s2558, 128, %s2555, %s2543
        $region140: #{decoder_block.1} parent=95 // pred_fallthru
          _
      $region96: #{decoder_block.1} parent=5 // pred_fallthru
        _
      %p2561 = scmp.le.s32.totalorder 2, %s33
      // Predicated region
      $region141: #{decoder_block.1} parent=5 // pred_check
        %p2562 = pneg %p2561
      $region142: #{decoder_block.1} parent=5 // pred_check_branch
        %2564 = sbr.rel (%p2562) target = $region144
      $region143: #{decoder_block.1} parent=5 // pred_region
        %s2565 = ssub.s32 %s33, 2
        // Predicated region
        $region145: #{decoder_block.1} parent=143 // pred_check
          %p2566 = pneg %p490
        $region146: #{decoder_block.1} parent=143 // pred_check_branch
          %2568 = sbr.rel (%p2566) target = $region148
        $region147: #{decoder_block.1} parent=143 // pred_region
          %s2569 = sand.u32 %s475, 1
          %s2570 = scalar_lea.sflag [#allocation6], %s2569
          %s2571 = sand.u32 %s475, 1
          %s2572 = smul.addr %s2571, 8
          %s2573 = scalar_lea.vmem [#allocation19], %s2572
          %2574 = dma.done %s2570, 128
        $region148: #{decoder_block.1} parent=143 // pred_fallthru
          _
      $region144: #{decoder_block.1} parent=5 // pred_fallthru
        _
    $region6: #{decoder_block.1} parent=1 // loop_footer
      %s37 = sadd.s32 1, %s33
    $region7: #{decoder_block.1} parent=1 // loop_footer_branch
      %32 = sbr.rel target = $region3
    $region8: #{decoder_block.1} parent=1 // loop_exit
      _
    %2575 = vsyncpa [#allocation5], 1
    %s2576 = scalar_lea.sflag [#allocation5], 1
    %2577 = vsyncpa %s2576, 1
    %2578 = vsyncpa [#allocation8], 1
    %2579 = vsyncpa [#allocation11], 1
    %2580 = vsyncpa [#allocation14], 1
    %2581 = vsyncpa [#allocation17], 1
    %2582 = vsyncpa [#allocation6], 1
    %s2583 = scalar_lea.sflag [#allocation6], 1
    %2584 = vsyncpa %s2583, 1

</llo_original>
